<compile_context>
chip_gen: v7x
topology: tpu7x:2x2x1
jax: 0.10.0
libtpu: 0.0.40
codegen_flags: <defaults>
</compile_context>

<pallas_src>
import functools

import jax
import jax.numpy as jnp
from jax.experimental import pallas as pl
from jax.experimental.pallas import tpu as pltpu

# ----------------------------- model config (small) -------------------------
IMG = 32          # image size (vit_base_patch8_224 uses 224; scaled down)
PATCH = 8         # patch size 8 (as in vit_base_patch8_224)
IN_CH = 3         # RGB
EMBED = 64        # embed dim (768 in the real model; scaled down)
DEPTH = 2         # transformer depth (12 in the real model)
HEADS = 4         # attention heads (12 in the real model)
MLP_HIDDEN = EMBED * 4
HEAD_DIM = EMBED // HEADS
LN_EPS = 1e-6     # timm ViT LayerNorm eps
ATTN_SCALE = HEAD_DIM ** -0.5

NP = (IMG // PATCH) ** 2          # 16 patches
N_TOKENS = NP + 1                 # 17 = CLS + patches
NPAD = 32                         # token axis padded to a multiple of 8 sublanes
PATCH_K = IN_CH * PATCH * PATCH   # 192 = flattened patch size
INV_SQRT2 = 0.7071067811865476


# --------------------------- in-kernel math helpers ---------------------------
def _layernorm(x, g, b):
    mu = jnp.mean(x, axis=-1, keepdims=True)
    var = jnp.mean((x - mu) ** 2, axis=-1, keepdims=True)
    return (x - mu) * jax.lax.rsqrt(var + LN_EPS) * g + b


def _erf_approx(x):
    # TODO(synk): lax.erf has no guaranteed Mosaic lowering; use the
    # Abramowitz & Stegun 7.1.26 rational approximation (|err| < 1.5e-7,
    # f32-exact for GELU purposes) so semantics still match torch.nn.GELU().
    p = 0.3275911
    a1, a2, a3, a4, a5 = (0.254829592, -0.284496736, 1.421413741,
                          -1.453152027, 1.061405429)
    sgn = jnp.where(x >= 0, 1.0, -1.0).astype(jnp.float32)
    z = jnp.abs(x)
    t = 1.0 / (1.0 + p * z)
    poly = ((((a5 * t + a4) * t + a3) * t + a2) * t + a1) * t
    return sgn * (1.0 - poly * jnp.exp(-z * z))


def _gelu_exact(x):
    return 0.5 * x * (1.0 + _erf_approx(x * INV_SQRT2))


# ------------------------------- fused ViT kernel -----------------------------
def _vit_kernel(bb,  # static: images folded into the token axis per grid step
                patches_ref, patch_w_ref, add_ref, mask_ref,
                ln1_g_ref, ln1_b_ref, qkv_w_ref, qkv_b_ref,
                proj_w_ref, proj_b_ref,
                ln2_g_ref, ln2_b_ref, fc1_w_ref, fc1_b_ref,
                fc2_w_ref, fc2_b_ref,
                nf_g_ref, nf_b_ref,
                out_ref, x_scr):
    d = pl.program_id(1)  # depth step (grid: (batch_groups, depth))

    # ---- patch-embed + CLS + pos-embed, only on the first depth step --------
    @pl.when(d == 0)
    def _():
        # patches_ref[0]: (bb*NPAD, K); CLS slots and pad rows are zero.
        tok = jnp.dot(patches_ref[0], patch_w_ref[...],
                      preferred_element_type=jnp.float32)        # (bb*NPAD, D)
        # add_ref: per-image [cls+pos[0]; patch_b+pos[1:]; 0-pad], tiled bb times
        x_scr[...] = tok + add_ref[...]

    x = x_scr[...]                                                # (bb*NPAD, D)

    # ---- attention branch (pre-norm) ----------------------------------------
    h = _layernorm(x, ln1_g_ref[0], ln1_b_ref[0])
    qkv = (jnp.dot(h, qkv_w_ref[0], preferred_element_type=jnp.float32)
           + qkv_b_ref[0])                                        # (bb*NPAD, 3D)

    mask = mask_ref[...]            # additive: 0 same-image real key, -1e30 else

    head_outs = []
    for hh in range(HEADS):
        lo = hh * HEAD_DIM
        qh = qkv[:, lo:lo + HEAD_DIM]                             # (bb*NPAD, Dh)
        kh = qkv[:, EMBED + lo:EMBED + lo + HEAD_DIM]
        vh = qkv[:, 2 * EMBED + lo:2 * EMBED + lo + HEAD_DIM]
        s = jax.lax.dot_general(qh, kh, (((1,), (1,)), ((), ())),
                                preferred_element_type=jnp.float32)
        s = s * ATTN_SCALE + mask                                 # (bb*NPAD, bb*NPAD)
        s = s - jnp.max(s, axis=-1, keepdims=True)
        p = jnp.exp(s)                                            # masked entries -> 0
        p = p * pl.reciprocal(jnp.sum(p, axis=-1, keepdims=True), approx=True)
        head_outs.append(jnp.dot(p, vh, preferred_element_type=jnp.float32))
    attn = jnp.concatenate(head_outs, axis=-1)                    # (bb*NPAD, D)

    x = (jnp.dot(attn, proj_w_ref[0], preferred_element_type=jnp.float32)
         + proj_b_ref[0] + x)                                     # proj + residual

    # ---- MLP branch (pre-norm), GELU fused -----------------------------------
    h = _layernorm(x, ln2_g_ref[0], ln2_b_ref[0])
    h = (jnp.dot(h, fc1_w_ref[0], preferred_element_type=jnp.float32)
         + fc1_b_ref[0])                                          # (bb*NPAD, 4D)
    h = _gelu_exact(h)
    x = (jnp.dot(h, fc2_w_ref[0], preferred_element_type=jnp.float32)
         + fc2_b_ref[0] + x)                                      # fc2 + residual

    x_scr[...] = x

    # ---- final LayerNorm on CLS rows only, last depth step -------------------
    @pl.when(d == DEPTH - 1)
    def _():
        cls = jnp.concatenate(
            [x[i * NPAD:i * NPAD + 1, :] for i in range(bb)], axis=0)   # (bb, D)
        out_ref[...] = _layernorm(cls, nf_g_ref[...],
                                  nf_b_ref[...]).reshape(1, bb, EMBED)


# ------------------------------- glue (plain JAX) ----------------------------
def extract_patches(x, p):
    # NCHW -> (B, nH*nW, C*p*p) with (c, kh, kw) flattening order
    # (matches PyTorch Conv2d weight layout (D, C, kh, kw)).
    B, C, H, W = x.shape
    nH, nW = H // p, W // p
    x = x.reshape(B, C, nH, p, nW, p)
    x = x.transpose(0, 2, 4, 1, 3, 5)  # (B, nH, nW, C, p, p)
    return x.reshape(B, nH * nW, C * p * p)


def _pick_batch_block(B):
    # Largest divisor of B among (4, 2, 1) -> merged token axis <= 128 sublanes.
    for bb in (4, 2, 1):
        if B % bb == 0:
            return bb
    return 1


def vit_forward(x, params):
    B = x.shape[0]
    f32 = jnp.float32
    BB = _pick_batch_block(B)
    NG = B // BB                  # batch groups (grid axis 0)
    BBN = BB * NPAD               # merged token rows per grid step

    # im2col patches, padded to NPAD tokens per image (row 0 = CLS slot, tail 0).
    patches = extract_patches(x, PATCH).astype(f32)               # (B, NP, K)
    patches_p = jnp.zeros((B, NPAD, PATCH_K), f32)
    patches_p = patches_p.at[:, 1:NP + 1, :].set(patches)
    patches_p = patches_p.reshape(NG, BBN, PATCH_K)

    # embed_add folds CLS token, pos_embed and patch-embed bias into one additive
    # (NPAD, D) tensor, tiled across the BB images merged into one grid step.
    pos = params["pos_embed"][0]                                  # (N_TOKENS, D)
    add = jnp.zeros((NPAD, EMBED), f32)
    add = add.at[0].set(params["cls_token"].reshape(EMBED) + pos[0])
    add = add.at[1:N_TOKENS].set(params["patch_b"][None, :] + pos[1:])
    add = jnp.tile(add, (BB, 1))                                  # (BBN, D)

    # Additive attention mask: key valid iff same image AND key token < N_TOKENS.
    rows = jnp.arange(BBN)
    q_img = rows // NPAD
    k_img = rows // NPAD
    k_tok = rows % NPAD
    valid = (q_img[:, None] == k_img[None, :]) & (k_tok[None, :] < N_TOKENS)
    attn_mask = jnp.where(valid, 0.0, -1e30).astype(f32)          # (BBN, BBN)

    # Stack per-block params along a leading depth axis (index_map selects slab).
    blocks = params["blocks"]
    stk = lambda name: jnp.stack([blk[name] for blk in blocks])            # (DEPTH,r,c)
    stk_vec = lambda name: jnp.stack([blk[name] for blk in blocks])[:, None, :]

    qkv_w, proj_w = stk("qkv_w"), stk("proj_w")
    fc1_w, fc2_w = stk("fc1_w"), stk("fc2_w")
    ln1_g, ln1_b = stk_vec("norm1_g"), stk_vec("norm1_b")
    qkv_b, proj_b = stk_vec("qkv_b"), stk_vec("proj_b")
    ln2_g, ln2_b = stk_vec("norm2_g"), stk_vec("norm2_b")
    fc1_b, fc2_b = stk_vec("fc1_b"), stk_vec("fc2_b")
    nf_g = params["norm_g"].reshape(1, EMBED)
    nf_b = params["norm_b"].reshape(1, EMBED)

    full2d = lambda r, c: pl.BlockSpec((r, c), lambda g, d: (0, 0))
    per_blk_vec = lambda c: pl.BlockSpec((1, 1, c), lambda g, d: (d, 0, 0))
    per_blk_mat = lambda r, c: pl.BlockSpec((1, r, c), lambda g, d: (d, 0, 0))

    grid_spec = pltpu.PrefetchScalarGridSpec(
        num_scalar_prefetch=0,
        grid=(NG, DEPTH),
        in_specs=[
            pl.BlockSpec((1, BBN, PATCH_K), lambda g, d: (g, 0, 0)),    # patches
            full2d(PATCH_K, EMBED),                                     # patch_w
            full2d(BBN, EMBED),                                         # embed_add
            full2d(BBN, BBN),                                           # attn mask
            per_blk_vec(EMBED), per_blk_vec(EMBED),                     # ln1 g, b
            per_blk_mat(EMBED, 3 * EMBED), per_blk_vec(3 * EMBED),      # qkv w, b
            per_blk_mat(EMBED, EMBED), per_blk_vec(EMBED),              # proj w, b
            per_blk_vec(EMBED), per_blk_vec(EMBED),                     # ln2 g, b
            per_blk_mat(EMBED, MLP_HIDDEN), per_blk_vec(MLP_HIDDEN),    # fc1 w, b
            per_blk_mat(MLP_HIDDEN, EMBED), per_blk_vec(EMBED),         # fc2 w, b
            full2d(1, EMBED), full2d(1, EMBED),                         # final norm g, b
        ],
        out_specs=pl.BlockSpec((1, BB, EMBED), lambda g, d: (g, 0, 0)),
        scratch_shapes=[pltpu.VMEM((BBN, EMBED), jnp.float32)],         # residual stream
    )

    out = pl.pallas_call(
        functools.partial(_vit_kernel, BB),
        out_shape=jax.ShapeDtypeStruct((NG, BB, EMBED), jnp.float32),
        grid_spec=grid_spec,
        compiler_params=pltpu.CompilerParams(
            dimension_semantics=("parallel", "arbitrary")),
    )(patches_p, params["patch_w"], add, attn_mask,
      ln1_g, ln1_b, qkv_w, qkv_b, proj_w, proj_b,
      ln2_g, ln2_b, fc1_w, fc1_b, fc2_w, fc2_b,
      nf_g, nf_b)

    return out.reshape(B, EMBED)                                  # CLS features


# --------------------------- deterministic params ----------------------------
def init_params(key):
    ks = iter(jax.random.split(key, 64))

    def nrm(shape, std=0.02):
        return (std * jax.random.normal(next(ks), shape)).astype(jnp.float32)

    conv_w = nrm((EMBED, IN_CH, PATCH, PATCH))  # PyTorch conv weight layout
    params = {
        "patch_w": conv_w.reshape(EMBED, IN_CH * PATCH * PATCH).T,   # (C*P*P, D)
        "patch_b": jnp.zeros((EMBED,), jnp.float32),
        "cls_token": nrm((1, 1, EMBED)),
        "pos_embed": nrm((1, N_TOKENS, EMBED)),
        "norm_g": jnp.ones((EMBED,), jnp.float32),
        "norm_b": jnp.zeros((EMBED,), jnp.float32),
        "blocks": [],
    }
    for _ in range(DEPTH):
        params["blocks"].append({
            "norm1_g": jnp.ones((EMBED,), jnp.float32),
            "norm1_b": jnp.zeros((EMBED,), jnp.float32),
            "qkv_w": nrm((EMBED, 3 * EMBED)),
            "qkv_b": jnp.zeros((3 * EMBED,), jnp.float32),
            "proj_w": nrm((EMBED, EMBED)),
            "proj_b": jnp.zeros((EMBED,), jnp.float32),
            "norm2_g": jnp.ones((EMBED,), jnp.float32),
            "norm2_b": jnp.zeros((EMBED,), jnp.float32),
            "fc1_w": nrm((EMBED, MLP_HIDDEN)),
            "fc1_b": jnp.zeros((MLP_HIDDEN,), jnp.float32),
            "fc2_w": nrm((MLP_HIDDEN, EMBED)),
            "fc2_b": jnp.zeros((EMBED,), jnp.float32),
        })
    return params


# ------------------------------------ main ------------------------------------
if __name__ == "__main__":
    key = jax.random.PRNGKey(0)
    x = jax.random.normal(key, (2, IN_CH, IMG, IMG), dtype=jnp.float32)  # NCHW
    params = init_params(jax.random.PRNGKey(1))

    fwd = jax.jit(vit_forward)
    feats = fwd(x, params)
    feats = jax.block_until_ready(feats)
    assert feats.shape == (2, EMBED) and feats.dtype == jnp.float32
    print("KERNEL_OK")
</pallas_src>

<mosaic_0001>
module attributes {stable_mosaic.version = 11 : i64} {
  func.func @_vit_kernel(%arg0: i32, %arg1: i32, %arg2: memref<1x64x192xf32, #tpu.memory_space<vmem>>, %arg3: memref<192x64xf32, #tpu.memory_space<vmem>>, %arg4: memref<64x64xf32, #tpu.memory_space<vmem>>, %arg5: memref<64x64xf32, #tpu.memory_space<vmem>>, %arg6: memref<1x1x64xf32, #tpu.memory_space<vmem>>, %arg7: memref<1x1x64xf32, #tpu.memory_space<vmem>>, %arg8: memref<1x64x192xf32, #tpu.memory_space<vmem>>, %arg9: memref<1x1x192xf32, #tpu.memory_space<vmem>>, %arg10: memref<1x64x64xf32, #tpu.memory_space<vmem>>, %arg11: memref<1x1x64xf32, #tpu.memory_space<vmem>>, %arg12: memref<1x1x64xf32, #tpu.memory_space<vmem>>, %arg13: memref<1x1x64xf32, #tpu.memory_space<vmem>>, %arg14: memref<1x64x256xf32, #tpu.memory_space<vmem>>, %arg15: memref<1x1x256xf32, #tpu.memory_space<vmem>>, %arg16: memref<1x256x64xf32, #tpu.memory_space<vmem>>, %arg17: memref<1x1x64xf32, #tpu.memory_space<vmem>>, %arg18: memref<1x64xf32, #tpu.memory_space<vmem>>, %arg19: memref<1x64xf32, #tpu.memory_space<vmem>>, %arg20: memref<1x2x64xf32, #tpu.memory_space<vmem>>, %arg21: memref<64x64xf32, #tpu.memory_space<vmem>>) attributes {dimension_semantics = [#tpu.dimension_semantics<parallel>, #tpu.dimension_semantics<arbitrary>], iteration_bounds = array<i64: 1, 2>, scalar_prefetch = 0 : i64, scratch_operands = 1 : i64, tpu.core_type = #tpu.core_type<tc>, window_params = [{transform_indices = @transform_0, window_bounds = array<i64: 1, 64, 192>}, {pipeline_mode = #tpu.pipeline_mode<synchronous>, transform_indices = @transform_1, window_bounds = array<i64: 192, 64>}, {pipeline_mode = #tpu.pipeline_mode<synchronous>, transform_indices = @transform_2, window_bounds = array<i64: 64, 64>}, {pipeline_mode = #tpu.pipeline_mode<synchronous>, transform_indices = @transform_3, window_bounds = array<i64: 64, 64>}, {transform_indices = @transform_4, window_bounds = array<i64: 1, 1, 64>}, {transform_indices = @transform_5, window_bounds = array<i64: 1, 1, 64>}, {transform_indices = @transform_6, window_bounds = array<i64: 1, 64, 192>}, {transform_indices = @transform_7, window_bounds = array<i64: 1, 1, 192>}, {transform_indices = @transform_8, window_bounds = array<i64: 1, 64, 64>}, {transform_indices = @transform_9, window_bounds = array<i64: 1, 1, 64>}, {transform_indices = @transform_10, window_bounds = array<i64: 1, 1, 64>}, {transform_indices = @transform_11, window_bounds = array<i64: 1, 1, 64>}, {transform_indices = @transform_12, window_bounds = array<i64: 1, 64, 256>}, {transform_indices = @transform_13, window_bounds = array<i64: 1, 1, 256>}, {transform_indices = @transform_14, window_bounds = array<i64: 1, 256, 64>}, {transform_indices = @transform_15, window_bounds = array<i64: 1, 1, 64>}, {pipeline_mode = #tpu.pipeline_mode<synchronous>, transform_indices = @transform_16, window_bounds = array<i64: 1, 64>}, {pipeline_mode = #tpu.pipeline_mode<synchronous>, transform_indices = @transform_17, window_bounds = array<i64: 1, 64>}, {transform_indices = @transform_18, window_bounds = array<i64: 1, 2, 64>}]} {
    %c0_i32 = arith.constant 0 : i32
    %0 = arith.cmpi eq, %arg1, %c0_i32 : i32
    %1 = arith.extui %0 : i1 to i32
    %c0_i32_0 = arith.constant 0 : i32
    %2 = arith.cmpi ne, %1, %c0_i32_0 : i32
    scf.if %2 {
      %c0_92 = arith.constant 0 : index
      %c0_93 = arith.constant 0 : index
      %c0_94 = arith.constant 0 : index
      %205 = vector.load %arg2[%c0_92, %c0_93, %c0_94] : memref<1x64x192xf32, #tpu.memory_space<vmem>>, vector<1x64x192xf32>
      %206 = vector.shape_cast %205 : vector<1x64x192xf32> to vector<64x192xf32>
      %c0_95 = arith.constant 0 : index
      %c0_96 = arith.constant 0 : index
      %207 = vector.load %arg3[%c0_95, %c0_96] : memref<192x64xf32, #tpu.memory_space<vmem>>, vector<192x64xf32>
      %cst_97 = arith.constant dense<0.000000e+00> : vector<64x64xf32>
      %208 = tpu.matmul %206, %207, %cst_97 {dimension_numbers = #tpu.dot_dimension_numbers<[1], [0], [0], [1], [0, 0, 1, 1], [], []>} : vector<64x192xf32>, vector<192x64xf32>, vector<64x64xf32> -> vector<64x64xf32>
      %c0_98 = arith.constant 0 : index
      %c0_99 = arith.constant 0 : index
      %209 = vector.load %arg4[%c0_98, %c0_99] : memref<64x64xf32, #tpu.memory_space<vmem>>, vector<64x64xf32>
      %210 = arith.addf %208, %209 : vector<64x64xf32>
      %c0_100 = arith.constant 0 : index
      %c0_101 = arith.constant 0 : index
      %211 = vector.load %arg21[%c0_100, %c0_101] : memref<64x64xf32, #tpu.memory_space<vmem>>, vector<64x64xf32>
      tpu.vector_store %arg21[%c0_100, %c0_101], %210 {strides = array<i32>} : memref<64x64xf32, #tpu.memory_space<vmem>>, vector<64x64xf32>,
    } else {
    }
    %c0 = arith.constant 0 : index
    %c0_1 = arith.constant 0 : index
    %3 = vector.load %arg21[%c0, %c0_1] : memref<64x64xf32, #tpu.memory_space<vmem>>, vector<64x64xf32>
    %c0_2 = arith.constant 0 : index
    %c0_3 = arith.constant 0 : index
    %c0_4 = arith.constant 0 : index
    %4 = vector.load %arg6[%c0_2, %c0_3, %c0_4] : memref<1x1x64xf32, #tpu.memory_space<vmem>>, vector<1x1x64xf32>
    %5 = vector.shape_cast %4 : vector<1x1x64xf32> to vector<1x64xf32>
    %c0_5 = arith.constant 0 : index
    %c0_6 = arith.constant 0 : index
    %c0_7 = arith.constant 0 : index
    %6 = vector.load %arg7[%c0_5, %c0_6, %c0_7] : memref<1x1x64xf32, #tpu.memory_space<vmem>>, vector<1x1x64xf32>
    %7 = vector.shape_cast %6 : vector<1x1x64xf32> to vector<1x64xf32>
    %cst = arith.constant dense<0.000000e+00> : vector<64xf32>
    %8 = vector.multi_reduction <add>, %3, %cst [1] : vector<64x64xf32> to vector<64xf32>
    %9 = vector.shape_cast %8 : vector<64xf32> to vector<64x1xf32>
    %cst_8 = arith.constant 6.400000e+01 : f32
    %10 = vector.broadcast %cst_8 : f32 to vector<64x1xf32>
    %11 = arith.divf %9, %10 : vector<64x1xf32>
    %12 = vector.broadcast %11 : vector<64x1xf32> to vector<64x64xf32>
    %13 = arith.subf %3, %12 : vector<64x64xf32>
    %14 = arith.mulf %13, %13 : vector<64x64xf32>
    %cst_9 = arith.constant dense<0.000000e+00> : vector<64xf32>
    %15 = vector.multi_reduction <add>, %14, %cst_9 [1] : vector<64x64xf32> to vector<64xf32>
    %16 = vector.shape_cast %15 : vector<64xf32> to vector<64x1xf32>
    %cst_10 = arith.constant 6.400000e+01 : f32
    %17 = vector.broadcast %cst_10 : f32 to vector<64x1xf32>
    %18 = arith.divf %16, %17 : vector<64x1xf32>
    %19 = vector.broadcast %11 : vector<64x1xf32> to vector<64x64xf32>
    %20 = arith.subf %3, %19 : vector<64x64xf32>
    %cst_11 = arith.constant 9.99999997E-7 : f32
    %21 = vector.broadcast %cst_11 : f32 to vector<64x1xf32>
    %22 = arith.addf %18, %21 : vector<64x1xf32>
    %23 = math.rsqrt %22 : vector<64x1xf32>
    %24 = vector.broadcast %23 : vector<64x1xf32> to vector<64x64xf32>
    %25 = arith.mulf %20, %24 : vector<64x64xf32>
    %26 = vector.broadcast %5 : vector<1x64xf32> to vector<64x64xf32>
    %27 = arith.mulf %25, %26 : vector<64x64xf32>
    %28 = vector.broadcast %7 : vector<1x64xf32> to vector<64x64xf32>
    %29 = arith.addf %27, %28 : vector<64x64xf32>
    %c0_12 = arith.constant 0 : index
    %c0_13 = arith.constant 0 : index
    %c0_14 = arith.constant 0 : index
    %30 = vector.load %arg8[%c0_12, %c0_13, %c0_14] : memref<1x64x192xf32, #tpu.memory_space<vmem>>, vector<1x64x192xf32>
    %31 = vector.shape_cast %30 : vector<1x64x192xf32> to vector<64x192xf32>
    %cst_15 = arith.constant dense<0.000000e+00> : vector<64x192xf32>
    %32 = tpu.matmul %29, %31, %cst_15 {dimension_numbers = #tpu.dot_dimension_numbers<[1], [0], [0], [1], [0, 0, 1, 1], [], []>} : vector<64x64xf32>, vector<64x192xf32>, vector<64x192xf32> -> vector<64x192xf32>
    %c0_16 = arith.constant 0 : index
    %c0_17 = arith.constant 0 : index
    %c0_18 = arith.constant 0 : index
    %33 = vector.load %arg9[%c0_16, %c0_17, %c0_18] : memref<1x1x192xf32, #tpu.memory_space<vmem>>, vector<1x1x192xf32>
    %34 = vector.shape_cast %33 : vector<1x1x192xf32> to vector<1x192xf32>
    %35 = vector.broadcast %34 : vector<1x192xf32> to vector<64x192xf32>
    %36 = arith.addf %32, %35 : vector<64x192xf32>
    %c0_19 = arith.constant 0 : index
    %c0_20 = arith.constant 0 : index
    %37 = vector.load %arg5[%c0_19, %c0_20] : memref<64x64xf32, #tpu.memory_space<vmem>>, vector<64x64xf32>
    %38 = vector.extract_strided_slice %36 {offsets = [0, 0], sizes = [64, 16], strides = [1, 1]} : vector<64x192xf32> to vector<64x16xf32>
    %39 = vector.extract_strided_slice %36 {offsets = [0, 64], sizes = [64, 16], strides = [1, 1]} : vector<64x192xf32> to vector<64x16xf32>
    %40 = vector.extract_strided_slice %36 {offsets = [0, 128], sizes = [64, 16], strides = [1, 1]} : vector<64x192xf32> to vector<64x16xf32>
    %cst_21 = arith.constant dense<0.000000e+00> : vector<64x64xf32>
    %41 = tpu.matmul %38, %39, %cst_21 {dimension_numbers = #tpu.dot_dimension_numbers<[1], [1], [0], [0], [0, 0, 1, 0], [], []>} : vector<64x16xf32>, vector<64x16xf32>, vector<64x64xf32> -> vector<64x64xf32>
    %cst_22 = arith.constant 2.500000e-01 : f32
    %42 = vector.broadcast %cst_22 : f32 to vector<64x64xf32>
    %43 = arith.mulf %41, %42 : vector<64x64xf32>
    %44 = arith.addf %43, %37 : vector<64x64xf32>
    %cst_23 = arith.constant dense<0xFF800000> : vector<64xf32>
    %45 = vector.multi_reduction <maximumf>, %44, %cst_23 [1] : vector<64x64xf32> to vector<64xf32>
    %46 = vector.shape_cast %45 : vector<64xf32> to vector<64x1xf32>
    %47 = vector.broadcast %46 : vector<64x1xf32> to vector<64x64xf32>
    %48 = arith.subf %44, %47 : vector<64x64xf32>
    %49 = math.exp %48 : vector<64x64xf32>
    %cst_24 = arith.constant dense<0.000000e+00> : vector<64xf32>
    %50 = vector.multi_reduction <add>, %49, %cst_24 [1] : vector<64x64xf32> to vector<64xf32>
    %51 = vector.shape_cast %50 : vector<64xf32> to vector<64x1xf32>
    %52 = tpu.reciprocal %51 {approx = true} : vector<64x1xf32> -> vector<64x1xf32>
    %53 = vector.broadcast %52 : vector<64x1xf32> to vector<64x64xf32>
    %54 = arith.mulf %49, %53 : vector<64x64xf32>
    %cst_25 = arith.constant dense<0.000000e+00> : vector<64x16xf32>
    %55 = tpu.matmul %54, %40, %cst_25 {dimension_numbers = #tpu.dot_dimension_numbers<[1], [0], [0], [1], [0, 0, 1, 1], [], []>} : vector<64x64xf32>, vector<64x16xf32>, vector<64x16xf32> -> vector<64x16xf32>
    %56 = vector.extract_strided_slice %36 {offsets = [0, 16], sizes = [64, 16], strides = [1, 1]} : vector<64x192xf32> to vector<64x16xf32>
    %57 = vector.extract_strided_slice %36 {offsets = [0, 80], sizes = [64, 16], strides = [1, 1]} : vector<64x192xf32> to vector<64x16xf32>
    %58 = vector.extract_strided_slice %36 {offsets = [0, 144], sizes = [64, 16], strides = [1, 1]} : vector<64x192xf32> to vector<64x16xf32>
    %cst_26 = arith.constant dense<0.000000e+00> : vector<64x64xf32>
    %59 = tpu.matmul %56, %57, %cst_26 {dimension_numbers = #tpu.dot_dimension_numbers<[1], [1], [0], [0], [0, 0, 1, 0], [], []>} : vector<64x16xf32>, vector<64x16xf32>, vector<64x64xf32> -> vector<64x64xf32>
    %cst_27 = arith.constant 2.500000e-01 : f32
    %60 = vector.broadcast %cst_27 : f32 to vector<64x64xf32>
    %61 = arith.mulf %59, %60 : vector<64x64xf32>
    %62 = arith.addf %61, %37 : vector<64x64xf32>
    %cst_28 = arith.constant dense<0xFF800000> : vector<64xf32>
    %63 = vector.multi_reduction <maximumf>, %62, %cst_28 [1] : vector<64x64xf32> to vector<64xf32>
    %64 = vector.shape_cast %63 : vector<64xf32> to vector<64x1xf32>
    %65 = vector.broadcast %64 : vector<64x1xf32> to vector<64x64xf32>
    %66 = arith.subf %62, %65 : vector<64x64xf32>
    %67 = math.exp %66 : vector<64x64xf32>
    %cst_29 = arith.constant dense<0.000000e+00> : vector<64xf32>
    %68 = vector.multi_reduction <add>, %67, %cst_29 [1] : vector<64x64xf32> to vector<64xf32>
    %69 = vector.shape_cast %68 : vector<64xf32> to vector<64x1xf32>
    %70 = tpu.reciprocal %69 {approx = true} : vector<64x1xf32> -> vector<64x1xf32>
    %71 = vector.broadcast %70 : vector<64x1xf32> to vector<64x64xf32>
    %72 = arith.mulf %67, %71 : vector<64x64xf32>
    %cst_30 = arith.constant dense<0.000000e+00> : vector<64x16xf32>
    %73 = tpu.matmul %72, %58, %cst_30 {dimension_numbers = #tpu.dot_dimension_numbers<[1], [0], [0], [1], [0, 0, 1, 1], [], []>} : vector<64x64xf32>, vector<64x16xf32>, vector<64x16xf32> -> vector<64x16xf32>
    %74 = vector.extract_strided_slice %36 {offsets = [0, 32], sizes = [64, 16], strides = [1, 1]} : vector<64x192xf32> to vector<64x16xf32>
    %75 = vector.extract_strided_slice %36 {offsets = [0, 96], sizes = [64, 16], strides = [1, 1]} : vector<64x192xf32> to vector<64x16xf32>
    %76 = vector.extract_strided_slice %36 {offsets = [0, 160], sizes = [64, 16], strides = [1, 1]} : vector<64x192xf32> to vector<64x16xf32>
    %cst_31 = arith.constant dense<0.000000e+00> : vector<64x64xf32>
    %77 = tpu.matmul %74, %75, %cst_31 {dimension_numbers = #tpu.dot_dimension_numbers<[1], [1], [0], [0], [0, 0, 1, 0], [], []>} : vector<64x16xf32>, vector<64x16xf32>, vector<64x64xf32> -> vector<64x64xf32>
    %cst_32 = arith.constant 2.500000e-01 : f32
    %78 = vector.broadcast %cst_32 : f32 to vector<64x64xf32>
    %79 = arith.mulf %77, %78 : vector<64x64xf32>
    %80 = arith.addf %79, %37 : vector<64x64xf32>
    %cst_33 = arith.constant dense<0xFF800000> : vector<64xf32>
    %81 = vector.multi_reduction <maximumf>, %80, %cst_33 [1] : vector<64x64xf32> to vector<64xf32>
    %82 = vector.shape_cast %81 : vector<64xf32> to vector<64x1xf32>
    %83 = vector.broadcast %82 : vector<64x1xf32> to vector<64x64xf32>
    %84 = arith.subf %80, %83 : vector<64x64xf32>
    %85 = math.exp %84 : vector<64x64xf32>
    %cst_34 = arith.constant dense<0.000000e+00> : vector<64xf32>
    %86 = vector.multi_reduction <add>, %85, %cst_34 [1] : vector<64x64xf32> to vector<64xf32>
    %87 = vector.shape_cast %86 : vector<64xf32> to vector<64x1xf32>
    %88 = tpu.reciprocal %87 {approx = true} : vector<64x1xf32> -> vector<64x1xf32>
    %89 = vector.broadcast %88 : vector<64x1xf32> to vector<64x64xf32>
    %90 = arith.mulf %85, %89 : vector<64x64xf32>
    %cst_35 = arith.constant dense<0.000000e+00> : vector<64x16xf32>
    %91 = tpu.matmul %90, %76, %cst_35 {dimension_numbers = #tpu.dot_dimension_numbers<[1], [0], [0], [1], [0, 0, 1, 1], [], []>} : vector<64x64xf32>, vector<64x16xf32>, vector<64x16xf32> -> vector<64x16xf32>
    %92 = vector.extract_strided_slice %36 {offsets = [0, 48], sizes = [64, 16], strides = [1, 1]} : vector<64x192xf32> to vector<64x16xf32>
    %93 = vector.extract_strided_slice %36 {offsets = [0, 112], sizes = [64, 16], strides = [1, 1]} : vector<64x192xf32> to vector<64x16xf32>
    %94 = vector.extract_strided_slice %36 {offsets = [0, 176], sizes = [64, 16], strides = [1, 1]} : vector<64x192xf32> to vector<64x16xf32>
    %cst_36 = arith.constant dense<0.000000e+00> : vector<64x64xf32>
    %95 = tpu.matmul %92, %93, %cst_36 {dimension_numbers = #tpu.dot_dimension_numbers<[1], [1], [0], [0], [0, 0, 1, 0], [], []>} : vector<64x16xf32>, vector<64x16xf32>, vector<64x64xf32> -> vector<64x64xf32>
    %cst_37 = arith.constant 2.500000e-01 : f32
    %96 = vector.broadcast %cst_37 : f32 to vector<64x64xf32>
    %97 = arith.mulf %95, %96 : vector<64x64xf32>
    %98 = arith.addf %97, %37 : vector<64x64xf32>
    %cst_38 = arith.constant dense<0xFF800000> : vector<64xf32>
    %99 = vector.multi_reduction <maximumf>, %98, %cst_38 [1] : vector<64x64xf32> to vector<64xf32>
    %100 = vector.shape_cast %99 : vector<64xf32> to vector<64x1xf32>
    %101 = vector.broadcast %100 : vector<64x1xf32> to vector<64x64xf32>
    %102 = arith.subf %98, %101 : vector<64x64xf32>
    %103 = math.exp %102 : vector<64x64xf32>
    %cst_39 = arith.constant dense<0.000000e+00> : vector<64xf32>
    %104 = vector.multi_reduction <add>, %103, %cst_39 [1] : vector<64x64xf32> to vector<64xf32>
    %105 = vector.shape_cast %104 : vector<64xf32> to vector<64x1xf32>
    %106 = tpu.reciprocal %105 {approx = true} : vector<64x1xf32> -> vector<64x1xf32>
    %107 = vector.broadcast %106 : vector<64x1xf32> to vector<64x64xf32>
    %108 = arith.mulf %103, %107 : vector<64x64xf32>
    %cst_40 = arith.constant dense<0.000000e+00> : vector<64x16xf32>
    %109 = tpu.matmul %108, %94, %cst_40 {dimension_numbers = #tpu.dot_dimension_numbers<[1], [0], [0], [1], [0, 0, 1, 1], [], []>} : vector<64x64xf32>, vector<64x16xf32>, vector<64x16xf32> -> vector<64x16xf32>
    %110 = tpu.concatenate %55, %73, %91, %109 in 1 : vector<64x16xf32>, vector<64x16xf32>, vector<64x16xf32>, vector<64x16xf32> -> vector<64x64xf32>
    %c0_41 = arith.constant 0 : index
    %c0_42 = arith.constant 0 : index
    %c0_43 = arith.constant 0 : index
    %111 = vector.load %arg10[%c0_41, %c0_42, %c0_43] : memref<1x64x64xf32, #tpu.memory_space<vmem>>, vector<1x64x64xf32>
    %112 = vector.shape_cast %111 : vector<1x64x64xf32> to vector<64x64xf32>
    %cst_44 = arith.constant dense<0.000000e+00> : vector<64x64xf32>
    %113 = tpu.matmul %110, %112, %cst_44 {dimension_numbers = #tpu.dot_dimension_numbers<[1], [0], [0], [1], [0, 0, 1, 1], [], []>} : vector<64x64xf32>, vector<64x64xf32>, vector<64x64xf32> -> vector<64x64xf32>
    %c0_45 = arith.constant 0 : index
    %c0_46 = arith.constant 0 : index
    %c0_47 = arith.constant 0 : index
    %114 = vector.load %arg11[%c0_45, %c0_46, %c0_47] : memref<1x1x64xf32, #tpu.memory_space<vmem>>, vector<1x1x64xf32>
    %115 = vector.shape_cast %114 : vector<1x1x64xf32> to vector<1x64xf32>
    %116 = vector.broadcast %115 : vector<1x64xf32> to vector<64x64xf32>
    %117 = arith.addf %113, %116 : vector<64x64xf32>
    %118 = arith.addf %117, %3 : vector<64x64xf32>
    %c0_48 = arith.constant 0 : index
    %c0_49 = arith.constant 0 : index
    %c0_50 = arith.constant 0 : index
    %119 = vector.load %arg12[%c0_48, %c0_49, %c0_50] : memref<1x1x64xf32, #tpu.memory_space<vmem>>, vector<1x1x64xf32>
    %120 = vector.shape_cast %119 : vector<1x1x64xf32> to vector<1x64xf32>
    %c0_51 = arith.constant 0 : index
    %c0_52 = arith.constant 0 : index
    %c0_53 = arith.constant 0 : index
    %121 = vector.load %arg13[%c0_51, %c0_52, %c0_53] : memref<1x1x64xf32, #tpu.memory_space<vmem>>, vector<1x1x64xf32>
    %122 = vector.shape_cast %121 : vector<1x1x64xf32> to vector<1x64xf32>
    %cst_54 = arith.constant dense<0.000000e+00> : vector<64xf32>
    %123 = vector.multi_reduction <add>, %118, %cst_54 [1] : vector<64x64xf32> to vector<64xf32>
    %124 = vector.shape_cast %123 : vector<64xf32> to vector<64x1xf32>
    %cst_55 = arith.constant 6.400000e+01 : f32
    %125 = vector.broadcast %cst_55 : f32 to vector<64x1xf32>
    %126 = arith.divf %124, %125 : vector<64x1xf32>
    %127 = vector.broadcast %126 : vector<64x1xf32> to vector<64x64xf32>
    %128 = arith.subf %118, %127 : vector<64x64xf32>
    %129 = arith.mulf %128, %128 : vector<64x64xf32>
    %cst_56 = arith.constant dense<0.000000e+00> : vector<64xf32>
    %130 = vector.multi_reduction <add>, %129, %cst_56 [1] : vector<64x64xf32> to vector<64xf32>
    %131 = vector.shape_cast %130 : vector<64xf32> to vector<64x1xf32>
    %cst_57 = arith.constant 6.400000e+01 : f32
    %132 = vector.broadcast %cst_57 : f32 to vector<64x1xf32>
    %133 = arith.divf %131, %132 : vector<64x1xf32>
    %134 = vector.broadcast %126 : vector<64x1xf32> to vector<64x64xf32>
    %135 = arith.subf %118, %134 : vector<64x64xf32>
    %cst_58 = arith.constant 9.99999997E-7 : f32
    %136 = vector.broadcast %cst_58 : f32 to vector<64x1xf32>
    %137 = arith.addf %133, %136 : vector<64x1xf32>
    %138 = math.rsqrt %137 : vector<64x1xf32>
    %139 = vector.broadcast %138 : vector<64x1xf32> to vector<64x64xf32>
    %140 = arith.mulf %135, %139 : vector<64x64xf32>
    %141 = vector.broadcast %120 : vector<1x64xf32> to vector<64x64xf32>
    %142 = arith.mulf %140, %141 : vector<64x64xf32>
    %143 = vector.broadcast %122 : vector<1x64xf32> to vector<64x64xf32>
    %144 = arith.addf %142, %143 : vector<64x64xf32>
    %c0_59 = arith.constant 0 : index
    %c0_60 = arith.constant 0 : index
    %c0_61 = arith.constant 0 : index
    %145 = vector.load %arg14[%c0_59, %c0_60, %c0_61] : memref<1x64x256xf32, #tpu.memory_space<vmem>>, vector<1x64x256xf32>
    %146 = vector.shape_cast %145 : vector<1x64x256xf32> to vector<64x256xf32>
    %cst_62 = arith.constant dense<0.000000e+00> : vector<64x256xf32>
    %147 = tpu.matmul %144, %146, %cst_62 {dimension_numbers = #tpu.dot_dimension_numbers<[1], [0], [0], [1], [0, 0, 1, 1], [], []>} : vector<64x64xf32>, vector<64x256xf32>, vector<64x256xf32> -> vector<64x256xf32>
    %c0_63 = arith.constant 0 : index
    %c0_64 = arith.constant 0 : index
    %c0_65 = arith.constant 0 : index
    %148 = vector.load %arg15[%c0_63, %c0_64, %c0_65] : memref<1x1x256xf32, #tpu.memory_space<vmem>>, vector<1x1x256xf32>
    %149 = vector.shape_cast %148 : vector<1x1x256xf32> to vector<1x256xf32>
    %150 = vector.broadcast %149 : vector<1x256xf32> to vector<64x256xf32>
    %151 = arith.addf %147, %150 : vector<64x256xf32>
    %cst_66 = arith.constant 5.000000e-01 : f32
    %152 = vector.broadcast %cst_66 : f32 to vector<64x256xf32>
    %153 = arith.mulf %152, %151 : vector<64x256xf32>
    %cst_67 = arith.constant 0.707106769 : f32
    %154 = vector.broadcast %cst_67 : f32 to vector<64x256xf32>
    %155 = arith.mulf %151, %154 : vector<64x256xf32>
    %cst_68 = arith.constant 0.000000e+00 : f32
    %156 = vector.broadcast %cst_68 : f32 to vector<64x256xf32>
    %157 = arith.cmpf oge, %155, %156 : vector<64x256xf32>
    %cst_69 = arith.constant 1.000000e+00 : f32
    %cst_70 = arith.constant -1.000000e+00 : f32
    %158 = vector.broadcast %cst_69 : f32 to vector<64x256xf32>
    %159 = vector.broadcast %cst_70 : f32 to vector<64x256xf32>
    %160 = arith.select %157, %158, %159 : vector<64x256xi1>, vector<64x256xf32>
    %161 = math.absf %155 : vector<64x256xf32>
    %cst_71 = arith.constant 0.327591091 : f32
    %162 = vector.broadcast %cst_71 : f32 to vector<64x256xf32>
    %163 = arith.mulf %162, %161 : vector<64x256xf32>
    %cst_72 = arith.constant 1.000000e+00 : f32
    %164 = vector.broadcast %cst_72 : f32 to vector<64x256xf32>
    %165 = arith.addf %164, %163 : vector<64x256xf32>
    %cst_73 = arith.constant 1.000000e+00 : f32
    %166 = vector.broadcast %cst_73 : f32 to vector<64x256xf32>
    %167 = arith.divf %166, %165 : vector<64x256xf32>
    %cst_74 = arith.constant 1.06140542 : f32
    %168 = vector.broadcast %cst_74 : f32 to vector<64x256xf32>
    %169 = arith.mulf %168, %167 : vector<64x256xf32>
    %cst_75 = arith.constant -1.45315206 : f32
    %170 = vector.broadcast %cst_75 : f32 to vector<64x256xf32>
    %171 = arith.addf %169, %170 : vector<64x256xf32>
    %172 = arith.mulf %171, %167 : vector<64x256xf32>
    %cst_76 = arith.constant 1.42141378 : f32
    %173 = vector.broadcast %cst_76 : f32 to vector<64x256xf32>
    %174 = arith.addf %172, %173 : vector<64x256xf32>
    %175 = arith.mulf %174, %167 : vector<64x256xf32>
    %cst_77 = arith.constant -0.284496725 : f32
    %176 = vector.broadcast %cst_77 : f32 to vector<64x256xf32>
    %177 = arith.addf %175, %176 : vector<64x256xf32>
    %178 = arith.mulf %177, %167 : vector<64x256xf32>
    %cst_78 = arith.constant 0.254829586 : f32
    %179 = vector.broadcast %cst_78 : f32 to vector<64x256xf32>
    %180 = arith.addf %178, %179 : vector<64x256xf32>
    %181 = arith.mulf %180, %167 : vector<64x256xf32>
    %cst_79 = arith.constant 0.000000e+00 : f32
    %182 = vector.broadcast %cst_79 : f32 to vector<64x256xf32>
    %183 = arith.subf %182, %161 : vector<64x256xf32>
    %184 = arith.mulf %183, %161 : vector<64x256xf32>
    %185 = math.exp %184 : vector<64x256xf32>
    %186 = arith.mulf %181, %185 : vector<64x256xf32>
    %cst_80 = arith.constant 1.000000e+00 : f32
    %187 = vector.broadcast %cst_80 : f32 to vector<64x256xf32>
    %188 = arith.subf %187, %186 : vector<64x256xf32>
    %189 = arith.mulf %160, %188 : vector<64x256xf32>
    %cst_81 = arith.constant 1.000000e+00 : f32
    %190 = vector.broadcast %cst_81 : f32 to vector<64x256xf32>
    %191 = arith.addf %190, %189 : vector<64x256xf32>
    %192 = arith.mulf %153, %191 : vector<64x256xf32>
    %c0_82 = arith.constant 0 : index
    %c0_83 = arith.constant 0 : index
    %c0_84 = arith.constant 0 : index
    %193 = vector.load %arg16[%c0_82, %c0_83, %c0_84] : memref<1x256x64xf32, #tpu.memory_space<vmem>>, vector<1x256x64xf32>
    %194 = vector.shape_cast %193 : vector<1x256x64xf32> to vector<256x64xf32>
    %cst_85 = arith.constant dense<0.000000e+00> : vector<64x64xf32>
    %195 = tpu.matmul %192, %194, %cst_85 {dimension_numbers = #tpu.dot_dimension_numbers<[1], [0], [0], [1], [0, 0, 1, 1], [], []>} : vector<64x256xf32>, vector<256x64xf32>, vector<64x64xf32> -> vector<64x64xf32>
    %c0_86 = arith.constant 0 : index
    %c0_87 = arith.constant 0 : index
    %c0_88 = arith.constant 0 : index
    %196 = vector.load %arg17[%c0_86, %c0_87, %c0_88] : memref<1x1x64xf32, #tpu.memory_space<vmem>>, vector<1x1x64xf32>
    %197 = vector.shape_cast %196 : vector<1x1x64xf32> to vector<1x64xf32>
    %198 = vector.broadcast %197 : vector<1x64xf32> to vector<64x64xf32>
    %199 = arith.addf %195, %198 : vector<64x64xf32>
    %200 = arith.addf %199, %118 : vector<64x64xf32>
    %c0_89 = arith.constant 0 : index
    %c0_90 = arith.constant 0 : index
    %201 = vector.load %arg21[%c0_89, %c0_90] : memref<64x64xf32, #tpu.memory_space<vmem>>, vector<64x64xf32>
    tpu.vector_store %arg21[%c0_89, %c0_90], %200 {strides = array<i32>} : memref<64x64xf32, #tpu.memory_space<vmem>>, vector<64x64xf32>,
    %c1_i32 = arith.constant 1 : i32
    %202 = arith.cmpi eq, %arg1, %c1_i32 : i32
    %203 = arith.extui %202 : i1 to i32
    %c0_i32_91 = arith.constant 0 : i32
    %204 = arith.cmpi ne, %203, %c0_i32_91 : i32
    scf.if %204 {
      %205 = vector.extract_strided_slice %200 {offsets = [0, 0], sizes = [1, 64], strides = [1, 1]} : vector<64x64xf32> to vector<1x64xf32>
      %206 = vector.extract_strided_slice %200 {offsets = [32, 0], sizes = [1, 64], strides = [1, 1]} : vector<64x64xf32> to vector<1x64xf32>
      %207 = tpu.concatenate %205, %206 in 0 : vector<1x64xf32>, vector<1x64xf32> -> vector<2x64xf32>
      %c0_92 = arith.constant 0 : index
      %c0_93 = arith.constant 0 : index
      %208 = vector.load %arg18[%c0_92, %c0_93] : memref<1x64xf32, #tpu.memory_space<vmem>>, vector<1x64xf32>
      %c0_94 = arith.constant 0 : index
      %c0_95 = arith.constant 0 : index
      %209 = vector.load %arg19[%c0_94, %c0_95] : memref<1x64xf32, #tpu.memory_space<vmem>>, vector<1x64xf32>
      %cst_96 = arith.constant dense<0.000000e+00> : vector<2xf32>
      %210 = vector.multi_reduction <add>, %207, %cst_96 [1] : vector<2x64xf32> to vector<2xf32>
      %211 = vector.shape_cast %210 : vector<2xf32> to vector<2x1xf32>
      %cst_97 = arith.constant 6.400000e+01 : f32
      %212 = vector.broadcast %cst_97 : f32 to vector<2x1xf32>
      %213 = arith.divf %211, %212 : vector<2x1xf32>
      %214 = vector.broadcast %213 : vector<2x1xf32> to vector<2x64xf32>
      %215 = arith.subf %207, %214 : vector<2x64xf32>
      %216 = arith.mulf %215, %215 : vector<2x64xf32>
      %cst_98 = arith.constant dense<0.000000e+00> : vector<2xf32>
      %217 = vector.multi_reduction <add>, %216, %cst_98 [1] : vector<2x64xf32> to vector<2xf32>
      %218 = vector.shape_cast %217 : vector<2xf32> to vector<2x1xf32>
      %cst_99 = arith.constant 6.400000e+01 : f32
      %219 = vector.broadcast %cst_99 : f32 to vector<2x1xf32>
      %220 = arith.divf %218, %219 : vector<2x1xf32>
      %221 = vector.broadcast %213 : vector<2x1xf32> to vector<2x64xf32>
      %222 = arith.subf %207, %221 : vector<2x64xf32>
      %cst_100 = arith.constant 9.99999997E-7 : f32
      %223 = vector.broadcast %cst_100 : f32 to vector<2x1xf32>
      %224 = arith.addf %220, %223 : vector<2x1xf32>
      %225 = math.rsqrt %224 : vector<2x1xf32>
      %226 = vector.broadcast %225 : vector<2x1xf32> to vector<2x64xf32>
      %227 = arith.mulf %222, %226 : vector<2x64xf32>
      %228 = vector.broadcast %208 : vector<1x64xf32> to vector<2x64xf32>
      %229 = arith.mulf %227, %228 : vector<2x64xf32>
      %230 = vector.broadcast %209 : vector<1x64xf32> to vector<2x64xf32>
      %231 = arith.addf %229, %230 : vector<2x64xf32>
      %232 = vector.shape_cast %231 : vector<2x64xf32> to vector<1x2x64xf32>
      %c0_101 = arith.constant 0 : index
      %c0_102 = arith.constant 0 : index
      %c0_103 = arith.constant 0 : index
      %233 = vector.load %arg20[%c0_101, %c0_102, %c0_103] : memref<1x2x64xf32, #tpu.memory_space<vmem>>, vector<1x2x64xf32>
      tpu.vector_store %arg20[%c0_101, %c0_102, %c0_103], %232 {strides = array<i32>} : memref<1x2x64xf32, #tpu.memory_space<vmem>>, vector<1x2x64xf32>,
    } else {
    }
    return
  }
  func.func @transform_0(%arg0: i32, %arg1: i32) -> (i32, i32, i32) {
    %c0_i32 = arith.constant 0 : i32
    %c0_i32_0 = arith.constant 0 : i32
    %c0_i32_1 = arith.constant 0 : i32
    return %arg0, %c0_i32, %c0_i32_0 : i32, i32, i32
  }
  func.func @transform_1(%arg0: i32, %arg1: i32) -> (i32, i32) {
    %c0_i32 = arith.constant 0 : i32
    %c0_i32_0 = arith.constant 0 : i32
    %c0_i32_1 = arith.constant 0 : i32
    return %c0_i32, %c0_i32_0 : i32, i32
  }
  func.func @transform_2(%arg0: i32, %arg1: i32) -> (i32, i32) {
    %c0_i32 = arith.constant 0 : i32
    %c0_i32_0 = arith.constant 0 : i32
    %c0_i32_1 = arith.constant 0 : i32
    return %c0_i32, %c0_i32_0 : i32, i32
  }
  func.func @transform_3(%arg0: i32, %arg1: i32) -> (i32, i32) {
    %c0_i32 = arith.constant 0 : i32
    %c0_i32_0 = arith.constant 0 : i32
    %c0_i32_1 = arith.constant 0 : i32
    return %c0_i32, %c0_i32_0 : i32, i32
  }
  func.func @transform_4(%arg0: i32, %arg1: i32) -> (i32, i32, i32) {
    %c0_i32 = arith.constant 0 : i32
    %c0_i32_0 = arith.constant 0 : i32
    %c0_i32_1 = arith.constant 0 : i32
    return %arg1, %c0_i32, %c0_i32_0 : i32, i32, i32
  }
  func.func @transform_5(%arg0: i32, %arg1: i32) -> (i32, i32, i32) {
    %c0_i32 = arith.constant 0 : i32
    %c0_i32_0 = arith.constant 0 : i32
    %c0_i32_1 = arith.constant 0 : i32
    return %arg1, %c0_i32, %c0_i32_0 : i32, i32, i32
  }
  func.func @transform_6(%arg0: i32, %arg1: i32) -> (i32, i32, i32) {
    %c0_i32 = arith.constant 0 : i32
    %c0_i32_0 = arith.constant 0 : i32
    %c0_i32_1 = arith.constant 0 : i32
    return %arg1, %c0_i32, %c0_i32_0 : i32, i32, i32
  }
  func.func @transform_7(%arg0: i32, %arg1: i32) -> (i32, i32, i32) {
    %c0_i32 = arith.constant 0 : i32
    %c0_i32_0 = arith.constant 0 : i32
    %c0_i32_1 = arith.constant 0 : i32
    return %arg1, %c0_i32, %c0_i32_0 : i32, i32, i32
  }
  func.func @transform_8(%arg0: i32, %arg1: i32) -> (i32, i32, i32) {
    %c0_i32 = arith.constant 0 : i32
    %c0_i32_0 = arith.constant 0 : i32
    %c0_i32_1 = arith.constant 0 : i32
    return %arg1, %c0_i32, %c0_i32_0 : i32, i32, i32
  }
  func.func @transform_9(%arg0: i32, %arg1: i32) -> (i32, i32, i32) {
    %c0_i32 = arith.constant 0 : i32
    %c0_i32_0 = arith.constant 0 : i32
    %c0_i32_1 = arith.constant 0 : i32
    return %arg1, %c0_i32, %c0_i32_0 : i32, i32, i32
  }
  func.func @transform_10(%arg0: i32, %arg1: i32) -> (i32, i32, i32) {
    %c0_i32 = arith.constant 0 : i32
    %c0_i32_0 = arith.constant 0 : i32
    %c0_i32_1 = arith.constant 0 : i32
    return %arg1, %c0_i32, %c0_i32_0 : i32, i32, i32
  }
  func.func @transform_11(%arg0: i32, %arg1: i32) -> (i32, i32, i32) {
    %c0_i32 = arith.constant 0 : i32
    %c0_i32_0 = arith.constant 0 : i32
    %c0_i32_1 = arith.constant 0 : i32
    return %arg1, %c0_i32, %c0_i32_0 : i32, i32, i32
  }
  func.func @transform_12(%arg0: i32, %arg1: i32) -> (i32, i32, i32) {
    %c0_i32 = arith.constant 0 : i32
    %c0_i32_0 = arith.constant 0 : i32
    %c0_i32_1 = arith.constant 0 : i32
    return %arg1, %c0_i32, %c0_i32_0 : i32, i32, i32
  }
  func.func @transform_13(%arg0: i32, %arg1: i32) -> (i32, i32, i32) {
    %c0_i32 = arith.constant 0 : i32
    %c0_i32_0 = arith.constant 0 : i32
    %c0_i32_1 = arith.constant 0 : i32
    return %arg1, %c0_i32, %c0_i32_0 : i32, i32, i32
  }
  func.func @transform_14(%arg0: i32, %arg1: i32) -> (i32, i32, i32) {
    %c0_i32 = arith.constant 0 : i32
    %c0_i32_0 = arith.constant 0 : i32
    %c0_i32_1 = arith.constant 0 : i32
    return %arg1, %c0_i32, %c0_i32_0 : i32, i32, i32
  }
  func.func @transform_15(%arg0: i32, %arg1: i32) -> (i32, i32, i32) {
    %c0_i32 = arith.constant 0 : i32
    %c0_i32_0 = arith.constant 0 : i32
    %c0_i32_1 = arith.constant 0 : i32
    return %arg1, %c0_i32, %c0_i32_0 : i32, i32, i32
  }
  func.func @transform_16(%arg0: i32, %arg1: i32) -> (i32, i32) {
    %c0_i32 = arith.constant 0 : i32
    %c0_i32_0 = arith.constant 0 : i32
    %c0_i32_1 = arith.constant 0 : i32
    return %c0_i32, %c0_i32_0 : i32, i32
  }
  func.func @transform_17(%arg0: i32, %arg1: i32) -> (i32, i32) {
    %c0_i32 = arith.constant 0 : i32
    %c0_i32_0 = arith.constant 0 : i32
    %c0_i32_1 = arith.constant 0 : i32
    return %c0_i32, %c0_i32_0 : i32, i32
  }
  func.func @transform_18(%arg0: i32, %arg1: i32) -> (i32, i32, i32) {
    %c0_i32 = arith.constant 0 : i32
    %c0_i32_0 = arith.constant 0 : i32
    %c0_i32_1 = arith.constant 0 : i32
    return %arg0, %c0_i32, %c0_i32_0 : i32, i32, i32
  }
}

</mosaic_0001>

<llo_original>
// kernel: vit_forward.1
$region0: #{vit_forward.1}
  #allocation0 [shape = 'u32[]', space=smem, size = 0x4, offset = 0x4, fixed_abs, tag = 'smem constant byte address 0x4 - core index']
  #allocation1 [shape = 'u32[144,128]{1,0:T(1,128)}', space=vmem, size = 0x12000, scoped, tag = 'internal scratch']
  #allocation2 [shape = 'f32[64,64]{1,0:T(8,128)}', space=vmem, size = 0x8000, scoped, tag = 'scratch operand']
  %s0 = inlined_call_operand.vmem [shape: f32[1,64,192], index: 0, kind: input, shape index: {}]
  %s1 = inlined_call_operand.vmem [shape: f32[192,64], index: 1, kind: input, shape index: {}]
  %s2 = inlined_call_operand.vmem [shape: f32[64,64], index: 2, kind: input, shape index: {}]
  %s3 = inlined_call_operand.vmem [shape: f32[64,64], index: 3, kind: input, shape index: {}]
  %s4 = inlined_call_operand.vmem [shape: f32[2,1,64], index: 4, kind: input, shape index: {}]
  %s5 = inlined_call_operand.vmem [shape: f32[2,1,64], index: 5, kind: input, shape index: {}]
  %s6 = inlined_call_operand.vmem [shape: f32[2,64,192], index: 6, kind: input, shape index: {}]
  %s7 = inlined_call_operand.vmem [shape: f32[2,1,192], index: 7, kind: input, shape index: {}]
  %s8 = inlined_call_operand.vmem [shape: f32[2,64,64], index: 8, kind: input, shape index: {}]
  %s9 = inlined_call_operand.vmem [shape: f32[2,1,64], index: 9, kind: input, shape index: {}]
  %s10 = inlined_call_operand.vmem [shape: f32[2,1,64], index: 10, kind: input, shape index: {}]
  %s11 = inlined_call_operand.vmem [shape: f32[2,1,64], index: 11, kind: input, shape index: {}]
  %s12 = inlined_call_operand.vmem [shape: f32[2,64,256], index: 12, kind: input, shape index: {}]
  %s13 = inlined_call_operand.vmem [shape: f32[2,1,256], index: 13, kind: input, shape index: {}]
  %s14 = inlined_call_operand.vmem [shape: f32[2,256,64], index: 14, kind: input, shape index: {}]
  %s15 = inlined_call_operand.vmem [shape: f32[2,1,64], index: 15, kind: input, shape index: {}]
  %s16 = inlined_call_operand.vmem [shape: f32[1,64], index: 16, kind: input, shape index: {}]
  %s17 = inlined_call_operand.vmem [shape: f32[1,64], index: 17, kind: input, shape index: {}]
  %s18 = inlined_call_operand.hbm [shape: f32[1,2,64], index: 18, kind: output, shape index: {}]
  %s19 = sld [smem:[#allocation0]]
  $region113: #{vit_forward.1} parent=0
    _
  %s21 = ssub.s32 1, %s19
  %s22 = scalar_select 0, %s21, %s19
  $region1: #{vit_forward.1} parent=0
    #allocation3 [shape = 'u8[1024]{0}', space=vmem, size = 0x400, scoped, tag = 'output window, operand 0, single buffered']
    #allocation4 [shape = 's32[2]{0}', space=sflag, size = 0x8, scoped, tag = 'scoped memory for vit_forward.1']
    %23 = vsyncpa [#allocation4], 0
    loop: start=0, step=1, limit=4
    $region2: #{vit_forward.1} parent=1 // loop_pre_header
      _
    $region3: #{vit_forward.1} parent=1 // loop_header
      %s25 = sphi 0, %s29
      %p26 = scmp.ge.s32.totalorder %s25, 4
      %s32 = sphi 0, %s44
      %s33 = sphi 0, %s40
      %s34 = sphi 0, %s32
      %s35 = sphi 0, %s33
      %s36 = sphi 0, %s34
      %s37 = sphi 0, %s35
      %s47 = sphi 0, %s49
      %s50 = sphi 0, %s47
      %s51 = sphi 0, %s50
      %s67 = sphi 0, %s51
      %s71 = sphi 0, %s71
      %s73 = sphi 0, %s71
      %s74 = sphi 0, %s73
      %s88 = sphi 0, %s74
      %s92 = sphi 0, %s92
      %s94 = sphi 0, %s92
      %s95 = sphi 0, %s94
      %s109 = sphi 0, %s95
      %s113 = sphi 0, %s113
      %s115 = sphi 0, %s113
      %s116 = sphi 0, %s115
      %s130 = sphi 0, %s116
      %s136 = sphi 0, %s138
      %s139 = sphi 0, %s136
      %s140 = sphi 0, %s139
      %s156 = sphi 0, %s140
      %s162 = sphi 0, %s164
      %s165 = sphi 0, %s162
      %s166 = sphi 0, %s165
      %s182 = sphi 0, %s166
      %s188 = sphi 0, %s190
      %s191 = sphi 0, %s188
      %s192 = sphi 0, %s191
      %s208 = sphi 0, %s192
      %s214 = sphi 0, %s216
      %s217 = sphi 0, %s214
      %s218 = sphi 0, %s217
      %s234 = sphi 0, %s218
      %s240 = sphi 0, %s242
      %s243 = sphi 0, %s240
      %s244 = sphi 0, %s243
      %s260 = sphi 0, %s244
      %s266 = sphi 0, %s268
      %s269 = sphi 0, %s266
      %s270 = sphi 0, %s269
      %s286 = sphi 0, %s270
      %s292 = sphi 0, %s294
      %s295 = sphi 0, %s292
      %s296 = sphi 0, %s295
      %s312 = sphi 0, %s296
      %s318 = sphi 0, %s320
      %s321 = sphi 0, %s318
      %s322 = sphi 0, %s321
      %s338 = sphi 0, %s322
      %s344 = sphi 0, %s346
      %s347 = sphi 0, %s344
      %s348 = sphi 0, %s347
      %s364 = sphi 0, %s348
      %s370 = sphi 0, %s372
      %s373 = sphi 0, %s370
      %s374 = sphi 0, %s373
      %s390 = sphi 0, %s374
      %s396 = sphi 0, %s398
      %s399 = sphi 0, %s396
      %s400 = sphi 0, %s399
      %s416 = sphi 0, %s400
      %s422 = sphi 0, %s424
      %s425 = sphi 0, %s422
      %s426 = sphi 0, %s425
      %s442 = sphi 0, %s426
      %s446 = sphi 0, %s446
      %s448 = sphi 0, %s446
      %s449 = sphi 0, %s448
      %s463 = sphi 0, %s449
      %s467 = sphi 0, %s467
      %s469 = sphi 0, %s467
      %s470 = sphi 0, %s469
      %s484 = sphi 0, %s470
      %s490 = sphi 0, %s492
      %s493 = sphi 0, %s490
      %s494 = sphi 0, %s493
      %s510 = sphi 0, %s494
    $region4: #{vit_forward.1} parent=1 // loop_header_branch
      %28 = sbr.rel (%p26) target = $region8
    $region5: #{vit_forward.1} parent=1 // loop_body
      %s30 = ssub.s32 %s25, 1
      %s31 = ssub.s32 %s25, 2
      %s38 = sadd.s32 1, %s33
      %p39 = scmp.ge.s32.totalorder %s38, 2
      %s40 = scalar_select %p39, 0, %s38
      %s41 = sadd.s32 1, %s32
      %s42 = scalar_select %p39, %s41, %s32
      %p43 = scmp.ge.s32.totalorder %s42, 1
      %s44 = scalar_select %p43, 0, %s42
      %s45 = ssub.s32 %s32, %s44
      %p46 = scmp.eq.s32.totalorder %s45, 0
      %s48 = sadd.s32 %s47, 1
      %s49 = scalar_select %p46, %s47, %s48
      %p52 = pneg %p46
      %p53 = scmp.eq.s32.totalorder %s25, 1
      %p54 = por %p52, %p53
      %p55 = scmp.ne.s32.totalorder %s47, %s50
      %p56 = scmp.eq.s32.totalorder %s25, 0
      %p57 = por %p55, %p56
      %p58 = scmp.ne.s32.totalorder %s47, %s50
      %p59 = scmp.eq.s32.totalorder %s30, 1
      %p60 = por %p58, %p59
      %p61 = scmp.ne.s32.totalorder %s50, %s51
      %p62 = scmp.eq.s32.totalorder %s30, 0
      %p63 = por %p61, %p62
      %p64 = scmp.ne.s32.totalorder %s50, %s51
      %p65 = scmp.eq.s32.totalorder %s31, 1
      %p66 = por %p64, %p65
      %p68 = scmp.ne.s32.totalorder %s51, %s67
      %p69 = scmp.eq.s32.totalorder %s31, 0
      %p70 = por %p68, %p69
      %s72 = sadd.s32 %s71, 1
      %p75 = scmp.eq.s32.totalorder %s25, 1
      %p76 = scmp.ne.s32.totalorder %s71, %s73
      %p77 = scmp.eq.s32.totalorder %s25, 0
      %p78 = por %p76, %p77
      %p79 = scmp.ne.s32.totalorder %s71, %s73
      %p80 = scmp.eq.s32.totalorder %s30, 1
      %p81 = por %p79, %p80
      %p82 = scmp.ne.s32.totalorder %s73, %s74
      %p83 = scmp.eq.s32.totalorder %s30, 0
      %p84 = por %p82, %p83
      %p85 = scmp.ne.s32.totalorder %s73, %s74
      %p86 = scmp.eq.s32.totalorder %s31, 1
      %p87 = por %p85, %p86
      %p89 = scmp.ne.s32.totalorder %s74, %s88
      %p90 = scmp.eq.s32.totalorder %s31, 0
      %p91 = por %p89, %p90
      %s93 = sadd.s32 %s92, 1
      %p96 = scmp.eq.s32.totalorder %s25, 1
      %p97 = scmp.ne.s32.totalorder %s92, %s94
      %p98 = scmp.eq.s32.totalorder %s25, 0
      %p99 = por %p97, %p98
      %p100 = scmp.ne.s32.totalorder %s92, %s94
      %p101 = scmp.eq.s32.totalorder %s30, 1
      %p102 = por %p100, %p101
      %p103 = scmp.ne.s32.totalorder %s94, %s95
      %p104 = scmp.eq.s32.totalorder %s30, 0
      %p105 = por %p103, %p104
      %p106 = scmp.ne.s32.totalorder %s94, %s95
      %p107 = scmp.eq.s32.totalorder %s31, 1
      %p108 = por %p106, %p107
      %p110 = scmp.ne.s32.totalorder %s95, %s109
      %p111 = scmp.eq.s32.totalorder %s31, 0
      %p112 = por %p110, %p111
      %s114 = sadd.s32 %s113, 1
      %p117 = scmp.eq.s32.totalorder %s25, 1
      %p118 = scmp.ne.s32.totalorder %s113, %s115
      %p119 = scmp.eq.s32.totalorder %s25, 0
      %p120 = por %p118, %p119
      %p121 = scmp.ne.s32.totalorder %s113, %s115
      %p122 = scmp.eq.s32.totalorder %s30, 1
      %p123 = por %p121, %p122
      %p124 = scmp.ne.s32.totalorder %s115, %s116
      %p125 = scmp.eq.s32.totalorder %s30, 0
      %p126 = por %p124, %p125
      %p127 = scmp.ne.s32.totalorder %s115, %s116
      %p128 = scmp.eq.s32.totalorder %s31, 1
      %p129 = por %p127, %p128
      %p131 = scmp.ne.s32.totalorder %s116, %s130
      %p132 = scmp.eq.s32.totalorder %s31, 0
      %p133 = por %p131, %p132
      %s134 = ssub.s32 %s33, %s40
      %p135 = scmp.eq.s32.totalorder %s134, 0
      %s137 = sadd.s32 %s136, 1
      %s138 = scalar_select %p135, %s136, %s137
      %p141 = pneg %p135
      %p142 = scmp.eq.s32.totalorder %s25, 1
      %p143 = por %p141, %p142
      %p144 = scmp.ne.s32.totalorder %s136, %s139
      %p145 = scmp.eq.s32.totalorder %s25, 0
      %p146 = por %p144, %p145
      %p147 = scmp.ne.s32.totalorder %s136, %s139
      %p148 = scmp.eq.s32.totalorder %s30, 1
      %p149 = por %p147, %p148
      %p150 = scmp.ne.s32.totalorder %s139, %s140
      %p151 = scmp.eq.s32.totalorder %s30, 0
      %p152 = por %p150, %p151
      %p153 = scmp.ne.s32.totalorder %s139, %s140
      %p154 = scmp.eq.s32.totalorder %s31, 1
      %p155 = por %p153, %p154
      %p157 = scmp.ne.s32.totalorder %s140, %s156
      %p158 = scmp.eq.s32.totalorder %s31, 0
      %p159 = por %p157, %p158
      %s160 = ssub.s32 %s33, %s40
      %p161 = scmp.eq.s32.totalorder %s160, 0
      %s163 = sadd.s32 %s162, 1
      %s164 = scalar_select %p161, %s162, %s163
      %p167 = pneg %p161
      %p168 = scmp.eq.s32.totalorder %s25, 1
      %p169 = por %p167, %p168
      %p170 = scmp.ne.s32.totalorder %s162, %s165
      %p171 = scmp.eq.s32.totalorder %s25, 0
      %p172 = por %p170, %p171
      %p173 = scmp.ne.s32.totalorder %s162, %s165
      %p174 = scmp.eq.s32.totalorder %s30, 1
      %p175 = por %p173, %p174
      %p176 = scmp.ne.s32.totalorder %s165, %s166
      %p177 = scmp.eq.s32.totalorder %s30, 0
      %p178 = por %p176, %p177
      %p179 = scmp.ne.s32.totalorder %s165, %s166
      %p180 = scmp.eq.s32.totalorder %s31, 1
      %p181 = por %p179, %p180
      %p183 = scmp.ne.s32.totalorder %s166, %s182
      %p184 = scmp.eq.s32.totalorder %s31, 0
      %p185 = por %p183, %p184
      %s186 = ssub.s32 %s33, %s40
      %p187 = scmp.eq.s32.totalorder %s186, 0
      %s189 = sadd.s32 %s188, 1
      %s190 = scalar_select %p187, %s188, %s189
      %p193 = pneg %p187
      %p194 = scmp.eq.s32.totalorder %s25, 1
      %p195 = por %p193, %p194
      %p196 = scmp.ne.s32.totalorder %s188, %s191
      %p197 = scmp.eq.s32.totalorder %s25, 0
      %p198 = por %p196, %p197
      %p199 = scmp.ne.s32.totalorder %s188, %s191
      %p200 = scmp.eq.s32.totalorder %s30, 1
      %p201 = por %p199, %p200
      %p202 = scmp.ne.s32.totalorder %s191, %s192
      %p203 = scmp.eq.s32.totalorder %s30, 0
      %p204 = por %p202, %p203
      %p205 = scmp.ne.s32.totalorder %s191, %s192
      %p206 = scmp.eq.s32.totalorder %s31, 1
      %p207 = por %p205, %p206
      %p209 = scmp.ne.s32.totalorder %s192, %s208
      %p210 = scmp.eq.s32.totalorder %s31, 0
      %p211 = por %p209, %p210
      %s212 = ssub.s32 %s33, %s40
      %p213 = scmp.eq.s32.totalorder %s212, 0
      %s215 = sadd.s32 %s214, 1
      %s216 = scalar_select %p213, %s214, %s215
      %p219 = pneg %p213
      %p220 = scmp.eq.s32.totalorder %s25, 1
      %p221 = por %p219, %p220
      %p222 = scmp.ne.s32.totalorder %s214, %s217
      %p223 = scmp.eq.s32.totalorder %s25, 0
      %p224 = por %p222, %p223
      %p225 = scmp.ne.s32.totalorder %s214, %s217
      %p226 = scmp.eq.s32.totalorder %s30, 1
      %p227 = por %p225, %p226
      %p228 = scmp.ne.s32.totalorder %s217, %s218
      %p229 = scmp.eq.s32.totalorder %s30, 0
      %p230 = por %p228, %p229
      %p231 = scmp.ne.s32.totalorder %s217, %s218
      %p232 = scmp.eq.s32.totalorder %s31, 1
      %p233 = por %p231, %p232
      %p235 = scmp.ne.s32.totalorder %s218, %s234
      %p236 = scmp.eq.s32.totalorder %s31, 0
      %p237 = por %p235, %p236
      %s238 = ssub.s32 %s33, %s40
      %p239 = scmp.eq.s32.totalorder %s238, 0
      %s241 = sadd.s32 %s240, 1
      %s242 = scalar_select %p239, %s240, %s241
      %p245 = pneg %p239
      %p246 = scmp.eq.s32.totalorder %s25, 1
      %p247 = por %p245, %p246
      %p248 = scmp.ne.s32.totalorder %s240, %s243
      %p249 = scmp.eq.s32.totalorder %s25, 0
      %p250 = por %p248, %p249
      %p251 = scmp.ne.s32.totalorder %s240, %s243
      %p252 = scmp.eq.s32.totalorder %s30, 1
      %p253 = por %p251, %p252
      %p254 = scmp.ne.s32.totalorder %s243, %s244
      %p255 = scmp.eq.s32.totalorder %s30, 0
      %p256 = por %p254, %p255
      %p257 = scmp.ne.s32.totalorder %s243, %s244
      %p258 = scmp.eq.s32.totalorder %s31, 1
      %p259 = por %p257, %p258
      %p261 = scmp.ne.s32.totalorder %s244, %s260
      %p262 = scmp.eq.s32.totalorder %s31, 0
      %p263 = por %p261, %p262
      %s264 = ssub.s32 %s33, %s40
      %p265 = scmp.eq.s32.totalorder %s264, 0
      %s267 = sadd.s32 %s266, 1
      %s268 = scalar_select %p265, %s266, %s267
      %p271 = pneg %p265
      %p272 = scmp.eq.s32.totalorder %s25, 1
      %p273 = por %p271, %p272
      %p274 = scmp.ne.s32.totalorder %s266, %s269
      %p275 = scmp.eq.s32.totalorder %s25, 0
      %p276 = por %p274, %p275
      %p277 = scmp.ne.s32.totalorder %s266, %s269
      %p278 = scmp.eq.s32.totalorder %s30, 1
      %p279 = por %p277, %p278
      %p280 = scmp.ne.s32.totalorder %s269, %s270
      %p281 = scmp.eq.s32.totalorder %s30, 0
      %p282 = por %p280, %p281
      %p283 = scmp.ne.s32.totalorder %s269, %s270
      %p284 = scmp.eq.s32.totalorder %s31, 1
      %p285 = por %p283, %p284
      %p287 = scmp.ne.s32.totalorder %s270, %s286
      %p288 = scmp.eq.s32.totalorder %s31, 0
      %p289 = por %p287, %p288
      %s290 = ssub.s32 %s33, %s40
      %p291 = scmp.eq.s32.totalorder %s290, 0
      %s293 = sadd.s32 %s292, 1
      %s294 = scalar_select %p291, %s292, %s293
      %p297 = pneg %p291
      %p298 = scmp.eq.s32.totalorder %s25, 1
      %p299 = por %p297, %p298
      %p300 = scmp.ne.s32.totalorder %s292, %s295
      %p301 = scmp.eq.s32.totalorder %s25, 0
      %p302 = por %p300, %p301
      %p303 = scmp.ne.s32.totalorder %s292, %s295
      %p304 = scmp.eq.s32.totalorder %s30, 1
      %p305 = por %p303, %p304
      %p306 = scmp.ne.s32.totalorder %s295, %s296
      %p307 = scmp.eq.s32.totalorder %s30, 0
      %p308 = por %p306, %p307
      %p309 = scmp.ne.s32.totalorder %s295, %s296
      %p310 = scmp.eq.s32.totalorder %s31, 1
      %p311 = por %p309, %p310
      %p313 = scmp.ne.s32.totalorder %s296, %s312
      %p314 = scmp.eq.s32.totalorder %s31, 0
      %p315 = por %p313, %p314
      %s316 = ssub.s32 %s33, %s40
      %p317 = scmp.eq.s32.totalorder %s316, 0
      %s319 = sadd.s32 %s318, 1
      %s320 = scalar_select %p317, %s318, %s319
      %p323 = pneg %p317
      %p324 = scmp.eq.s32.totalorder %s25, 1
      %p325 = por %p323, %p324
      %p326 = scmp.ne.s32.totalorder %s318, %s321
      %p327 = scmp.eq.s32.totalorder %s25, 0
      %p328 = por %p326, %p327
      %p329 = scmp.ne.s32.totalorder %s318, %s321
      %p330 = scmp.eq.s32.totalorder %s30, 1
      %p331 = por %p329, %p330
      %p332 = scmp.ne.s32.totalorder %s321, %s322
      %p333 = scmp.eq.s32.totalorder %s30, 0
      %p334 = por %p332, %p333
      %p335 = scmp.ne.s32.totalorder %s321, %s322
      %p336 = scmp.eq.s32.totalorder %s31, 1
      %p337 = por %p335, %p336
      %p339 = scmp.ne.s32.totalorder %s322, %s338
      %p340 = scmp.eq.s32.totalorder %s31, 0
      %p341 = por %p339, %p340
      %s342 = ssub.s32 %s33, %s40
      %p343 = scmp.eq.s32.totalorder %s342, 0
      %s345 = sadd.s32 %s344, 1
      %s346 = scalar_select %p343, %s344, %s345
      %p349 = pneg %p343
      %p350 = scmp.eq.s32.totalorder %s25, 1
      %p351 = por %p349, %p350
      %p352 = scmp.ne.s32.totalorder %s344, %s347
      %p353 = scmp.eq.s32.totalorder %s25, 0
      %p354 = por %p352, %p353
      %p355 = scmp.ne.s32.totalorder %s344, %s347
      %p356 = scmp.eq.s32.totalorder %s30, 1
      %p357 = por %p355, %p356
      %p358 = scmp.ne.s32.totalorder %s347, %s348
      %p359 = scmp.eq.s32.totalorder %s30, 0
      %p360 = por %p358, %p359
      %p361 = scmp.ne.s32.totalorder %s347, %s348
      %p362 = scmp.eq.s32.totalorder %s31, 1
      %p363 = por %p361, %p362
      %p365 = scmp.ne.s32.totalorder %s348, %s364
      %p366 = scmp.eq.s32.totalorder %s31, 0
      %p367 = por %p365, %p366
      %s368 = ssub.s32 %s33, %s40
      %p369 = scmp.eq.s32.totalorder %s368, 0
      %s371 = sadd.s32 %s370, 1
      %s372 = scalar_select %p369, %s370, %s371
      %p375 = pneg %p369
      %p376 = scmp.eq.s32.totalorder %s25, 1
      %p377 = por %p375, %p376
      %p378 = scmp.ne.s32.totalorder %s370, %s373
      %p379 = scmp.eq.s32.totalorder %s25, 0
      %p380 = por %p378, %p379
      %p381 = scmp.ne.s32.totalorder %s370, %s373
      %p382 = scmp.eq.s32.totalorder %s30, 1
      %p383 = por %p381, %p382
      %p384 = scmp.ne.s32.totalorder %s373, %s374
      %p385 = scmp.eq.s32.totalorder %s30, 0
      %p386 = por %p384, %p385
      %p387 = scmp.ne.s32.totalorder %s373, %s374
      %p388 = scmp.eq.s32.totalorder %s31, 1
      %p389 = por %p387, %p388
      %p391 = scmp.ne.s32.totalorder %s374, %s390
      %p392 = scmp.eq.s32.totalorder %s31, 0
      %p393 = por %p391, %p392
      %s394 = ssub.s32 %s33, %s40
      %p395 = scmp.eq.s32.totalorder %s394, 0
      %s397 = sadd.s32 %s396, 1
      %s398 = scalar_select %p395, %s396, %s397
      %p401 = pneg %p395
      %p402 = scmp.eq.s32.totalorder %s25, 1
      %p403 = por %p401, %p402
      %p404 = scmp.ne.s32.totalorder %s396, %s399
      %p405 = scmp.eq.s32.totalorder %s25, 0
      %p406 = por %p404, %p405
      %p407 = scmp.ne.s32.totalorder %s396, %s399
      %p408 = scmp.eq.s32.totalorder %s30, 1
      %p409 = por %p407, %p408
      %p410 = scmp.ne.s32.totalorder %s399, %s400
      %p411 = scmp.eq.s32.totalorder %s30, 0
      %p412 = por %p410, %p411
      %p413 = scmp.ne.s32.totalorder %s399, %s400
      %p414 = scmp.eq.s32.totalorder %s31, 1
      %p415 = por %p413, %p414
      %p417 = scmp.ne.s32.totalorder %s400, %s416
      %p418 = scmp.eq.s32.totalorder %s31, 0
      %p419 = por %p417, %p418
      %s420 = ssub.s32 %s33, %s40
      %p421 = scmp.eq.s32.totalorder %s420, 0
      %s423 = sadd.s32 %s422, 1
      %s424 = scalar_select %p421, %s422, %s423
      %p427 = pneg %p421
      %p428 = scmp.eq.s32.totalorder %s25, 1
      %p429 = por %p427, %p428
      %p430 = scmp.ne.s32.totalorder %s422, %s425
      %p431 = scmp.eq.s32.totalorder %s25, 0
      %p432 = por %p430, %p431
      %p433 = scmp.ne.s32.totalorder %s422, %s425
      %p434 = scmp.eq.s32.totalorder %s30, 1
      %p435 = por %p433, %p434
      %p436 = scmp.ne.s32.totalorder %s425, %s426
      %p437 = scmp.eq.s32.totalorder %s30, 0
      %p438 = por %p436, %p437
      %p439 = scmp.ne.s32.totalorder %s425, %s426
      %p440 = scmp.eq.s32.totalorder %s31, 1
      %p441 = por %p439, %p440
      %p443 = scmp.ne.s32.totalorder %s426, %s442
      %p444 = scmp.eq.s32.totalorder %s31, 0
      %p445 = por %p443, %p444
      %s447 = sadd.s32 %s446, 1
      %p450 = scmp.eq.s32.totalorder %s25, 1
      %p451 = scmp.ne.s32.totalorder %s446, %s448
      %p452 = scmp.eq.s32.totalorder %s25, 0
      %p453 = por %p451, %p452
      %p454 = scmp.ne.s32.totalorder %s446, %s448
      %p455 = scmp.eq.s32.totalorder %s30, 1
      %p456 = por %p454, %p455
      %p457 = scmp.ne.s32.totalorder %s448, %s449
      %p458 = scmp.eq.s32.totalorder %s30, 0
      %p459 = por %p457, %p458
      %p460 = scmp.ne.s32.totalorder %s448, %s449
      %p461 = scmp.eq.s32.totalorder %s31, 1
      %p462 = por %p460, %p461
      %p464 = scmp.ne.s32.totalorder %s449, %s463
      %p465 = scmp.eq.s32.totalorder %s31, 0
      %p466 = por %p464, %p465
      %s468 = sadd.s32 %s467, 1
      %p471 = scmp.eq.s32.totalorder %s25, 1
      %p472 = scmp.ne.s32.totalorder %s467, %s469
      %p473 = scmp.eq.s32.totalorder %s25, 0
      %p474 = por %p472, %p473
      %p475 = scmp.ne.s32.totalorder %s467, %s469
      %p476 = scmp.eq.s32.totalorder %s30, 1
      %p477 = por %p475, %p476
      %p478 = scmp.ne.s32.totalorder %s469, %s470
      %p479 = scmp.eq.s32.totalorder %s30, 0
      %p480 = por %p478, %p479
      %p481 = scmp.ne.s32.totalorder %s469, %s470
      %p482 = scmp.eq.s32.totalorder %s31, 1
      %p483 = por %p481, %p482
      %p485 = scmp.ne.s32.totalorder %s470, %s484
      %p486 = scmp.eq.s32.totalorder %s31, 0
      %p487 = por %p485, %p486
      %s488 = ssub.s32 %s32, %s44
      %p489 = scmp.eq.s32.totalorder %s488, 0
      %s491 = sadd.s32 %s490, 1
      %s492 = scalar_select %p489, %s490, %s491
      %p495 = pneg %p489
      %p496 = scmp.eq.s32.totalorder %s25, 1
      %p497 = por %p495, %p496
      %p498 = scmp.ne.s32.totalorder %s490, %s493
      %p499 = scmp.eq.s32.totalorder %s25, 0
      %p500 = por %p498, %p499
      %p501 = scmp.ne.s32.totalorder %s490, %s493
      %p502 = scmp.eq.s32.totalorder %s30, 1
      %p503 = por %p501, %p502
      %p504 = scmp.ne.s32.totalorder %s493, %s494
      %p505 = scmp.eq.s32.totalorder %s30, 0
      %p506 = por %p504, %p505
      %p507 = scmp.ne.s32.totalorder %s493, %s494
      %p508 = scmp.eq.s32.totalorder %s31, 1
      %p509 = por %p507, %p508
      %p511 = scmp.ne.s32.totalorder %s494, %s510
      %p512 = scmp.eq.s32.totalorder %s31, 0
      %p513 = por %p511, %p512
      %p514 = scmp.le.s32.totalorder 1, %s25
      %p515 = scmp.lt.s32.totalorder %s25, 3
      %p516 = pnand %p514, %p515
      %p517 = pneg %p516
      // Predicated region
      $region9: #{vit_forward.1} parent=5 // pred_check
        _
      $region10: #{vit_forward.1} parent=5 // pred_check_branch
        %519 = sbr.rel (%p516) target = $region12
      $region11: #{vit_forward.1} parent=5 // pred_region
        %s520 = ssub.s32 %s25, 1
        // Predicated region
        $region13: #{vit_forward.1} parent=11 // pred_check
          %p521 = pneg %p63
        $region14: #{vit_forward.1} parent=11 // pred_check_branch
          %523 = sbr.rel (%p521) target = $region16
        $region15: #{vit_forward.1} parent=11 // pred_region
          %p524 = scmp.lt.s32.totalorder %s34, 0
          %s525 = scalar_select %p524, %s34, 0
          %s526 = smul.addr %s525, 16
          %s527 = smul.addr %s526, 8
          %s528 = scalar_lea.vmem %s0, %s527
        $region16: #{vit_forward.1} parent=11 // pred_fallthru
          _
        // Predicated region
        $region17: #{vit_forward.1} parent=11 // pred_check
          %p529 = pneg %p84
        $region18: #{vit_forward.1} parent=11 // pred_check_branch
          %531 = sbr.rel (%p529) target = $region20
        $region19: #{vit_forward.1} parent=11 // pred_region
          _
        $region20: #{vit_forward.1} parent=11 // pred_fallthru
          _
        // Predicated region
        $region21: #{vit_forward.1} parent=11 // pred_check
          %p532 = pneg %p105
        $region22: #{vit_forward.1} parent=11 // pred_check_branch
          %534 = sbr.rel (%p532) target = $region24
        $region23: #{vit_forward.1} parent=11 // pred_region
          _
        $region24: #{vit_forward.1} parent=11 // pred_fallthru
          _
        // Predicated region
        $region25: #{vit_forward.1} parent=11 // pred_check
          %p535 = pneg %p126
        $region26: #{vit_forward.1} parent=11 // pred_check_branch
          %537 = sbr.rel (%p535) target = $region28
        $region27: #{vit_forward.1} parent=11 // pred_region
          _
        $region28: #{vit_forward.1} parent=11 // pred_fallthru
          _
        // Predicated region
        $region29: #{vit_forward.1} parent=11 // pred_check
          %p538 = pneg %p459
        $region30: #{vit_forward.1} parent=11 // pred_check_branch
          %540 = sbr.rel (%p538) target = $region32
        $region31: #{vit_forward.1} parent=11 // pred_region
          _
        $region32: #{vit_forward.1} parent=11 // pred_fallthru
          _
        // Predicated region
        $region33: #{vit_forward.1} parent=11 // pred_check
          %p541 = pneg %p480
        $region34: #{vit_forward.1} parent=11 // pred_check_branch
          %543 = sbr.rel (%p541) target = $region36
        $region35: #{vit_forward.1} parent=11 // pred_region
          _
        $region36: #{vit_forward.1} parent=11 // pred_fallthru
          _
      $region12: #{vit_forward.1} parent=5 // pred_fallthru
        _
      %p544 = scmp.lt.s32.totalorder %s25, 2
      // Predicated region
      $region37: #{vit_forward.1} parent=5 // pred_check
        %p545 = pneg %p544
      $region38: #{vit_forward.1} parent=5 // pred_check_branch
        %547 = sbr.rel (%p545) target = $region40
      $region39: #{vit_forward.1} parent=5 // pred_region
        // Predicated region
        $region41: #{vit_forward.1} parent=39 // pred_check
          %p548 = pneg %p146
        $region42: #{vit_forward.1} parent=39 // pred_check_branch
          %550 = sbr.rel (%p548) target = $region44
        $region43: #{vit_forward.1} parent=39 // pred_region
          %p551 = scmp.lt.s32.totalorder %s33, 1
          %s552 = scalar_select %p551, %s33, 1
          %s553 = scalar_lea.vmem %s4, %s552
        $region44: #{vit_forward.1} parent=39 // pred_fallthru
          _
        // Predicated region
        $region45: #{vit_forward.1} parent=39 // pred_check
          %p554 = pneg %p172
        $region46: #{vit_forward.1} parent=39 // pred_check_branch
          %556 = sbr.rel (%p554) target = $region48
        $region47: #{vit_forward.1} parent=39 // pred_region
          %p557 = scmp.lt.s32.totalorder %s33, 1
          %s558 = scalar_select %p557, %s33, 1
          %s559 = scalar_lea.vmem %s5, %s558
        $region48: #{vit_forward.1} parent=39 // pred_fallthru
          _
        // Predicated region
        $region49: #{vit_forward.1} parent=39 // pred_check
          %p560 = pneg %p198
        $region50: #{vit_forward.1} parent=39 // pred_check_branch
          %562 = sbr.rel (%p560) target = $region52
        $region51: #{vit_forward.1} parent=39 // pred_region
          %p563 = scmp.lt.s32.totalorder %s33, 1
          %s564 = scalar_select %p563, %s33, 1
          %s565 = smul.addr %s564, 16
          %s566 = smul.addr %s565, 8
          %s567 = scalar_lea.vmem %s6, %s566
        $region52: #{vit_forward.1} parent=39 // pred_fallthru
          _
        // Predicated region
        $region53: #{vit_forward.1} parent=39 // pred_check
          %p568 = pneg %p224
        $region54: #{vit_forward.1} parent=39 // pred_check_branch
          %570 = sbr.rel (%p568) target = $region56
        $region55: #{vit_forward.1} parent=39 // pred_region
          %p571 = scmp.lt.s32.totalorder %s33, 1
          %s572 = scalar_select %p571, %s33, 1
          %s573 = smul.addr %s572, 2
          %s574 = scalar_lea.vmem %s7, %s573
        $region56: #{vit_forward.1} parent=39 // pred_fallthru
          _
        // Predicated region
        $region57: #{vit_forward.1} parent=39 // pred_check
          %p575 = pneg %p250
        $region58: #{vit_forward.1} parent=39 // pred_check_branch
          %577 = sbr.rel (%p575) target = $region60
        $region59: #{vit_forward.1} parent=39 // pred_region
          %p578 = scmp.lt.s32.totalorder %s33, 1
          %s579 = scalar_select %p578, %s33, 1
          %s580 = smul.addr %s579, 8
          %s581 = smul.addr %s580, 8
          %s582 = scalar_lea.vmem %s8, %s581
        $region60: #{vit_forward.1} parent=39 // pred_fallthru
          _
        // Predicated region
        $region61: #{vit_forward.1} parent=39 // pred_check
          %p583 = pneg %p276
        $region62: #{vit_forward.1} parent=39 // pred_check_branch
          %585 = sbr.rel (%p583) target = $region64
        $region63: #{vit_forward.1} parent=39 // pred_region
          %p586 = scmp.lt.s32.totalorder %s33, 1
          %s587 = scalar_select %p586, %s33, 1
          %s588 = scalar_lea.vmem %s9, %s587
        $region64: #{vit_forward.1} parent=39 // pred_fallthru
          _
        // Predicated region
        $region65: #{vit_forward.1} parent=39 // pred_check
          %p589 = pneg %p302
        $region66: #{vit_forward.1} parent=39 // pred_check_branch
          %591 = sbr.rel (%p589) target = $region68
        $region67: #{vit_forward.1} parent=39 // pred_region
          %p592 = scmp.lt.s32.totalorder %s33, 1
          %s593 = scalar_select %p592, %s33, 1
          %s594 = scalar_lea.vmem %s10, %s593
        $region68: #{vit_forward.1} parent=39 // pred_fallthru
          _
        // Predicated region
        $region69: #{vit_forward.1} parent=39 // pred_check
          %p595 = pneg %p328
        $region70: #{vit_forward.1} parent=39 // pred_check_branch
          %597 = sbr.rel (%p595) target = $region72
        $region71: #{vit_forward.1} parent=39 // pred_region
          %p598 = scmp.lt.s32.totalorder %s33, 1
          %s599 = scalar_select %p598, %s33, 1
          %s600 = scalar_lea.vmem %s11, %s599
        $region72: #{vit_forward.1} parent=39 // pred_fallthru
          _
        // Predicated region
        $region73: #{vit_forward.1} parent=39 // pred_check
          %p601 = pneg %p354
        $region74: #{vit_forward.1} parent=39 // pred_check_branch
          %603 = sbr.rel (%p601) target = $region76
        $region75: #{vit_forward.1} parent=39 // pred_region
          %p604 = scmp.lt.s32.totalorder %s33, 1
          %s605 = scalar_select %p604, %s33, 1
          %s606 = smul.addr %s605, 16
          %s607 = smul.addr %s606, 8
          %s608 = scalar_lea.vmem %s12, %s607
        $region76: #{vit_forward.1} parent=39 // pred_fallthru
          _
        // Predicated region
        $region77: #{vit_forward.1} parent=39 // pred_check
          %p609 = pneg %p380
        $region78: #{vit_forward.1} parent=39 // pred_check_branch
          %611 = sbr.rel (%p609) target = $region80
        $region79: #{vit_forward.1} parent=39 // pred_region
          %p612 = scmp.lt.s32.totalorder %s33, 1
          %s613 = scalar_select %p612, %s33, 1
          %s614 = smul.addr %s613, 2
          %s615 = scalar_lea.vmem %s13, %s614
        $region80: #{vit_forward.1} parent=39 // pred_fallthru
          _
        // Predicated region
        $region81: #{vit_forward.1} parent=39 // pred_check
          %p616 = pneg %p406
        $region82: #{vit_forward.1} parent=39 // pred_check_branch
          %618 = sbr.rel (%p616) target = $region84
        $region83: #{vit_forward.1} parent=39 // pred_region
          %p619 = scmp.lt.s32.totalorder %s33, 1
          %s620 = scalar_select %p619, %s33, 1
          %s621 = smul.addr %s620, 32
          %s622 = smul.addr %s621, 8
          %s623 = scalar_lea.vmem %s14, %s622
        $region84: #{vit_forward.1} parent=39 // pred_fallthru
          _
        // Predicated region
        $region85: #{vit_forward.1} parent=39 // pred_check
          %p624 = pneg %p432
        $region86: #{vit_forward.1} parent=39 // pred_check_branch
          %626 = sbr.rel (%p624) target = $region88
        $region87: #{vit_forward.1} parent=39 // pred_region
          %p627 = scmp.lt.s32.totalorder %s33, 1
          %s628 = scalar_select %p627, %s33, 1
          %s629 = scalar_lea.vmem %s15, %s628
        $region88: #{vit_forward.1} parent=39 // pred_fallthru
          _
      $region40: #{vit_forward.1} parent=5 // pred_fallthru
        _
      %p630 = scmp.le.s32.totalorder 1, %s25
      %p631 = scmp.lt.s32.totalorder %s25, 3
      %p632 = pnand %p630, %p631
      %p633 = pneg %p632
      // Predicated region
      $region89: #{vit_forward.1} parent=5 // pred_check
        _
      $region90: #{vit_forward.1} parent=5 // pred_check_branch
        %635 = sbr.rel (%p632) target = $region92
      $region91: #{vit_forward.1} parent=5 // pred_region
        %s636 = ssub.s32 %s25, 1
        %p637 = scmp.lt.s32.totalorder %s34, 0
        %s638 = scalar_select %p637, %s34, 0
        %s639 = smul.addr %s638, 16
        %s640 = smul.addr %s639, 8
        %s641 = scalar_lea.vmem %s0, %s640
        %p642 = pneg %p63
        %p643 = pneg %p60
        %p644 = pneg %p84
        %p645 = pneg %p81
        %p646 = pneg %p105
        %p647 = pneg %p102
        %p648 = pneg %p126
        %p649 = pneg %p123
        %p650 = scmp.lt.s32.totalorder %s35, 1
        %s651 = scalar_select %p650, %s35, 1
        %s652 = scalar_lea.vmem %s4, %s651
        %p653 = pneg %p152
        %p654 = pneg %p149
        %p655 = scmp.lt.s32.totalorder %s35, 1
        %s656 = scalar_select %p655, %s35, 1
        %s657 = scalar_lea.vmem %s5, %s656
        %p658 = pneg %p178
        %p659 = pneg %p175
        %p660 = scmp.lt.s32.totalorder %s35, 1
        %s661 = scalar_select %p660, %s35, 1
        %s662 = smul.addr %s661, 16
        %s663 = smul.addr %s662, 8
        %s664 = scalar_lea.vmem %s6, %s663
        %p665 = pneg %p204
        %p666 = pneg %p201
        %p667 = scmp.lt.s32.totalorder %s35, 1
        %s668 = scalar_select %p667, %s35, 1
        %s669 = smul.addr %s668, 2
        %s670 = scalar_lea.vmem %s7, %s669
        %p671 = pneg %p230
        %p672 = pneg %p227
        %p673 = scmp.lt.s32.totalorder %s35, 1
        %s674 = scalar_select %p673, %s35, 1
        %s675 = smul.addr %s674, 8
        %s676 = smul.addr %s675, 8
        %s677 = scalar_lea.vmem %s8, %s676
        %p678 = pneg %p256
        %p679 = pneg %p253
        %p680 = scmp.lt.s32.totalorder %s35, 1
        %s681 = scalar_select %p680, %s35, 1
        %s682 = scalar_lea.vmem %s9, %s681
        %p683 = pneg %p282
        %p684 = pneg %p279
        %p685 = scmp.lt.s32.totalorder %s35, 1
        %s686 = scalar_select %p685, %s35, 1
        %s687 = scalar_lea.vmem %s10, %s686
        %p688 = pneg %p308
        %p689 = pneg %p305
        %p690 = scmp.lt.s32.totalorder %s35, 1
        %s691 = scalar_select %p690, %s35, 1
        %s692 = scalar_lea.vmem %s11, %s691
        %p693 = pneg %p334
        %p694 = pneg %p331
        %p695 = scmp.lt.s32.totalorder %s35, 1
        %s696 = scalar_select %p695, %s35, 1
        %s697 = smul.addr %s696, 16
        %s698 = smul.addr %s697, 8
        %s699 = scalar_lea.vmem %s12, %s698
        %p700 = pneg %p360
        %p701 = pneg %p357
        %p702 = scmp.lt.s32.totalorder %s35, 1
        %s703 = scalar_select %p702, %s35, 1
        %s704 = smul.addr %s703, 2
        %s705 = scalar_lea.vmem %s13, %s704
        %p706 = pneg %p386
        %p707 = pneg %p383
        %p708 = scmp.lt.s32.totalorder %s35, 1
        %s709 = scalar_select %p708, %s35, 1
        %s710 = smul.addr %s709, 32
        %s711 = smul.addr %s710, 8
        %s712 = scalar_lea.vmem %s14, %s711
        %p713 = pneg %p412
        %p714 = pneg %p409
        %p715 = scmp.lt.s32.totalorder %s35, 1
        %s716 = scalar_select %p715, %s35, 1
        %s717 = scalar_lea.vmem %s15, %s716
        %p718 = pneg %p438
        %p719 = pneg %p435
        %p720 = pneg %p459
        %p721 = pneg %p456
        %p722 = pneg %p480
        %p723 = pneg %p477
        %p724 = pneg %p506
        %p725 = pneg %p503
        %p726 = scmp.lt.s32.totalorder %s34, 0
        %s727 = scalar_select %p726, %s34, 0
        %s728 = smul.addr %s727, 16
        %s729 = smul.addr %s728, 8
        %s730 = scalar_lea.vmem %s0, %s729
        %p731 = scmp.lt.s32.totalorder %s35, 1
        %s732 = scalar_select %p731, %s35, 1
        %s733 = scalar_lea.vmem %s4, %s732
        %p734 = scmp.lt.s32.totalorder %s35, 1
        %s735 = scalar_select %p734, %s35, 1
        %s736 = scalar_lea.vmem %s5, %s735
        %p737 = scmp.lt.s32.totalorder %s35, 1
        %s738 = scalar_select %p737, %s35, 1
        %s739 = smul.addr %s738, 16
        %s740 = smul.addr %s739, 8
        %s741 = scalar_lea.vmem %s6, %s740
        %p742 = scmp.lt.s32.totalorder %s35, 1
        %s743 = scalar_select %p742, %s35, 1
        %s744 = smul.addr %s743, 2
        %s745 = scalar_lea.vmem %s7, %s744
        %p746 = scmp.lt.s32.totalorder %s35, 1
        %s747 = scalar_select %p746, %s35, 1
        %s748 = smul.addr %s747, 8
        %s749 = smul.addr %s748, 8
        %s750 = scalar_lea.vmem %s8, %s749
        %p751 = scmp.lt.s32.totalorder %s35, 1
        %s752 = scalar_select %p751, %s35, 1
        %s753 = scalar_lea.vmem %s9, %s752
        %p754 = scmp.lt.s32.totalorder %s35, 1
        %s755 = scalar_select %p754, %s35, 1
        %s756 = scalar_lea.vmem %s10, %s755
        %p757 = scmp.lt.s32.totalorder %s35, 1
        %s758 = scalar_select %p757, %s35, 1
        %s759 = scalar_lea.vmem %s11, %s758
        %p760 = scmp.lt.s32.totalorder %s35, 1
        %s761 = scalar_select %p760, %s35, 1
        %s762 = smul.addr %s761, 16
        %s763 = smul.addr %s762, 8
        %s764 = scalar_lea.vmem %s12, %s763
        %p765 = scmp.lt.s32.totalorder %s35, 1
        %s766 = scalar_select %p765, %s35, 1
        %s767 = smul.addr %s766, 2
        %s768 = scalar_lea.vmem %s13, %s767
        %p769 = scmp.lt.s32.totalorder %s35, 1
        %s770 = scalar_select %p769, %s35, 1
        %s771 = smul.addr %s770, 32
        %s772 = smul.addr %s771, 8
        %s773 = scalar_lea.vmem %s14, %s772
        %p774 = scmp.lt.s32.totalorder %s35, 1
        %s775 = scalar_select %p774, %s35, 1
        %s776 = scalar_lea.vmem %s15, %s775
        %p777 = scmp.eq.s32.totalorder %s35, 0
        // Predicated region
        $region93: #{vit_forward.1} parent=91 // pred_check
          %p778 = pneg %p777
        $region94: #{vit_forward.1} parent=91 // pred_check_branch
          %780 = sbr.rel (%p778) target = $region96
        $region95: #{vit_forward.1} parent=91 // pred_region
          %v781 = vld [vmem:[%s730] sm:$0xff]
          %v782 = vld [vmem:[%s730 + $0x8] sm:$0xff]
          %v783 = vld [vmem:[%s730 + $0x10] sm:$0xff]
          %v784 = vld [vmem:[%s730 + $0x18] sm:$0xff]
          %v785 = vld [vmem:[%s730 + $0x20] sm:$0xff]
          %v786 = vld [vmem:[%s730 + $0x28] sm:$0xff]
          %v787 = vld [vmem:[%s730 + $0x30] sm:$0xff]
          %v788 = vld [vmem:[%s730 + $0x38] sm:$0xff]
          %v789 = vld [vmem:[%s730 + $0x40] sm:$0xff]
          %v790 = vld [vmem:[%s730 + $0x48] sm:$0xff]
          %v791 = vld [vmem:[%s730 + $0x50] sm:$0xff]
          %v792 = vld [vmem:[%s730 + $0x58] sm:$0xff]
          %v793 = vld [vmem:[%s730 + $0x60] sm:$0xff]
          %v794 = vld [vmem:[%s730 + $0x68] sm:$0xff]
          %v795 = vld [vmem:[%s730 + $0x70] sm:$0xff]
          %v796 = vld [vmem:[%s730 + $0x78] sm:$0xff]
          %v797 = vld [vmem:[%s1] sm:$0xff]
          %v798 = vld [vmem:[%s1 + $0x8] sm:$0xff]
          %v799 = vld [vmem:[%s1 + $0x10] sm:$0xff]
          %v800 = vld [vmem:[%s1 + $0x18] sm:$0xff]
          %v801 = vld [vmem:[%s1 + $0x20] sm:$0xff]
          %v802 = vld [vmem:[%s1 + $0x28] sm:$0xff]
          %v803 = vld [vmem:[%s1 + $0x30] sm:$0xff]
          %v804 = vld [vmem:[%s1 + $0x38] sm:$0xff]
          %v805 = vld [vmem:[%s1 + $0x40] sm:$0xff]
          %v806 = vld [vmem:[%s1 + $0x48] sm:$0xff]
          %v807 = vld [vmem:[%s1 + $0x50] sm:$0xff]
          %v808 = vld [vmem:[%s1 + $0x58] sm:$0xff]
          %v809 = vld [vmem:[%s1 + $0x60] sm:$0xff]
          %v810 = vld [vmem:[%s1 + $0x68] sm:$0xff]
          %v811 = vld [vmem:[%s1 + $0x70] sm:$0xff]
          %v812 = vld [vmem:[%s1 + $0x78] sm:$0xff]
          %v813 = vld [vmem:[%s1 + $0x80] sm:$0xff]
          %v814 = vld [vmem:[%s1 + $0x88] sm:$0xff]
          %v815 = vld [vmem:[%s1 + $0x90] sm:$0xff]
          %v816 = vld [vmem:[%s1 + $0x98] sm:$0xff]
          %v817 = vld [vmem:[%s1 + $0xa0] sm:$0xff]
          %v818 = vld [vmem:[%s1 + $0xa8] sm:$0xff]
          %v819 = vld [vmem:[%s1 + $0xb0] sm:$0xff]
          %v820 = vld [vmem:[%s1 + $0xb8] sm:$0xff]
          %v821 = vld [vmem:[%s2] sm:$0xff]
          %v822 = vld [vmem:[%s2 + $0x8] sm:$0xff]
          %v823 = vld [vmem:[%s2 + $0x10] sm:$0xff]
          %v824 = vld [vmem:[%s2 + $0x18] sm:$0xff]
          %v825 = vld [vmem:[%s2 + $0x20] sm:$0xff]
          %v826 = vld [vmem:[%s2 + $0x28] sm:$0xff]
          %v827 = vld [vmem:[%s2 + $0x30] sm:$0xff]
          %v828 = vld [vmem:[%s2 + $0x38] sm:$0xff]
          %vm829 = vcmask 523264
          %v831 = vsel %vm829, %v782, 0
          %v834 = vsel %vm829, %v784, 0
          %v837 = vsel %vm829, %v786, 0
          %v840 = vsel %vm829, %v788, 0
          %v843 = vsel %vm829, %v790, 0
          %v846 = vsel %vm829, %v792, 0
          %v849 = vsel %vm829, %v794, 0
          %v852 = vsel %vm829, %v796, 0
          %854 = vmatprep.subr.mxu0 0.0
          %855 = vmatpush1.msra.mxu0 %v797
          %856 = vmatprep.subr.mxu0 0.0
          %857 = vmatpush1.msra.mxu0 %v798
          %858 = vmatprep.subr.mxu0 0.0
          %859 = vmatpush1.msra.mxu0 %v799
          %860 = vmatprep.subr.mxu0 0.0
          %861 = vmatpush1.msra.mxu0 %v800
          %862 = vmatprep.subr.mxu0 0.0
          %863 = vmatpush1.msra.mxu0 %v801
          %864 = vmatprep.subr.mxu0 0.0
          %865 = vmatpush1.msra.mxu0 %v802
          %866 = vmatprep.subr.mxu0 0.0
          %867 = vmatpush1.msra.mxu0 %v803
          %868 = vmatprep.subr.mxu0 0.0
          %869 = vmatpush1.msra.mxu0 %v804
          %870 = vmatprep.subr.mxu0 0.0
          %871 = vmatpush1.msra.mxu0 %v805
          %872 = vmatprep.subr.mxu0 0.0
          %873 = vmatpush1.msra.mxu0 %v806
          %874 = vmatprep.subr.mxu0 0.0
          %875 = vmatpush1.msra.mxu0 %v807
          %876 = vmatprep.subr.mxu0 0.0
          %877 = vmatpush1.msra.mxu0 %v808
          %878 = vmatprep.subr.mxu0 0.0
          %879 = vmatpush1.msra.mxu0 %v809
          %880 = vmatprep.subr.mxu0 0.0
          %881 = vmatpush1.msra.mxu0 %v810
          %882 = vmatprep.subr.mxu0 0.0
          %883 = vmatpush1.msra.mxu0 %v811
          %884 = vmatprep.subr.mxu0 0.0
          %885 = vmatpush1.msra.mxu0 %v812
          %886 = vmatprep.subr.mxu0 0.0
          %887 = vmatpush1.msra.mxu0 %v813
          %888 = vmatprep.subr.mxu0 0.0
          %889 = vmatpush1.msra.mxu0 %v814
          %890 = vmatprep.subr.mxu0 0.0
          %891 = vmatpush1.msra.mxu0 %v815
          %892 = vmatprep.subr.mxu0 0.0
          %893 = vmatpush1.msra.mxu0 %v816
          %894 = vmatprep.subr.mxu0 0.0
          %895 = vmatpush1.msra.mxu0 %v817
          %896 = vmatprep.subr.mxu0 0.0
          %897 = vmatpush1.msra.mxu0 %v818
          %898 = vmatprep.subr.mxu0 0.0
          %899 = vmatpush1.msra.mxu0 %v819
          %900 = vmatprep.subr.mxu0 0.0
          %901 = vmatpush1.msra.mxu0 %v820
          %902 = vmatprep.subr.mxu0 0.0
          %903 = vmatpush1.msra.mxu0 0.0
          %904 = vmatprep.subr.mxu0 0.0
          %905 = vmatpush1.msra.mxu0 0.0
          %906 = vmatprep.subr.mxu0 0.0
          %907 = vmatpush1.msra.mxu0 0.0
          %908 = vmatprep.subr.mxu0 0.0
          %909 = vmatpush1.msra.mxu0 0.0
          %910 = vmatprep.subr.mxu0 0.0
          %911 = vmatpush1.msra.mxu0 0.0
          %912 = vmatprep.subr.mxu0 0.0
          %913 = vmatpush1.msra.mxu0 0.0
          %914 = vmatprep.subr.mxu0 0.0
          %915 = vmatpush1.msra.mxu0 0.0
          %916 = vmatprep.subr.mxu0 0.0
          %917 = vmatpush1.msra.mxu0 0.0
          %918 = vmatprep.mubr.f32.mxu0 %v831
          %919 = vmatmul.mubr.f32.gmra.mrb[0].mxu0 %v781
          %v920 = vpop.f32.mrb[0].mxu0
          %v921 = vadd.f32 %v821, %v920
          %v922 = vpop.f32.mrb[0].mxu0
          %923 = vmatprep.mubr.f32.mxu0 %v834
          %924 = vmatmul.mubr.f32.gmra.mrb[0].mxu0 %v783
          %v925 = vpop.f32.mrb[0].mxu0
          %v926 = vadd.f32 %v822, %v925
          %v927 = vpop.f32.mrb[0].mxu0
          %928 = vmatprep.mubr.f32.mxu0 %v837
          %929 = vmatmul.mubr.f32.gmra.mrb[0].mxu0 %v785
          %v930 = vpop.f32.mrb[0].mxu0
          %v931 = vadd.f32 %v823, %v930
          %v932 = vpop.f32.mrb[0].mxu0
          %933 = vmatprep.mubr.f32.mxu0 %v840
          %934 = vmatmul.mubr.f32.gmra.mrb[0].mxu0 %v787
          %v935 = vpop.f32.mrb[0].mxu0
          %v936 = vadd.f32 %v824, %v935
          %v937 = vpop.f32.mrb[0].mxu0
          %938 = vmatprep.mubr.f32.mxu0 %v843
          %939 = vmatmul.mubr.f32.gmra.mrb[0].mxu0 %v789
          %v940 = vpop.f32.mrb[0].mxu0
          %v941 = vadd.f32 %v825, %v940
          %v942 = vpop.f32.mrb[0].mxu0
          %943 = vmatprep.mubr.f32.mxu0 %v846
          %944 = vmatmul.mubr.f32.gmra.mrb[0].mxu0 %v791
          %v945 = vpop.f32.mrb[0].mxu0
          %v946 = vadd.f32 %v826, %v945
          %v947 = vpop.f32.mrb[0].mxu0
          %948 = vmatprep.mubr.f32.mxu0 %v849
          %949 = vmatmul.mubr.f32.gmra.mrb[0].mxu0 %v793
          %v950 = vpop.f32.mrb[0].mxu0
          %v951 = vadd.f32 %v827, %v950
          %v952 = vpop.f32.mrb[0].mxu0
          %953 = vmatprep.mubr.f32.mxu0 %v852
          %954 = vmatmul.mubr.f32.gmra.mrb[0].mxu0 %v795
          %v955 = vpop.f32.mrb[0].mxu0
          %v956 = vadd.f32 %v828, %v955
          %v957 = vpop.f32.mrb[0].mxu0
          %958 = vdwg.mxu0
          %959 = vst.msk [vmem:[#allocation2] sm:$0xff] %vm829, %v921
          %960 = vst.msk [vmem:[#allocation2 + $0x8] sm:$0xff] %vm829, %v926
          %961 = vst.msk [vmem:[#allocation2 + $0x10] sm:$0xff] %vm829, %v931
          %962 = vst.msk [vmem:[#allocation2 + $0x18] sm:$0xff] %vm829, %v936
          %963 = vst.msk [vmem:[#allocation2 + $0x20] sm:$0xff] %vm829, %v941
          %964 = vst.msk [vmem:[#allocation2 + $0x28] sm:$0xff] %vm829, %v946
          %965 = vst.msk [vmem:[#allocation2 + $0x30] sm:$0xff] %vm829, %v951
          %966 = vst.msk [vmem:[#allocation2 + $0x38] sm:$0xff] %vm829, %v956
        $region96: #{vit_forward.1} parent=91 // pred_fallthru
          _
        %v967 = vld [vmem:[#allocation2] sm:$0xff]
        %v968 = vld [vmem:[#allocation2 + $0x8] sm:$0xff]
        %v969 = vld [vmem:[#allocation2 + $0x10] sm:$0xff]
        %v970 = vld [vmem:[#allocation2 + $0x18] sm:$0xff]
        %v971 = vld [vmem:[#allocation2 + $0x20] sm:$0xff]
        %v972 = vld [vmem:[#allocation2 + $0x28] sm:$0xff]
        %v973 = vld [vmem:[#allocation2 + $0x30] sm:$0xff]
        %v974 = vld [vmem:[#allocation2 + $0x38] sm:$0xff]
        %v975 = vld [vmem:[%s733] sm:$0x1]
        %v976 = vld [vmem:[%s736] sm:$0x1]
        %vm977 = vcmask 523264
        %v978 = vsel %vm977, %v967, 0.0
        %979 = vadd.xlane.f32.xlu0 %v978
        %v980 = vpop.xlane.xlu0 %979
        %v981 = vsel %vm977, %v968, 0.0
        %982 = vadd.xlane.f32.xlu0 %v981
        %v983 = vpop.xlane.xlu0 %982
        %v984 = vsel %vm977, %v969, 0.0
        %985 = vadd.xlane.f32.xlu0 %v984
        %v986 = vpop.xlane.xlu0 %985
        %v987 = vsel %vm977, %v970, 0.0
        %988 = vadd.xlane.f32.xlu0 %v987
        %v989 = vpop.xlane.xlu0 %988
        %v990 = vsel %vm977, %v971, 0.0
        %991 = vadd.xlane.f32.xlu0 %v990
        %v992 = vpop.xlane.xlu0 %991
        %v993 = vsel %vm977, %v972, 0.0
        %994 = vadd.xlane.f32.xlu0 %v993
        %v995 = vpop.xlane.xlu0 %994
        %v996 = vsel %vm977, %v973, 0.0
        %997 = vadd.xlane.f32.xlu0 %v996
        %v998 = vpop.xlane.xlu0 %997
        %v999 = vsel %vm977, %v974, 0.0
        %1000 = vadd.xlane.f32.xlu0 %v999
        %v1001 = vpop.xlane.xlu0 %1000
        %v1002 = vrcp.pop 64.0
        %v1003 = vmul.f32 %v980, %v1002
        %v1004 = vmul.f32 %v983, %v1002
        %v1005 = vmul.f32 %v986, %v1002
        %v1006 = vmul.f32 %v989, %v1002
        %v1007 = vmul.f32 %v992, %v1002
        %v1008 = vmul.f32 %v995, %v1002
        %v1009 = vmul.f32 %v998, %v1002
        %v1010 = vmul.f32 %v1001, %v1002
        %v1011 = vsub.f32 %v967, %v1003
        %v1012 = vsub.f32 %v968, %v1004
        %v1013 = vsub.f32 %v969, %v1005
        %v1014 = vsub.f32 %v970, %v1006
        %v1015 = vsub.f32 %v971, %v1007
        %v1016 = vsub.f32 %v972, %v1008
        %v1017 = vsub.f32 %v973, %v1009
        %v1018 = vsub.f32 %v974, %v1010
        %v1019 = vmul.f32 %v1011, %v1011
        %v1020 = vmul.f32 %v1012, %v1012
        %v1021 = vmul.f32 %v1013, %v1013
        %v1022 = vmul.f32 %v1014, %v1014
        %v1023 = vmul.f32 %v1015, %v1015
        %v1024 = vmul.f32 %v1016, %v1016
        %v1025 = vmul.f32 %v1017, %v1017
        %v1026 = vmul.f32 %v1018, %v1018
        %v1027 = vsel %vm977, %v1019, 0.0
        %1028 = vadd.xlane.f32.xlu0 %v1027
        %v1029 = vpop.xlane.xlu0 %1028
        %v1030 = vsel %vm977, %v1020, 0.0
        %1031 = vadd.xlane.f32.xlu0 %v1030
        %v1032 = vpop.xlane.xlu0 %1031
        %v1033 = vsel %vm977, %v1021, 0.0
        %1034 = vadd.xlane.f32.xlu0 %v1033
        %v1035 = vpop.xlane.xlu0 %1034
        %v1036 = vsel %vm977, %v1022, 0.0
        %1037 = vadd.xlane.f32.xlu0 %v1036
        %v1038 = vpop.xlane.xlu0 %1037
        %v1039 = vsel %vm977, %v1023, 0.0
        %1040 = vadd.xlane.f32.xlu0 %v1039
        %v1041 = vpop.xlane.xlu0 %1040
        %v1042 = vsel %vm977, %v1024, 0.0
        %1043 = vadd.xlane.f32.xlu0 %v1042
        %v1044 = vpop.xlane.xlu0 %1043
        %v1045 = vsel %vm977, %v1025, 0.0
        %1046 = vadd.xlane.f32.xlu0 %v1045
        %v1047 = vpop.xlane.xlu0 %1046
        %v1048 = vsel %vm977, %v1026, 0.0
        %1049 = vadd.xlane.f32.xlu0 %v1048
        %v1050 = vpop.xlane.xlu0 %1049
        %v1051 = vmul.f32 %v1029, %v1002
        %v1052 = vmul.f32 %v1032, %v1002
        %v1053 = vmul.f32 %v1035, %v1002
        %v1054 = vmul.f32 %v1038, %v1002
        %v1055 = vmul.f32 %v1041, %v1002
        %v1056 = vmul.f32 %v1044, %v1002
        %v1057 = vmul.f32 %v1047, %v1002
        %v1058 = vmul.f32 %v1050, %v1002
        %v1059 = vadd.f32 %v1051, 1e-06
        %v1060 = vadd.f32 %v1052, 1e-06
        %v1061 = vadd.f32 %v1053, 1e-06
        %v1062 = vadd.f32 %v1054, 1e-06
        %v1063 = vadd.f32 %v1055, 1e-06
        %v1064 = vadd.f32 %v1056, 1e-06
        %v1065 = vadd.f32 %v1057, 1e-06
        %v1066 = vadd.f32 %v1058, 1e-06
        %v1067 = vrsqrt.pop %v1059
        %v1068 = vrsqrt.pop %v1060
        %v1069 = vrsqrt.pop %v1061
        %v1070 = vrsqrt.pop %v1062
        %v1071 = vrsqrt.pop %v1063
        %v1072 = vrsqrt.pop %v1064
        %v1073 = vrsqrt.pop %v1065
        %v1074 = vrsqrt.pop %v1066
        %v1075 = vmul.f32 %v1011, %v1067
        %v1076 = vmul.f32 %v1012, %v1068
        %v1077 = vmul.f32 %v1013, %v1069
        %v1078 = vmul.f32 %v1014, %v1070
        %v1079 = vmul.f32 %v1015, %v1071
        %v1080 = vmul.f32 %v1016, %v1072
        %v1081 = vmul.f32 %v1017, %v1073
        %v1082 = vmul.f32 %v1018, %v1074
        %v1084 = vlaneseq
        %v1085 = vshrl.u32 %v1084, 7
        %v1086 = vsub.s32 0, %v1085
        %v1087 = vrot.slane %v975, %v1086
        %v1089 = vmul.f32 %v1075, %v1087
        %v1090 = vmul.f32 %v1076, %v1087
        %v1091 = vmul.f32 %v1077, %v1087
        %v1092 = vmul.f32 %v1078, %v1087
        %v1093 = vmul.f32 %v1079, %v1087
        %v1094 = vmul.f32 %v1080, %v1087
        %v1095 = vmul.f32 %v1081, %v1087
        %v1096 = vmul.f32 %v1082, %v1087
        %v1098 = vlaneseq
        %v1099 = vshrl.u32 %v1098, 7
        %v1100 = vsub.s32 0, %v1099
        %v1101 = vrot.slane %v976, %v1100
        %v1103 = vadd.f32 %v1089, %v1101
        %v1104 = vadd.f32 %v1090, %v1101
        %v1105 = vadd.f32 %v1091, %v1101
        %v1106 = vadd.f32 %v1092, %v1101
        %v1107 = vadd.f32 %v1093, %v1101
        %v1108 = vadd.f32 %v1094, %v1101
        %v1109 = vadd.f32 %v1095, %v1101
        %v1110 = vadd.f32 %v1096, %v1101
        %v1111 = vld [vmem:[%s741] sm:$0xff]
        %v1112 = vld [vmem:[%s741 + $0x8] sm:$0xff]
        %v1113 = vld [vmem:[%s741 + $0x10] sm:$0xff]
        %v1114 = vld [vmem:[%s741 + $0x18] sm:$0xff]
        %v1115 = vld [vmem:[%s741 + $0x20] sm:$0xff]
        %v1116 = vld [vmem:[%s741 + $0x28] sm:$0xff]
        %v1117 = vld [vmem:[%s741 + $0x30] sm:$0xff]
        %v1118 = vld [vmem:[%s741 + $0x38] sm:$0xff]
        %v1119 = vld [vmem:[%s741 + $0x40] sm:$0xff]
        %v1120 = vld [vmem:[%s741 + $0x48] sm:$0xff]
        %v1121 = vld [vmem:[%s741 + $0x50] sm:$0xff]
        %v1122 = vld [vmem:[%s741 + $0x58] sm:$0xff]
        %v1123 = vld [vmem:[%s741 + $0x60] sm:$0xff]
        %v1124 = vld [vmem:[%s741 + $0x68] sm:$0xff]
        %v1125 = vld [vmem:[%s741 + $0x70] sm:$0xff]
        %v1126 = vld [vmem:[%s741 + $0x78] sm:$0xff]
        %v1127 = vld [vmem:[%s745] sm:$0x3]
        %v1129 = vlaneseq
        %v1130 = vshrl.u32 %v1129, 7
        %v1131 = vsub.s32 0, %v1130
        %v1132 = vrot.slane %v1127, %v1131
        %v1133 = vlaneseq
        %v1134 = vshrl.u32 %v1133, 7
        %v1135 = vsub.s32 1, %v1134
        %v1136 = vrot.slane %v1127, %v1135
        %v1140 = vsel %vm977, %v1103, 0
        %v1143 = vsel %vm977, %v1104, 0
        %v1146 = vsel %vm977, %v1105, 0
        %v1149 = vsel %vm977, %v1106, 0
        %v1152 = vsel %vm977, %v1107, 0
        %v1155 = vsel %vm977, %v1108, 0
        %v1158 = vsel %vm977, %v1109, 0
        %v1161 = vsel %vm977, %v1110, 0
        %1163 = vmatprep.subr.mxu0 %v1112
        %1164 = vmatpush1.msra.mxu0 %v1111
        %1165 = vmatprep.subr.mxu0 %v1114
        %1166 = vmatpush1.msra.mxu0 %v1113
        %1167 = vmatprep.subr.mxu0 %v1116
        %1168 = vmatpush1.msra.mxu0 %v1115
        %1169 = vmatprep.subr.mxu0 %v1118
        %1170 = vmatpush1.msra.mxu0 %v1117
        %1171 = vmatprep.subr.mxu0 %v1120
        %1172 = vmatpush1.msra.mxu0 %v1119
        %1173 = vmatprep.subr.mxu0 %v1122
        %1174 = vmatpush1.msra.mxu0 %v1121
        %1175 = vmatprep.subr.mxu0 %v1124
        %1176 = vmatpush1.msra.mxu0 %v1123
        %1177 = vmatprep.subr.mxu0 %v1126
        %1178 = vmatpush1.msra.mxu0 %v1125
        %1179 = vmatprep.subr.mxu0 0.0
        %1180 = vmatpush1.msra.mxu0 0.0
        %1181 = vmatprep.subr.mxu0 0.0
        %1182 = vmatpush1.msra.mxu0 0.0
        %1183 = vmatprep.subr.mxu0 0.0
        %1184 = vmatpush1.msra.mxu0 0.0
        %1185 = vmatprep.subr.mxu0 0.0
        %1186 = vmatpush1.msra.mxu0 0.0
        %1187 = vmatprep.subr.mxu0 0.0
        %1188 = vmatpush1.msra.mxu0 0.0
        %1189 = vmatprep.subr.mxu0 0.0
        %1190 = vmatpush1.msra.mxu0 0.0
        %1191 = vmatprep.subr.mxu0 0.0
        %1192 = vmatpush1.msra.mxu0 0.0
        %1193 = vmatprep.subr.mxu0 0.0
        %1194 = vmatpush1.msra.mxu0 0.0
        %1195 = vmatprep.subr.mxu0 0.0
        %1196 = vmatpush1.msra.mxu0 0.0
        %1197 = vmatprep.subr.mxu0 0.0
        %1198 = vmatpush1.msra.mxu0 0.0
        %1199 = vmatprep.subr.mxu0 0.0
        %1200 = vmatpush1.msra.mxu0 0.0
        %1201 = vmatprep.subr.mxu0 0.0
        %1202 = vmatpush1.msra.mxu0 0.0
        %1203 = vmatprep.subr.mxu0 0.0
        %1204 = vmatpush1.msra.mxu0 0.0
        %1205 = vmatprep.subr.mxu0 0.0
        %1206 = vmatpush1.msra.mxu0 0.0
        %1207 = vmatprep.subr.mxu0 0.0
        %1208 = vmatpush1.msra.mxu0 0.0
        %1209 = vmatprep.subr.mxu0 0.0
        %1210 = vmatpush1.msra.mxu0 0.0
        %1211 = vmatprep.subr.mxu0 0.0
        %1212 = vmatpush1.msra.mxu0 0.0
        %1213 = vmatprep.subr.mxu0 0.0
        %1214 = vmatpush1.msra.mxu0 0.0
        %1215 = vmatprep.subr.mxu0 0.0
        %1216 = vmatpush1.msra.mxu0 0.0
        %1217 = vmatprep.subr.mxu0 0.0
        %1218 = vmatpush1.msra.mxu0 0.0
        %1219 = vmatprep.subr.mxu0 0.0
        %1220 = vmatpush1.msra.mxu0 0.0
        %1221 = vmatprep.subr.mxu0 0.0
        %1222 = vmatpush1.msra.mxu0 0.0
        %1223 = vmatprep.subr.mxu0 0.0
        %1224 = vmatpush1.msra.mxu0 0.0
        %1225 = vmatprep.subr.mxu0 0.0
        %1226 = vmatpush1.msra.mxu0 0.0
        %1227 = vmatprep.mubr.f32.mxu0 0.0
        %1228 = vmatmul.mubr.f32.gmra.mrb[0].mxu0 %v1140
        %v1229 = vpop.f32.mrb[0].mxu0
        %v1230 = vadd.f32 %v1132, %v1229
        %v1231 = vpop.f32.mrb[0].mxu0
        %v1232 = vadd.f32 %v1136, %v1231
        %1233 = vmatprep.mubr.f32.mxu0 0.0
        %1234 = vmatmul.mubr.f32.gmra.mrb[0].mxu0 %v1143
        %v1235 = vpop.f32.mrb[0].mxu0
        %v1236 = vadd.f32 %v1132, %v1235
        %v1237 = vpop.f32.mrb[0].mxu0
        %v1238 = vadd.f32 %v1136, %v1237
        %1239 = vmatprep.mubr.f32.mxu0 0.0
        %1240 = vmatmul.mubr.f32.gmra.mrb[0].mxu0 %v1146
        %v1241 = vpop.f32.mrb[0].mxu0
        %v1242 = vadd.f32 %v1132, %v1241
        %v1243 = vpop.f32.mrb[0].mxu0
        %v1244 = vadd.f32 %v1136, %v1243
        %1245 = vmatprep.mubr.f32.mxu0 0.0
        %1246 = vmatmul.mubr.f32.gmra.mrb[0].mxu0 %v1149
        %v1247 = vpop.f32.mrb[0].mxu0
        %v1248 = vadd.f32 %v1132, %v1247
        %v1249 = vpop.f32.mrb[0].mxu0
        %v1250 = vadd.f32 %v1136, %v1249
        %1251 = vmatprep.mubr.f32.mxu0 0.0
        %1252 = vmatmul.mubr.f32.gmra.mrb[0].mxu0 %v1152
        %v1253 = vpop.f32.mrb[0].mxu0
        %v1254 = vadd.f32 %v1132, %v1253
        %v1255 = vpop.f32.mrb[0].mxu0
        %v1256 = vadd.f32 %v1136, %v1255
        %1257 = vmatprep.mubr.f32.mxu0 0.0
        %1258 = vmatmul.mubr.f32.gmra.mrb[0].mxu0 %v1155
        %v1259 = vpop.f32.mrb[0].mxu0
        %v1260 = vadd.f32 %v1132, %v1259
        %v1261 = vpop.f32.mrb[0].mxu0
        %v1262 = vadd.f32 %v1136, %v1261
        %1263 = vmatprep.mubr.f32.mxu0 0.0
        %1264 = vmatmul.mubr.f32.gmra.mrb[0].mxu0 %v1158
        %v1265 = vpop.f32.mrb[0].mxu0
        %v1266 = vadd.f32 %v1132, %v1265
        %v1267 = vpop.f32.mrb[0].mxu0
        %v1268 = vadd.f32 %v1136, %v1267
        %1269 = vmatprep.mubr.f32.mxu0 0.0
        %1270 = vmatmul.mubr.f32.gmra.mrb[0].mxu0 %v1161
        %v1271 = vpop.f32.mrb[0].mxu0
        %v1272 = vadd.f32 %v1132, %v1271
        %v1273 = vpop.f32.mrb[0].mxu0
        %v1274 = vadd.f32 %v1136, %v1273
        %1275 = vdwg.mxu0
        %v1276 = vld [vmem:[%s3] sm:$0xff]
        %v1277 = vld [vmem:[%s3 + $0x8] sm:$0xff]
        %v1278 = vld [vmem:[%s3 + $0x10] sm:$0xff]
        %v1279 = vld [vmem:[%s3 + $0x18] sm:$0xff]
        %v1280 = vld [vmem:[%s3 + $0x20] sm:$0xff]
        %v1281 = vld [vmem:[%s3 + $0x28] sm:$0xff]
        %v1282 = vld [vmem:[%s3 + $0x30] sm:$0xff]
        %v1283 = vld [vmem:[%s3 + $0x38] sm:$0xff]
        %1292 = vrot.lane.b32.xlu0 %v1230, 64
        %v1293 = vpop.permute.xlu0 %1292
        %1294 = vrot.lane.b32.xlu0 %v1236, 64
        %v1295 = vpop.permute.xlu0 %1294
        %1296 = vrot.lane.b32.xlu0 %v1242, 64
        %v1297 = vpop.permute.xlu0 %1296
        %1298 = vrot.lane.b32.xlu0 %v1248, 64
        %v1299 = vpop.permute.xlu0 %1298
        %1300 = vrot.lane.b32.xlu0 %v1254, 64
        %v1301 = vpop.permute.xlu0 %1300
        %1302 = vrot.lane.b32.xlu0 %v1260, 64
        %v1303 = vpop.permute.xlu0 %1302
        %1304 = vrot.lane.b32.xlu0 %v1266, 64
        %v1305 = vpop.permute.xlu0 %1304
        %1306 = vrot.lane.b32.xlu0 %v1272, 64
        %v1307 = vpop.permute.xlu0 %1306
        %vm1308 = vcmask 130048
        %v1309 = vsel %vm1308, %v1230, 0
        %v1311 = vsel %vm1308, %v1236, 0
        %v1313 = vsel %vm1308, %v1242, 0
        %v1315 = vsel %vm1308, %v1248, 0
        %v1317 = vsel %vm1308, %v1254, 0
        %v1319 = vsel %vm1308, %v1260, 0
        %v1321 = vsel %vm1308, %v1266, 0
        %v1323 = vsel %vm1308, %v1272, 0
        %v1325 = vsel %vm1308, %v1293, 0
        %v1327 = vsel %vm1308, %v1295, 0
        %v1329 = vsel %vm1308, %v1297, 0
        %v1331 = vsel %vm1308, %v1299, 0
        %v1333 = vsel %vm1308, %v1301, 0
        %v1335 = vsel %vm1308, %v1303, 0
        %v1337 = vsel %vm1308, %v1305, 0
        %v1339 = vsel %vm1308, %v1307, 0
        %1341 = vmatprep.subr.mxu0 0.0
        %1342 = vmatpush1.xpose.msra.mxu0 %v1325
        %1343 = vmatprep.subr.mxu0 0.0
        %1344 = vmatpush1.xpose.msra.mxu0 %v1327
        %1345 = vmatprep.subr.mxu0 0.0
        %1346 = vmatpush1.xpose.msra.mxu0 %v1329
        %1347 = vmatprep.subr.mxu0 0.0
        %1348 = vmatpush1.xpose.msra.mxu0 %v1331
        %1349 = vmatprep.subr.mxu0 0.0
        %1350 = vmatpush1.xpose.msra.mxu0 %v1333
        %1351 = vmatprep.subr.mxu0 0.0
        %1352 = vmatpush1.xpose.msra.mxu0 %v1335
        %1353 = vmatprep.subr.mxu0 0.0
        %1354 = vmatpush1.xpose.msra.mxu0 %v1337
        %1355 = vmatprep.subr.mxu0 0.0
        %1356 = vmatpush1.xpose.msra.mxu0 %v1339
        %1357 = vmatprep.subr.mxu0 0.0
        %1358 = vmatpush1.xpose.msra.mxu0 0.0
        %1359 = vmatprep.subr.mxu0 0.0
        %1360 = vmatpush1.xpose.msra.mxu0 0.0
        %1361 = vmatprep.subr.mxu0 0.0
        %1362 = vmatpush1.xpose.msra.mxu0 0.0
        %1363 = vmatprep.subr.mxu0 0.0
        %1364 = vmatpush1.xpose.msra.mxu0 0.0
        %1365 = vmatprep.subr.mxu0 0.0
        %1366 = vmatpush1.xpose.msra.mxu0 0.0
        %1367 = vmatprep.subr.mxu0 0.0
        %1368 = vmatpush1.xpose.msra.mxu0 0.0
        %1369 = vmatprep.subr.mxu0 0.0
        %1370 = vmatpush1.xpose.msra.mxu0 0.0
        %1371 = vmatprep.subr.mxu0 0.0
        %1372 = vmatpush1.xpose.msra.mxu0 0.0
        %1373 = vmatprep.subr.mxu0 0.0
        %1374 = vmatpush1.xpose.msra.mxu0 0.0
        %1375 = vmatprep.subr.mxu0 0.0
        %1376 = vmatpush1.xpose.msra.mxu0 0.0
        %1377 = vmatprep.subr.mxu0 0.0
        %1378 = vmatpush1.xpose.msra.mxu0 0.0
        %1379 = vmatprep.subr.mxu0 0.0
        %1380 = vmatpush1.xpose.msra.mxu0 0.0
        %1381 = vmatprep.subr.mxu0 0.0
        %1382 = vmatpush1.xpose.msra.mxu0 0.0
        %1383 = vmatprep.subr.mxu0 0.0
        %1384 = vmatpush1.xpose.msra.mxu0 0.0
        %1385 = vmatprep.subr.mxu0 0.0
        %1386 = vmatpush1.xpose.msra.mxu0 0.0
        %1387 = vmatprep.subr.mxu0 0.0
        %1388 = vmatpush1.xpose.msra.mxu0 0.0
        %1389 = vmatprep.subr.mxu0 0.0
        %1390 = vmatpush1.xpose.msra.mxu0 0.0
        %1391 = vmatprep.subr.mxu0 0.0
        %1392 = vmatpush1.xpose.msra.mxu0 0.0
        %1393 = vmatprep.subr.mxu0 0.0
        %1394 = vmatpush1.xpose.msra.mxu0 0.0
        %1395 = vmatprep.subr.mxu0 0.0
        %1396 = vmatpush1.xpose.msra.mxu0 0.0
        %1397 = vmatprep.subr.mxu0 0.0
        %1398 = vmatpush1.xpose.msra.mxu0 0.0
        %1399 = vmatprep.subr.mxu0 0.0
        %1400 = vmatpush1.xpose.msra.mxu0 0.0
        %1401 = vmatprep.subr.mxu0 0.0
        %1402 = vmatpush1.xpose.msra.mxu0 0.0
        %1403 = vmatprep.subr.mxu0 0.0
        %1404 = vmatpush1.xpose.msra.mxu0 0.0
        %1405 = vmatprep.mubr.f32.mxu0 0.0
        %1406 = vmatmul.mubr.f32.gmra.mrb[0].mxu0 %v1309
        %v1407 = vpop.f32.mrb[0].mxu0
        %v1408 = vadd.f32 0.0, %v1407
        %v1409 = vpop.f32.mrb[0].mxu0
        %1410 = vmatprep.mubr.f32.mxu0 0.0
        %1411 = vmatmul.mubr.f32.gmra.mrb[0].mxu0 %v1311
        %v1412 = vpop.f32.mrb[0].mxu0
        %v1413 = vadd.f32 0.0, %v1412
        %v1414 = vpop.f32.mrb[0].mxu0
        %1415 = vmatprep.mubr.f32.mxu0 0.0
        %1416 = vmatmul.mubr.f32.gmra.mrb[0].mxu0 %v1313
        %v1417 = vpop.f32.mrb[0].mxu0
        %v1418 = vadd.f32 0.0, %v1417
        %v1419 = vpop.f32.mrb[0].mxu0
        %1420 = vmatprep.mubr.f32.mxu0 0.0
        %1421 = vmatmul.mubr.f32.gmra.mrb[0].mxu0 %v1315
        %v1422 = vpop.f32.mrb[0].mxu0
        %v1423 = vadd.f32 0.0, %v1422
        %v1424 = vpop.f32.mrb[0].mxu0
        %1425 = vmatprep.mubr.f32.mxu0 0.0
        %1426 = vmatmul.mubr.f32.gmra.mrb[0].mxu0 %v1317
        %v1427 = vpop.f32.mrb[0].mxu0
        %v1428 = vadd.f32 0.0, %v1427
        %v1429 = vpop.f32.mrb[0].mxu0
        %1430 = vmatprep.mubr.f32.mxu0 0.0
        %1431 = vmatmul.mubr.f32.gmra.mrb[0].mxu0 %v1319
        %v1432 = vpop.f32.mrb[0].mxu0
        %v1433 = vadd.f32 0.0, %v1432
        %v1434 = vpop.f32.mrb[0].mxu0
        %1435 = vmatprep.mubr.f32.mxu0 0.0
        %1436 = vmatmul.mubr.f32.gmra.mrb[0].mxu0 %v1321
        %v1437 = vpop.f32.mrb[0].mxu0
        %v1438 = vadd.f32 0.0, %v1437
        %v1439 = vpop.f32.mrb[0].mxu0
        %1440 = vmatprep.mubr.f32.mxu0 0.0
        %1441 = vmatmul.mubr.f32.gmra.mrb[0].mxu0 %v1323
        %v1442 = vpop.f32.mrb[0].mxu0
        %v1443 = vadd.f32 0.0, %v1442
        %v1444 = vpop.f32.mrb[0].mxu0
        %1445 = vdwg.mxu0
        %v1446 = vmul.f32 %v1408, 0.25
        %v1447 = vmul.f32 %v1413, 0.25
        %v1448 = vmul.f32 %v1418, 0.25
        %v1449 = vmul.f32 %v1423, 0.25
        %v1450 = vmul.f32 %v1428, 0.25
        %v1451 = vmul.f32 %v1433, 0.25
        %v1452 = vmul.f32 %v1438, 0.25
        %v1453 = vmul.f32 %v1443, 0.25
        %v1454 = vadd.f32 %v1446, %v1276
        %v1455 = vadd.f32 %v1447, %v1277
        %v1456 = vadd.f32 %v1448, %v1278
        %v1457 = vadd.f32 %v1449, %v1279
        %v1458 = vadd.f32 %v1450, %v1280
        %v1459 = vadd.f32 %v1451, %v1281
        %v1460 = vadd.f32 %v1452, %v1282
        %v1461 = vadd.f32 %v1453, %v1283
        %v1462 = vsel %vm977, %v1454, -inf
        %1463 = vmax.xlane.f32.xlu0 %v1462
        %v1464 = vpop.xlane.xlu0 %1463
        %v1465 = vsel %vm977, %v1455, -inf
        %1466 = vmax.xlane.f32.xlu0 %v1465
        %v1467 = vpop.xlane.xlu0 %1466
        %v1468 = vsel %vm977, %v1456, -inf
        %1469 = vmax.xlane.f32.xlu0 %v1468
        %v1470 = vpop.xlane.xlu0 %1469
        %v1471 = vsel %vm977, %v1457, -inf
        %1472 = vmax.xlane.f32.xlu0 %v1471
        %v1473 = vpop.xlane.xlu0 %1472
        %v1474 = vsel %vm977, %v1458, -inf
        %1475 = vmax.xlane.f32.xlu0 %v1474
        %v1476 = vpop.xlane.xlu0 %1475
        %v1477 = vsel %vm977, %v1459, -inf
        %1478 = vmax.xlane.f32.xlu0 %v1477
        %v1479 = vpop.xlane.xlu0 %1478
        %v1480 = vsel %vm977, %v1460, -inf
        %1481 = vmax.xlane.f32.xlu0 %v1480
        %v1482 = vpop.xlane.xlu0 %1481
        %v1483 = vsel %vm977, %v1461, -inf
        %1484 = vmax.xlane.f32.xlu0 %v1483
        %v1485 = vpop.xlane.xlu0 %1484
        %v1486 = vsub.f32 %v1454, %v1464
        %v1487 = vsub.f32 %v1455, %v1467
        %v1488 = vsub.f32 %v1456, %v1470
        %v1489 = vsub.f32 %v1457, %v1473
        %v1490 = vsub.f32 %v1458, %v1476
        %v1491 = vsub.f32 %v1459, %v1479
        %v1492 = vsub.f32 %v1460, %v1482
        %v1493 = vsub.f32 %v1461, %v1485
        %v1494 = vmul.f32 %v1486, 1.442695
        %v1495 = vpow.pop %v1494
        %v1496 = vmul.f32 %v1487, 1.442695
        %v1497 = vpow.pop %v1496
        %v1498 = vmul.f32 %v1488, 1.442695
        %v1499 = vpow.pop %v1498
        %v1500 = vmul.f32 %v1489, 1.442695
        %v1501 = vpow.pop %v1500
        %v1502 = vmul.f32 %v1490, 1.442695
        %v1503 = vpow.pop %v1502
        %v1504 = vmul.f32 %v1491, 1.442695
        %v1505 = vpow.pop %v1504
        %v1506 = vmul.f32 %v1492, 1.442695
        %v1507 = vpow.pop %v1506
        %v1508 = vmul.f32 %v1493, 1.442695
        %v1509 = vpow.pop %v1508
        %v1510 = vsel %vm977, %v1495, 0.0
        %1511 = vadd.xlane.f32.xlu0 %v1510
        %v1512 = vpop.xlane.xlu0 %1511
        %v1513 = vsel %vm977, %v1497, 0.0
        %1514 = vadd.xlane.f32.xlu0 %v1513
        %v1515 = vpop.xlane.xlu0 %1514
        %v1516 = vsel %vm977, %v1499, 0.0
        %1517 = vadd.xlane.f32.xlu0 %v1516
        %v1518 = vpop.xlane.xlu0 %1517
        %v1519 = vsel %vm977, %v1501, 0.0
        %1520 = vadd.xlane.f32.xlu0 %v1519
        %v1521 = vpop.xlane.xlu0 %1520
        %v1522 = vsel %vm977, %v1503, 0.0
        %1523 = vadd.xlane.f32.xlu0 %v1522
        %v1524 = vpop.xlane.xlu0 %1523
        %v1525 = vsel %vm977, %v1505, 0.0
        %1526 = vadd.xlane.f32.xlu0 %v1525
        %v1527 = vpop.xlane.xlu0 %1526
        %v1528 = vsel %vm977, %v1507, 0.0
        %1529 = vadd.xlane.f32.xlu0 %v1528
        %v1530 = vpop.xlane.xlu0 %1529
        %v1531 = vsel %vm977, %v1509, 0.0
        %1532 = vadd.xlane.f32.xlu0 %v1531
        %v1533 = vpop.xlane.xlu0 %1532
        %v1534 = vrcp.pop %v1512
        %v1535 = vrcp.pop %v1515
        %v1536 = vrcp.pop %v1518
        %v1537 = vrcp.pop %v1521
        %v1538 = vrcp.pop %v1524
        %v1539 = vrcp.pop %v1527
        %v1540 = vrcp.pop %v1530
        %v1541 = vrcp.pop %v1533
        %v1542 = vmul.f32 %v1495, %v1534
        %v1543 = vmul.f32 %v1497, %v1535
        %v1544 = vmul.f32 %v1499, %v1536
        %v1545 = vmul.f32 %v1501, %v1537
        %v1546 = vmul.f32 %v1503, %v1538
        %v1547 = vmul.f32 %v1505, %v1539
        %v1548 = vmul.f32 %v1507, %v1540
        %v1549 = vmul.f32 %v1509, %v1541
        %v1551 = vsel %vm977, %v1542, 0
        %v1554 = vsel %vm977, %v1543, 0
        %v1557 = vsel %vm977, %v1544, 0
        %v1560 = vsel %vm977, %v1545, 0
        %v1563 = vsel %vm977, %v1546, 0
        %v1566 = vsel %vm977, %v1547, 0
        %v1569 = vsel %vm977, %v1548, 0
        %v1572 = vsel %vm977, %v1549, 0
        %1574 = vmatprep.subr.mxu0 0.0
        %1575 = vmatpush1.msra.mxu0 %v1232
        %1576 = vmatprep.subr.mxu0 0.0
        %1577 = vmatpush1.msra.mxu0 %v1238
        %1578 = vmatprep.subr.mxu0 0.0
        %1579 = vmatpush1.msra.mxu0 %v1244
        %1580 = vmatprep.subr.mxu0 0.0
        %1581 = vmatpush1.msra.mxu0 %v1250
        %1582 = vmatprep.subr.mxu0 0.0
        %1583 = vmatpush1.msra.mxu0 %v1256
        %1584 = vmatprep.subr.mxu0 0.0
        %1585 = vmatpush1.msra.mxu0 %v1262
        %1586 = vmatprep.subr.mxu0 0.0
        %1587 = vmatpush1.msra.mxu0 %v1268
        %1588 = vmatprep.subr.mxu0 0.0
        %1589 = vmatpush1.msra.mxu0 %v1274
        %1590 = vmatprep.subr.mxu0 0.0
        %1591 = vmatpush1.msra.mxu0 0.0
        %1592 = vmatprep.subr.mxu0 0.0
        %1593 = vmatpush1.msra.mxu0 0.0
        %1594 = vmatprep.subr.mxu0 0.0
        %1595 = vmatpush1.msra.mxu0 0.0
        %1596 = vmatprep.subr.mxu0 0.0
        %1597 = vmatpush1.msra.mxu0 0.0
        %1598 = vmatprep.subr.mxu0 0.0
        %1599 = vmatpush1.msra.mxu0 0.0
        %1600 = vmatprep.subr.mxu0 0.0
        %1601 = vmatpush1.msra.mxu0 0.0
        %1602 = vmatprep.subr.mxu0 0.0
        %1603 = vmatpush1.msra.mxu0 0.0
        %1604 = vmatprep.subr.mxu0 0.0
        %1605 = vmatpush1.msra.mxu0 0.0
        %1606 = vmatprep.subr.mxu0 0.0
        %1607 = vmatpush1.msra.mxu0 0.0
        %1608 = vmatprep.subr.mxu0 0.0
        %1609 = vmatpush1.msra.mxu0 0.0
        %1610 = vmatprep.subr.mxu0 0.0
        %1611 = vmatpush1.msra.mxu0 0.0
        %1612 = vmatprep.subr.mxu0 0.0
        %1613 = vmatpush1.msra.mxu0 0.0
        %1614 = vmatprep.subr.mxu0 0.0
        %1615 = vmatpush1.msra.mxu0 0.0
        %1616 = vmatprep.subr.mxu0 0.0
        %1617 = vmatpush1.msra.mxu0 0.0
        %1618 = vmatprep.subr.mxu0 0.0
        %1619 = vmatpush1.msra.mxu0 0.0
        %1620 = vmatprep.subr.mxu0 0.0
        %1621 = vmatpush1.msra.mxu0 0.0
        %1622 = vmatprep.subr.mxu0 0.0
        %1623 = vmatpush1.msra.mxu0 0.0
        %1624 = vmatprep.subr.mxu0 0.0
        %1625 = vmatpush1.msra.mxu0 0.0
        %1626 = vmatprep.subr.mxu0 0.0
        %1627 = vmatpush1.msra.mxu0 0.0
        %1628 = vmatprep.subr.mxu0 0.0
        %1629 = vmatpush1.msra.mxu0 0.0
        %1630 = vmatprep.subr.mxu0 0.0
        %1631 = vmatpush1.msra.mxu0 0.0
        %1632 = vmatprep.subr.mxu0 0.0
        %1633 = vmatpush1.msra.mxu0 0.0
        %1634 = vmatprep.subr.mxu0 0.0
        %1635 = vmatpush1.msra.mxu0 0.0
        %1636 = vmatprep.subr.mxu0 0.0
        %1637 = vmatpush1.msra.mxu0 0.0
        %1638 = vmatprep.mubr.f32.mxu0 0.0
        %1639 = vmatmul.mubr.f32.gmra.mrb[0].mxu0 %v1551
        %v1640 = vpop.f32.mrb[0].mxu0
        %v1641 = vadd.f32 0.0, %v1640
        %v1642 = vpop.f32.mrb[0].mxu0
        %1643 = vmatprep.mubr.f32.mxu0 0.0
        %1644 = vmatmul.mubr.f32.gmra.mrb[0].mxu0 %v1554
        %v1645 = vpop.f32.mrb[0].mxu0
        %v1646 = vadd.f32 0.0, %v1645
        %v1647 = vpop.f32.mrb[0].mxu0
        %1648 = vmatprep.mubr.f32.mxu0 0.0
        %1649 = vmatmul.mubr.f32.gmra.mrb[0].mxu0 %v1557
        %v1650 = vpop.f32.mrb[0].mxu0
        %v1651 = vadd.f32 0.0, %v1650
        %v1652 = vpop.f32.mrb[0].mxu0
        %1653 = vmatprep.mubr.f32.mxu0 0.0
        %1654 = vmatmul.mubr.f32.gmra.mrb[0].mxu0 %v1560
        %v1655 = vpop.f32.mrb[0].mxu0
        %v1656 = vadd.f32 0.0, %v1655
        %v1657 = vpop.f32.mrb[0].mxu0
        %1658 = vmatprep.mubr.f32.mxu0 0.0
        %1659 = vmatmul.mubr.f32.gmra.mrb[0].mxu0 %v1563
        %v1660 = vpop.f32.mrb[0].mxu0
        %v1661 = vadd.f32 0.0, %v1660
        %v1662 = vpop.f32.mrb[0].mxu0
        %1663 = vmatprep.mubr.f32.mxu0 0.0
        %1664 = vmatmul.mubr.f32.gmra.mrb[0].mxu0 %v1566
        %v1665 = vpop.f32.mrb[0].mxu0
        %v1666 = vadd.f32 0.0, %v1665
        %v1667 = vpop.f32.mrb[0].mxu0
        %1668 = vmatprep.mubr.f32.mxu0 0.0
        %1669 = vmatmul.mubr.f32.gmra.mrb[0].mxu0 %v1569
        %v1670 = vpop.f32.mrb[0].mxu0
        %v1671 = vadd.f32 0.0, %v1670
        %v1672 = vpop.f32.mrb[0].mxu0
        %1673 = vmatprep.mubr.f32.mxu0 0.0
        %1674 = vmatmul.mubr.f32.gmra.mrb[0].mxu0 %v1572
        %v1675 = vpop.f32.mrb[0].mxu0
        %v1676 = vadd.f32 0.0, %v1675
        %v1677 = vpop.f32.mrb[0].mxu0
        %1678 = vdwg.mxu0
        %1679 = vrot.lane.b32.xlu0 %v1230, 112
        %v1680 = vpop.permute.xlu0 %1679
        %1681 = vrot.lane.b32.xlu0 %v1236, 112
        %v1682 = vpop.permute.xlu0 %1681
        %1683 = vrot.lane.b32.xlu0 %v1242, 112
        %v1684 = vpop.permute.xlu0 %1683
        %1685 = vrot.lane.b32.xlu0 %v1248, 112
        %v1686 = vpop.permute.xlu0 %1685
        %1687 = vrot.lane.b32.xlu0 %v1254, 112
        %v1688 = vpop.permute.xlu0 %1687
        %1689 = vrot.lane.b32.xlu0 %v1260, 112
        %v1690 = vpop.permute.xlu0 %1689
        %1691 = vrot.lane.b32.xlu0 %v1266, 112
        %v1692 = vpop.permute.xlu0 %1691
        %1693 = vrot.lane.b32.xlu0 %v1272, 112
        %v1694 = vpop.permute.xlu0 %1693
        %1695 = vrot.lane.b32.xlu0 %v1230, 48
        %v1696 = vpop.permute.xlu0 %1695
        %1697 = vrot.lane.b32.xlu0 %v1236, 48
        %v1698 = vpop.permute.xlu0 %1697
        %1699 = vrot.lane.b32.xlu0 %v1242, 48
        %v1700 = vpop.permute.xlu0 %1699
        %1701 = vrot.lane.b32.xlu0 %v1248, 48
        %v1702 = vpop.permute.xlu0 %1701
        %1703 = vrot.lane.b32.xlu0 %v1254, 48
        %v1704 = vpop.permute.xlu0 %1703
        %1705 = vrot.lane.b32.xlu0 %v1260, 48
        %v1706 = vpop.permute.xlu0 %1705
        %1707 = vrot.lane.b32.xlu0 %v1266, 48
        %v1708 = vpop.permute.xlu0 %1707
        %1709 = vrot.lane.b32.xlu0 %v1272, 48
        %v1710 = vpop.permute.xlu0 %1709
        %v1711 = vsel %vm1308, %v1680, 0
        %v1713 = vsel %vm1308, %v1682, 0
        %v1715 = vsel %vm1308, %v1684, 0
        %v1717 = vsel %vm1308, %v1686, 0
        %v1719 = vsel %vm1308, %v1688, 0
        %v1721 = vsel %vm1308, %v1690, 0
        %v1723 = vsel %vm1308, %v1692, 0
        %v1725 = vsel %vm1308, %v1694, 0
        %v1727 = vsel %vm1308, %v1696, 0
        %v1729 = vsel %vm1308, %v1698, 0
        %v1731 = vsel %vm1308, %v1700, 0
        %v1733 = vsel %vm1308, %v1702, 0
        %v1735 = vsel %vm1308, %v1704, 0
        %v1737 = vsel %vm1308, %v1706, 0
        %v1739 = vsel %vm1308, %v1708, 0
        %v1741 = vsel %vm1308, %v1710, 0
        %1743 = vmatprep.subr.mxu0 0.0
        %1744 = vmatpush1.xpose.msra.mxu0 %v1727
        %1745 = vmatprep.subr.mxu0 0.0
        %1746 = vmatpush1.xpose.msra.mxu0 %v1729
        %1747 = vmatprep.subr.mxu0 0.0
        %1748 = vmatpush1.xpose.msra.mxu0 %v1731
        %1749 = vmatprep.subr.mxu0 0.0
        %1750 = vmatpush1.xpose.msra.mxu0 %v1733
        %1751 = vmatprep.subr.mxu0 0.0
        %1752 = vmatpush1.xpose.msra.mxu0 %v1735
        %1753 = vmatprep.subr.mxu0 0.0
        %1754 = vmatpush1.xpose.msra.mxu0 %v1737
        %1755 = vmatprep.subr.mxu0 0.0
        %1756 = vmatpush1.xpose.msra.mxu0 %v1739
        %1757 = vmatprep.subr.mxu0 0.0
        %1758 = vmatpush1.xpose.msra.mxu0 %v1741
        %1759 = vmatprep.subr.mxu0 0.0
        %1760 = vmatpush1.xpose.msra.mxu0 0.0
        %1761 = vmatprep.subr.mxu0 0.0
        %1762 = vmatpush1.xpose.msra.mxu0 0.0
        %1763 = vmatprep.subr.mxu0 0.0
        %1764 = vmatpush1.xpose.msra.mxu0 0.0
        %1765 = vmatprep.subr.mxu0 0.0
        %1766 = vmatpush1.xpose.msra.mxu0 0.0
        %1767 = vmatprep.subr.mxu0 0.0
        %1768 = vmatpush1.xpose.msra.mxu0 0.0
        %1769 = vmatprep.subr.mxu0 0.0
        %1770 = vmatpush1.xpose.msra.mxu0 0.0
        %1771 = vmatprep.subr.mxu0 0.0
        %1772 = vmatpush1.xpose.msra.mxu0 0.0
        %1773 = vmatprep.subr.mxu0 0.0
        %1774 = vmatpush1.xpose.msra.mxu0 0.0
        %1775 = vmatprep.subr.mxu0 0.0
        %1776 = vmatpush1.xpose.msra.mxu0 0.0
        %1777 = vmatprep.subr.mxu0 0.0
        %1778 = vmatpush1.xpose.msra.mxu0 0.0
        %1779 = vmatprep.subr.mxu0 0.0
        %1780 = vmatpush1.xpose.msra.mxu0 0.0
        %1781 = vmatprep.subr.mxu0 0.0
        %1782 = vmatpush1.xpose.msra.mxu0 0.0
        %1783 = vmatprep.subr.mxu0 0.0
        %1784 = vmatpush1.xpose.msra.mxu0 0.0
        %1785 = vmatprep.subr.mxu0 0.0
        %1786 = vmatpush1.xpose.msra.mxu0 0.0
        %1787 = vmatprep.subr.mxu0 0.0
        %1788 = vmatpush1.xpose.msra.mxu0 0.0
        %1789 = vmatprep.subr.mxu0 0.0
        %1790 = vmatpush1.xpose.msra.mxu0 0.0
        %1791 = vmatprep.subr.mxu0 0.0
        %1792 = vmatpush1.xpose.msra.mxu0 0.0
        %1793 = vmatprep.subr.mxu0 0.0
        %1794 = vmatpush1.xpose.msra.mxu0 0.0
        %1795 = vmatprep.subr.mxu0 0.0
        %1796 = vmatpush1.xpose.msra.mxu0 0.0
        %1797 = vmatprep.subr.mxu0 0.0
        %1798 = vmatpush1.xpose.msra.mxu0 0.0
        %1799 = vmatprep.subr.mxu0 0.0
        %1800 = vmatpush1.xpose.msra.mxu0 0.0
        %1801 = vmatprep.subr.mxu0 0.0
        %1802 = vmatpush1.xpose.msra.mxu0 0.0
        %1803 = vmatprep.subr.mxu0 0.0
        %1804 = vmatpush1.xpose.msra.mxu0 0.0
        %1805 = vmatprep.subr.mxu0 0.0
        %1806 = vmatpush1.xpose.msra.mxu0 0.0
        %1807 = vmatprep.mubr.f32.mxu0 0.0
        %1808 = vmatmul.mubr.f32.gmra.mrb[0].mxu0 %v1711
        %v1809 = vpop.f32.mrb[0].mxu0
        %v1810 = vadd.f32 0.0, %v1809
        %v1811 = vpop.f32.mrb[0].mxu0
        %1812 = vmatprep.mubr.f32.mxu0 0.0
        %1813 = vmatmul.mubr.f32.gmra.mrb[0].mxu0 %v1713
        %v1814 = vpop.f32.mrb[0].mxu0
        %v1815 = vadd.f32 0.0, %v1814
        %v1816 = vpop.f32.mrb[0].mxu0
        %1817 = vmatprep.mubr.f32.mxu0 0.0
        %1818 = vmatmul.mubr.f32.gmra.mrb[0].mxu0 %v1715
        %v1819 = vpop.f32.mrb[0].mxu0
        %v1820 = vadd.f32 0.0, %v1819
        %v1821 = vpop.f32.mrb[0].mxu0
        %1822 = vmatprep.mubr.f32.mxu0 0.0
        %1823 = vmatmul.mubr.f32.gmra.mrb[0].mxu0 %v1717
        %v1824 = vpop.f32.mrb[0].mxu0
        %v1825 = vadd.f32 0.0, %v1824
        %v1826 = vpop.f32.mrb[0].mxu0
        %1827 = vmatprep.mubr.f32.mxu0 0.0
        %1828 = vmatmul.mubr.f32.gmra.mrb[0].mxu0 %v1719
        %v1829 = vpop.f32.mrb[0].mxu0
        %v1830 = vadd.f32 0.0, %v1829
        %v1831 = vpop.f32.mrb[0].mxu0
        %1832 = vmatprep.mubr.f32.mxu0 0.0
        %1833 = vmatmul.mubr.f32.gmra.mrb[0].mxu0 %v1721
        %v1834 = vpop.f32.mrb[0].mxu0
        %v1835 = vadd.f32 0.0, %v1834
        %v1836 = vpop.f32.mrb[0].mxu0
        %1837 = vmatprep.mubr.f32.mxu0 0.0
        %1838 = vmatmul.mubr.f32.gmra.mrb[0].mxu0 %v1723
        %v1839 = vpop.f32.mrb[0].mxu0
        %v1840 = vadd.f32 0.0, %v1839
        %v1841 = vpop.f32.mrb[0].mxu0
        %1842 = vmatprep.mubr.f32.mxu0 0.0
        %1843 = vmatmul.mubr.f32.gmra.mrb[0].mxu0 %v1725
        %v1844 = vpop.f32.mrb[0].mxu0
        %v1845 = vadd.f32 0.0, %v1844
        %v1846 = vpop.f32.mrb[0].mxu0
        %1847 = vdwg.mxu0
        %v1848 = vmul.f32 %v1810, 0.25
        %v1849 = vmul.f32 %v1815, 0.25
        %v1850 = vmul.f32 %v1820, 0.25
        %v1851 = vmul.f32 %v1825, 0.25
        %v1852 = vmul.f32 %v1830, 0.25
        %v1853 = vmul.f32 %v1835, 0.25
        %v1854 = vmul.f32 %v1840, 0.25
        %v1855 = vmul.f32 %v1845, 0.25
        %v1856 = vadd.f32 %v1848, %v1276
        %v1857 = vadd.f32 %v1849, %v1277
        %v1858 = vadd.f32 %v1850, %v1278
        %v1859 = vadd.f32 %v1851, %v1279
        %v1860 = vadd.f32 %v1852, %v1280
        %v1861 = vadd.f32 %v1853, %v1281
        %v1862 = vadd.f32 %v1854, %v1282
        %v1863 = vadd.f32 %v1855, %v1283
        %v1864 = vsel %vm977, %v1856, -inf
        %1865 = vmax.xlane.f32.xlu0 %v1864
        %v1866 = vpop.xlane.xlu0 %1865
        %v1867 = vsel %vm977, %v1857, -inf
        %1868 = vmax.xlane.f32.xlu0 %v1867
        %v1869 = vpop.xlane.xlu0 %1868
        %v1870 = vsel %vm977, %v1858, -inf
        %1871 = vmax.xlane.f32.xlu0 %v1870
        %v1872 = vpop.xlane.xlu0 %1871
        %v1873 = vsel %vm977, %v1859, -inf
        %1874 = vmax.xlane.f32.xlu0 %v1873
        %v1875 = vpop.xlane.xlu0 %1874
        %v1876 = vsel %vm977, %v1860, -inf
        %1877 = vmax.xlane.f32.xlu0 %v1876
        %v1878 = vpop.xlane.xlu0 %1877
        %v1879 = vsel %vm977, %v1861, -inf
        %1880 = vmax.xlane.f32.xlu0 %v1879
        %v1881 = vpop.xlane.xlu0 %1880
        %v1882 = vsel %vm977, %v1862, -inf
        %1883 = vmax.xlane.f32.xlu0 %v1882
        %v1884 = vpop.xlane.xlu0 %1883
        %v1885 = vsel %vm977, %v1863, -inf
        %1886 = vmax.xlane.f32.xlu0 %v1885
        %v1887 = vpop.xlane.xlu0 %1886
        %v1888 = vsub.f32 %v1856, %v1866
        %v1889 = vsub.f32 %v1857, %v1869
        %v1890 = vsub.f32 %v1858, %v1872
        %v1891 = vsub.f32 %v1859, %v1875
        %v1892 = vsub.f32 %v1860, %v1878
        %v1893 = vsub.f32 %v1861, %v1881
        %v1894 = vsub.f32 %v1862, %v1884
        %v1895 = vsub.f32 %v1863, %v1887
        %v1896 = vmul.f32 %v1888, 1.442695
        %v1897 = vpow.pop %v1896
        %v1898 = vmul.f32 %v1889, 1.442695
        %v1899 = vpow.pop %v1898
        %v1900 = vmul.f32 %v1890, 1.442695
        %v1901 = vpow.pop %v1900
        %v1902 = vmul.f32 %v1891, 1.442695
        %v1903 = vpow.pop %v1902
        %v1904 = vmul.f32 %v1892, 1.442695
        %v1905 = vpow.pop %v1904
        %v1906 = vmul.f32 %v1893, 1.442695
        %v1907 = vpow.pop %v1906
        %v1908 = vmul.f32 %v1894, 1.442695
        %v1909 = vpow.pop %v1908
        %v1910 = vmul.f32 %v1895, 1.442695
        %v1911 = vpow.pop %v1910
        %v1912 = vsel %vm977, %v1897, 0.0
        %1913 = vadd.xlane.f32.xlu0 %v1912
        %v1914 = vpop.xlane.xlu0 %1913
        %v1915 = vsel %vm977, %v1899, 0.0
        %1916 = vadd.xlane.f32.xlu0 %v1915
        %v1917 = vpop.xlane.xlu0 %1916
        %v1918 = vsel %vm977, %v1901, 0.0
        %1919 = vadd.xlane.f32.xlu0 %v1918
        %v1920 = vpop.xlane.xlu0 %1919
        %v1921 = vsel %vm977, %v1903, 0.0
        %1922 = vadd.xlane.f32.xlu0 %v1921
        %v1923 = vpop.xlane.xlu0 %1922
        %v1924 = vsel %vm977, %v1905, 0.0
        %1925 = vadd.xlane.f32.xlu0 %v1924
        %v1926 = vpop.xlane.xlu0 %1925
        %v1927 = vsel %vm977, %v1907, 0.0
        %1928 = vadd.xlane.f32.xlu0 %v1927
        %v1929 = vpop.xlane.xlu0 %1928
        %v1930 = vsel %vm977, %v1909, 0.0
        %1931 = vadd.xlane.f32.xlu0 %v1930
        %v1932 = vpop.xlane.xlu0 %1931
        %v1933 = vsel %vm977, %v1911, 0.0
        %1934 = vadd.xlane.f32.xlu0 %v1933
        %v1935 = vpop.xlane.xlu0 %1934
        %v1936 = vrcp.pop %v1914
        %v1937 = vrcp.pop %v1917
        %v1938 = vrcp.pop %v1920
        %v1939 = vrcp.pop %v1923
        %v1940 = vrcp.pop %v1926
        %v1941 = vrcp.pop %v1929
        %v1942 = vrcp.pop %v1932
        %v1943 = vrcp.pop %v1935
        %v1944 = vmul.f32 %v1897, %v1936
        %v1945 = vmul.f32 %v1899, %v1937
        %v1946 = vmul.f32 %v1901, %v1938
        %v1947 = vmul.f32 %v1903, %v1939
        %v1948 = vmul.f32 %v1905, %v1940
        %v1949 = vmul.f32 %v1907, %v1941
        %v1950 = vmul.f32 %v1909, %v1942
        %v1951 = vmul.f32 %v1911, %v1943
        %1960 = vrot.lane.b32.xlu0 %v1232, 112
        %v1961 = vpop.permute.xlu0 %1960
        %1962 = vrot.lane.b32.xlu0 %v1238, 112
        %v1963 = vpop.permute.xlu0 %1962
        %1964 = vrot.lane.b32.xlu0 %v1244, 112
        %v1965 = vpop.permute.xlu0 %1964
        %1966 = vrot.lane.b32.xlu0 %v1250, 112
        %v1967 = vpop.permute.xlu0 %1966
        %1968 = vrot.lane.b32.xlu0 %v1256, 112
        %v1969 = vpop.permute.xlu0 %1968
        %1970 = vrot.lane.b32.xlu0 %v1262, 112
        %v1971 = vpop.permute.xlu0 %1970
        %1972 = vrot.lane.b32.xlu0 %v1268, 112
        %v1973 = vpop.permute.xlu0 %1972
        %1974 = vrot.lane.b32.xlu0 %v1274, 112
        %v1975 = vpop.permute.xlu0 %1974
        %v1985 = vsel %vm977, %v1944, 0
        %v1988 = vsel %vm977, %v1945, 0
        %v1991 = vsel %vm977, %v1946, 0
        %v1994 = vsel %vm977, %v1947, 0
        %v1997 = vsel %vm977, %v1948, 0
        %v2000 = vsel %vm977, %v1949, 0
        %v2003 = vsel %vm977, %v1950, 0
        %v2006 = vsel %vm977, %v1951, 0
        %2008 = vmatprep.subr.mxu0 0.0
        %2009 = vmatpush1.msra.mxu0 %v1961
        %2010 = vmatprep.subr.mxu0 0.0
        %2011 = vmatpush1.msra.mxu0 %v1963
        %2012 = vmatprep.subr.mxu0 0.0
        %2013 = vmatpush1.msra.mxu0 %v1965
        %2014 = vmatprep.subr.mxu0 0.0
        %2015 = vmatpush1.msra.mxu0 %v1967
        %2016 = vmatprep.subr.mxu0 0.0
        %2017 = vmatpush1.msra.mxu0 %v1969
        %2018 = vmatprep.subr.mxu0 0.0
        %2019 = vmatpush1.msra.mxu0 %v1971
        %2020 = vmatprep.subr.mxu0 0.0
        %2021 = vmatpush1.msra.mxu0 %v1973
        %2022 = vmatprep.subr.mxu0 0.0
        %2023 = vmatpush1.msra.mxu0 %v1975
        %2024 = vmatprep.subr.mxu0 0.0
        %2025 = vmatpush1.msra.mxu0 0.0
        %2026 = vmatprep.subr.mxu0 0.0
        %2027 = vmatpush1.msra.mxu0 0.0
        %2028 = vmatprep.subr.mxu0 0.0
        %2029 = vmatpush1.msra.mxu0 0.0
        %2030 = vmatprep.subr.mxu0 0.0
        %2031 = vmatpush1.msra.mxu0 0.0
        %2032 = vmatprep.subr.mxu0 0.0
        %2033 = vmatpush1.msra.mxu0 0.0
        %2034 = vmatprep.subr.mxu0 0.0
        %2035 = vmatpush1.msra.mxu0 0.0
        %2036 = vmatprep.subr.mxu0 0.0
        %2037 = vmatpush1.msra.mxu0 0.0
        %2038 = vmatprep.subr.mxu0 0.0
        %2039 = vmatpush1.msra.mxu0 0.0
        %2040 = vmatprep.subr.mxu0 0.0
        %2041 = vmatpush1.msra.mxu0 0.0
        %2042 = vmatprep.subr.mxu0 0.0
        %2043 = vmatpush1.msra.mxu0 0.0
        %2044 = vmatprep.subr.mxu0 0.0
        %2045 = vmatpush1.msra.mxu0 0.0
        %2046 = vmatprep.subr.mxu0 0.0
        %2047 = vmatpush1.msra.mxu0 0.0
        %2048 = vmatprep.subr.mxu0 0.0
        %2049 = vmatpush1.msra.mxu0 0.0
        %2050 = vmatprep.subr.mxu0 0.0
        %2051 = vmatpush1.msra.mxu0 0.0
        %2052 = vmatprep.subr.mxu0 0.0
        %2053 = vmatpush1.msra.mxu0 0.0
        %2054 = vmatprep.subr.mxu0 0.0
        %2055 = vmatpush1.msra.mxu0 0.0
        %2056 = vmatprep.subr.mxu0 0.0
        %2057 = vmatpush1.msra.mxu0 0.0
        %2058 = vmatprep.subr.mxu0 0.0
        %2059 = vmatpush1.msra.mxu0 0.0
        %2060 = vmatprep.subr.mxu0 0.0
        %2061 = vmatpush1.msra.mxu0 0.0
        %2062 = vmatprep.subr.mxu0 0.0
        %2063 = vmatpush1.msra.mxu0 0.0
        %2064 = vmatprep.subr.mxu0 0.0
        %2065 = vmatpush1.msra.mxu0 0.0
        %2066 = vmatprep.subr.mxu0 0.0
        %2067 = vmatpush1.msra.mxu0 0.0
        %2068 = vmatprep.subr.mxu0 0.0
        %2069 = vmatpush1.msra.mxu0 0.0
        %2070 = vmatprep.subr.mxu0 0.0
        %2071 = vmatpush1.msra.mxu0 0.0
        %2072 = vmatprep.mubr.f32.mxu0 0.0
        %2073 = vmatmul.mubr.f32.gmra.mrb[0].mxu0 %v1985
        %v2074 = vpop.f32.mrb[0].mxu0
        %v2075 = vadd.f32 0.0, %v2074
        %v2076 = vpop.f32.mrb[0].mxu0
        %2077 = vmatprep.mubr.f32.mxu0 0.0
        %2078 = vmatmul.mubr.f32.gmra.mrb[0].mxu0 %v1988
        %v2079 = vpop.f32.mrb[0].mxu0
        %v2080 = vadd.f32 0.0, %v2079
        %v2081 = vpop.f32.mrb[0].mxu0
        %2082 = vmatprep.mubr.f32.mxu0 0.0
        %2083 = vmatmul.mubr.f32.gmra.mrb[0].mxu0 %v1991
        %v2084 = vpop.f32.mrb[0].mxu0
        %v2085 = vadd.f32 0.0, %v2084
        %v2086 = vpop.f32.mrb[0].mxu0
        %2087 = vmatprep.mubr.f32.mxu0 0.0
        %2088 = vmatmul.mubr.f32.gmra.mrb[0].mxu0 %v1994
        %v2089 = vpop.f32.mrb[0].mxu0
        %v2090 = vadd.f32 0.0, %v2089
        %v2091 = vpop.f32.mrb[0].mxu0
        %2092 = vmatprep.mubr.f32.mxu0 0.0
        %2093 = vmatmul.mubr.f32.gmra.mrb[0].mxu0 %v1997
        %v2094 = vpop.f32.mrb[0].mxu0
        %v2095 = vadd.f32 0.0, %v2094
        %v2096 = vpop.f32.mrb[0].mxu0
        %2097 = vmatprep.mubr.f32.mxu0 0.0
        %2098 = vmatmul.mubr.f32.gmra.mrb[0].mxu0 %v2000
        %v2099 = vpop.f32.mrb[0].mxu0
        %v2100 = vadd.f32 0.0, %v2099
        %v2101 = vpop.f32.mrb[0].mxu0
        %2102 = vmatprep.mubr.f32.mxu0 0.0
        %2103 = vmatmul.mubr.f32.gmra.mrb[0].mxu0 %v2003
        %v2104 = vpop.f32.mrb[0].mxu0
        %v2105 = vadd.f32 0.0, %v2104
        %v2106 = vpop.f32.mrb[0].mxu0
        %2107 = vmatprep.mubr.f32.mxu0 0.0
        %2108 = vmatmul.mubr.f32.gmra.mrb[0].mxu0 %v2006
        %v2109 = vpop.f32.mrb[0].mxu0
        %v2110 = vadd.f32 0.0, %v2109
        %v2111 = vpop.f32.mrb[0].mxu0
        %2112 = vdwg.mxu0
        %2113 = vrot.lane.b32.xlu0 %v1230, 96
        %v2114 = vpop.permute.xlu0 %2113
        %2115 = vrot.lane.b32.xlu0 %v1236, 96
        %v2116 = vpop.permute.xlu0 %2115
        %2117 = vrot.lane.b32.xlu0 %v1242, 96
        %v2118 = vpop.permute.xlu0 %2117
        %2119 = vrot.lane.b32.xlu0 %v1248, 96
        %v2120 = vpop.permute.xlu0 %2119
        %2121 = vrot.lane.b32.xlu0 %v1254, 96
        %v2122 = vpop.permute.xlu0 %2121
        %2123 = vrot.lane.b32.xlu0 %v1260, 96
        %v2124 = vpop.permute.xlu0 %2123
        %2125 = vrot.lane.b32.xlu0 %v1266, 96
        %v2126 = vpop.permute.xlu0 %2125
        %2127 = vrot.lane.b32.xlu0 %v1272, 96
        %v2128 = vpop.permute.xlu0 %2127
        %2129 = vrot.lane.b32.xlu0 %v1230, 32
        %v2130 = vpop.permute.xlu0 %2129
        %2131 = vrot.lane.b32.xlu0 %v1236, 32
        %v2132 = vpop.permute.xlu0 %2131
        %2133 = vrot.lane.b32.xlu0 %v1242, 32
        %v2134 = vpop.permute.xlu0 %2133
        %2135 = vrot.lane.b32.xlu0 %v1248, 32
        %v2136 = vpop.permute.xlu0 %2135
        %2137 = vrot.lane.b32.xlu0 %v1254, 32
        %v2138 = vpop.permute.xlu0 %2137
        %2139 = vrot.lane.b32.xlu0 %v1260, 32
        %v2140 = vpop.permute.xlu0 %2139
        %2141 = vrot.lane.b32.xlu0 %v1266, 32
        %v2142 = vpop.permute.xlu0 %2141
        %2143 = vrot.lane.b32.xlu0 %v1272, 32
        %v2144 = vpop.permute.xlu0 %2143
        %v2145 = vsel %vm1308, %v2114, 0
        %v2147 = vsel %vm1308, %v2116, 0
        %v2149 = vsel %vm1308, %v2118, 0
        %v2151 = vsel %vm1308, %v2120, 0
        %v2153 = vsel %vm1308, %v2122, 0
        %v2155 = vsel %vm1308, %v2124, 0
        %v2157 = vsel %vm1308, %v2126, 0
        %v2159 = vsel %vm1308, %v2128, 0
        %v2161 = vsel %vm1308, %v2130, 0
        %v2163 = vsel %vm1308, %v2132, 0
        %v2165 = vsel %vm1308, %v2134, 0
        %v2167 = vsel %vm1308, %v2136, 0
        %v2169 = vsel %vm1308, %v2138, 0
        %v2171 = vsel %vm1308, %v2140, 0
        %v2173 = vsel %vm1308, %v2142, 0
        %v2175 = vsel %vm1308, %v2144, 0
        %2177 = vmatprep.subr.mxu0 0.0
        %2178 = vmatpush1.xpose.msra.mxu0 %v2161
        %2179 = vmatprep.subr.mxu0 0.0
        %2180 = vmatpush1.xpose.msra.mxu0 %v2163
        %2181 = vmatprep.subr.mxu0 0.0
        %2182 = vmatpush1.xpose.msra.mxu0 %v2165
        %2183 = vmatprep.subr.mxu0 0.0
        %2184 = vmatpush1.xpose.msra.mxu0 %v2167
        %2185 = vmatprep.subr.mxu0 0.0
        %2186 = vmatpush1.xpose.msra.mxu0 %v2169
        %2187 = vmatprep.subr.mxu0 0.0
        %2188 = vmatpush1.xpose.msra.mxu0 %v2171
        %2189 = vmatprep.subr.mxu0 0.0
        %2190 = vmatpush1.xpose.msra.mxu0 %v2173
        %2191 = vmatprep.subr.mxu0 0.0
        %2192 = vmatpush1.xpose.msra.mxu0 %v2175
        %2193 = vmatprep.subr.mxu0 0.0
        %2194 = vmatpush1.xpose.msra.mxu0 0.0
        %2195 = vmatprep.subr.mxu0 0.0
        %2196 = vmatpush1.xpose.msra.mxu0 0.0
        %2197 = vmatprep.subr.mxu0 0.0
        %2198 = vmatpush1.xpose.msra.mxu0 0.0
        %2199 = vmatprep.subr.mxu0 0.0
        %2200 = vmatpush1.xpose.msra.mxu0 0.0
        %2201 = vmatprep.subr.mxu0 0.0
        %2202 = vmatpush1.xpose.msra.mxu0 0.0
        %2203 = vmatprep.subr.mxu0 0.0
        %2204 = vmatpush1.xpose.msra.mxu0 0.0
        %2205 = vmatprep.subr.mxu0 0.0
        %2206 = vmatpush1.xpose.msra.mxu0 0.0
        %2207 = vmatprep.subr.mxu0 0.0
        %2208 = vmatpush1.xpose.msra.mxu0 0.0
        %2209 = vmatprep.subr.mxu0 0.0
        %2210 = vmatpush1.xpose.msra.mxu0 0.0
        %2211 = vmatprep.subr.mxu0 0.0
        %2212 = vmatpush1.xpose.msra.mxu0 0.0
        %2213 = vmatprep.subr.mxu0 0.0
        %2214 = vmatpush1.xpose.msra.mxu0 0.0
        %2215 = vmatprep.subr.mxu0 0.0
        %2216 = vmatpush1.xpose.msra.mxu0 0.0
        %2217 = vmatprep.subr.mxu0 0.0
        %2218 = vmatpush1.xpose.msra.mxu0 0.0
        %2219 = vmatprep.subr.mxu0 0.0
        %2220 = vmatpush1.xpose.msra.mxu0 0.0
        %2221 = vmatprep.subr.mxu0 0.0
        %2222 = vmatpush1.xpose.msra.mxu0 0.0
        %2223 = vmatprep.subr.mxu0 0.0
        %2224 = vmatpush1.xpose.msra.mxu0 0.0
        %2225 = vmatprep.subr.mxu0 0.0
        %2226 = vmatpush1.xpose.msra.mxu0 0.0
        %2227 = vmatprep.subr.mxu0 0.0
        %2228 = vmatpush1.xpose.msra.mxu0 0.0
        %2229 = vmatprep.subr.mxu0 0.0
        %2230 = vmatpush1.xpose.msra.mxu0 0.0
        %2231 = vmatprep.subr.mxu0 0.0
        %2232 = vmatpush1.xpose.msra.mxu0 0.0
        %2233 = vmatprep.subr.mxu0 0.0
        %2234 = vmatpush1.xpose.msra.mxu0 0.0
        %2235 = vmatprep.subr.mxu0 0.0
        %2236 = vmatpush1.xpose.msra.mxu0 0.0
        %2237 = vmatprep.subr.mxu0 0.0
        %2238 = vmatpush1.xpose.msra.mxu0 0.0
        %2239 = vmatprep.subr.mxu0 0.0
        %2240 = vmatpush1.xpose.msra.mxu0 0.0
        %2241 = vmatprep.mubr.f32.mxu0 0.0
        %2242 = vmatmul.mubr.f32.gmra.mrb[0].mxu0 %v2145
        %v2243 = vpop.f32.mrb[0].mxu0
        %v2244 = vadd.f32 0.0, %v2243
        %v2245 = vpop.f32.mrb[0].mxu0
        %2246 = vmatprep.mubr.f32.mxu0 0.0
        %2247 = vmatmul.mubr.f32.gmra.mrb[0].mxu0 %v2147
        %v2248 = vpop.f32.mrb[0].mxu0
        %v2249 = vadd.f32 0.0, %v2248
        %v2250 = vpop.f32.mrb[0].mxu0
        %2251 = vmatprep.mubr.f32.mxu0 0.0
        %2252 = vmatmul.mubr.f32.gmra.mrb[0].mxu0 %v2149
        %v2253 = vpop.f32.mrb[0].mxu0
        %v2254 = vadd.f32 0.0, %v2253
        %v2255 = vpop.f32.mrb[0].mxu0
        %2256 = vmatprep.mubr.f32.mxu0 0.0
        %2257 = vmatmul.mubr.f32.gmra.mrb[0].mxu0 %v2151
        %v2258 = vpop.f32.mrb[0].mxu0
        %v2259 = vadd.f32 0.0, %v2258
        %v2260 = vpop.f32.mrb[0].mxu0
        %2261 = vmatprep.mubr.f32.mxu0 0.0
        %2262 = vmatmul.mubr.f32.gmra.mrb[0].mxu0 %v2153
        %v2263 = vpop.f32.mrb[0].mxu0
        %v2264 = vadd.f32 0.0, %v2263
        %v2265 = vpop.f32.mrb[0].mxu0
        %2266 = vmatprep.mubr.f32.mxu0 0.0
        %2267 = vmatmul.mubr.f32.gmra.mrb[0].mxu0 %v2155
        %v2268 = vpop.f32.mrb[0].mxu0
        %v2269 = vadd.f32 0.0, %v2268
        %v2270 = vpop.f32.mrb[0].mxu0
        %2271 = vmatprep.mubr.f32.mxu0 0.0
        %2272 = vmatmul.mubr.f32.gmra.mrb[0].mxu0 %v2157
        %v2273 = vpop.f32.mrb[0].mxu0
        %v2274 = vadd.f32 0.0, %v2273
        %v2275 = vpop.f32.mrb[0].mxu0
        %2276 = vmatprep.mubr.f32.mxu0 0.0
        %2277 = vmatmul.mubr.f32.gmra.mrb[0].mxu0 %v2159
        %v2278 = vpop.f32.mrb[0].mxu0
        %v2279 = vadd.f32 0.0, %v2278
        %v2280 = vpop.f32.mrb[0].mxu0
        %2281 = vdwg.mxu0
        %v2282 = vmul.f32 %v2244, 0.25
        %v2283 = vmul.f32 %v2249, 0.25
        %v2284 = vmul.f32 %v2254, 0.25
        %v2285 = vmul.f32 %v2259, 0.25
        %v2286 = vmul.f32 %v2264, 0.25
        %v2287 = vmul.f32 %v2269, 0.25
        %v2288 = vmul.f32 %v2274, 0.25
        %v2289 = vmul.f32 %v2279, 0.25
        %v2290 = vadd.f32 %v2282, %v1276
        %v2291 = vadd.f32 %v2283, %v1277
        %v2292 = vadd.f32 %v2284, %v1278
        %v2293 = vadd.f32 %v2285, %v1279
        %v2294 = vadd.f32 %v2286, %v1280
        %v2295 = vadd.f32 %v2287, %v1281
        %v2296 = vadd.f32 %v2288, %v1282
        %v2297 = vadd.f32 %v2289, %v1283
        %v2298 = vsel %vm977, %v2290, -inf
        %2299 = vmax.xlane.f32.xlu0 %v2298
        %v2300 = vpop.xlane.xlu0 %2299
        %v2301 = vsel %vm977, %v2291, -inf
        %2302 = vmax.xlane.f32.xlu0 %v2301
        %v2303 = vpop.xlane.xlu0 %2302
        %v2304 = vsel %vm977, %v2292, -inf
        %2305 = vmax.xlane.f32.xlu0 %v2304
        %v2306 = vpop.xlane.xlu0 %2305
        %v2307 = vsel %vm977, %v2293, -inf
        %2308 = vmax.xlane.f32.xlu0 %v2307
        %v2309 = vpop.xlane.xlu0 %2308
        %v2310 = vsel %vm977, %v2294, -inf
        %2311 = vmax.xlane.f32.xlu0 %v2310
        %v2312 = vpop.xlane.xlu0 %2311
        %v2313 = vsel %vm977, %v2295, -inf
        %2314 = vmax.xlane.f32.xlu0 %v2313
        %v2315 = vpop.xlane.xlu0 %2314
        %v2316 = vsel %vm977, %v2296, -inf
        %2317 = vmax.xlane.f32.xlu0 %v2316
        %v2318 = vpop.xlane.xlu0 %2317
        %v2319 = vsel %vm977, %v2297, -inf
        %2320 = vmax.xlane.f32.xlu0 %v2319
        %v2321 = vpop.xlane.xlu0 %2320
        %v2322 = vsub.f32 %v2290, %v2300
        %v2323 = vsub.f32 %v2291, %v2303
        %v2324 = vsub.f32 %v2292, %v2306
        %v2325 = vsub.f32 %v2293, %v2309
        %v2326 = vsub.f32 %v2294, %v2312
        %v2327 = vsub.f32 %v2295, %v2315
        %v2328 = vsub.f32 %v2296, %v2318
        %v2329 = vsub.f32 %v2297, %v2321
        %v2330 = vmul.f32 %v2322, 1.442695
        %v2331 = vpow.pop %v2330
        %v2332 = vmul.f32 %v2323, 1.442695
        %v2333 = vpow.pop %v2332
        %v2334 = vmul.f32 %v2324, 1.442695
        %v2335 = vpow.pop %v2334
        %v2336 = vmul.f32 %v2325, 1.442695
        %v2337 = vpow.pop %v2336
        %v2338 = vmul.f32 %v2326, 1.442695
        %v2339 = vpow.pop %v2338
        %v2340 = vmul.f32 %v2327, 1.442695
        %v2341 = vpow.pop %v2340
        %v2342 = vmul.f32 %v2328, 1.442695
        %v2343 = vpow.pop %v2342
        %v2344 = vmul.f32 %v2329, 1.442695
        %v2345 = vpow.pop %v2344
        %v2346 = vsel %vm977, %v2331, 0.0
        %2347 = vadd.xlane.f32.xlu0 %v2346
        %v2348 = vpop.xlane.xlu0 %2347
        %v2349 = vsel %vm977, %v2333, 0.0
        %2350 = vadd.xlane.f32.xlu0 %v2349
        %v2351 = vpop.xlane.xlu0 %2350
        %v2352 = vsel %vm977, %v2335, 0.0
        %2353 = vadd.xlane.f32.xlu0 %v2352
        %v2354 = vpop.xlane.xlu0 %2353
        %v2355 = vsel %vm977, %v2337, 0.0
        %2356 = vadd.xlane.f32.xlu0 %v2355
        %v2357 = vpop.xlane.xlu0 %2356
        %v2358 = vsel %vm977, %v2339, 0.0
        %2359 = vadd.xlane.f32.xlu0 %v2358
        %v2360 = vpop.xlane.xlu0 %2359
        %v2361 = vsel %vm977, %v2341, 0.0
        %2362 = vadd.xlane.f32.xlu0 %v2361
        %v2363 = vpop.xlane.xlu0 %2362
        %v2364 = vsel %vm977, %v2343, 0.0
        %2365 = vadd.xlane.f32.xlu0 %v2364
        %v2366 = vpop.xlane.xlu0 %2365
        %v2367 = vsel %vm977, %v2345, 0.0
        %2368 = vadd.xlane.f32.xlu0 %v2367
        %v2369 = vpop.xlane.xlu0 %2368
        %v2370 = vrcp.pop %v2348
        %v2371 = vrcp.pop %v2351
        %v2372 = vrcp.pop %v2354
        %v2373 = vrcp.pop %v2357
        %v2374 = vrcp.pop %v2360
        %v2375 = vrcp.pop %v2363
        %v2376 = vrcp.pop %v2366
        %v2377 = vrcp.pop %v2369
        %v2378 = vmul.f32 %v2331, %v2370
        %v2379 = vmul.f32 %v2333, %v2371
        %v2380 = vmul.f32 %v2335, %v2372
        %v2381 = vmul.f32 %v2337, %v2373
        %v2382 = vmul.f32 %v2339, %v2374
        %v2383 = vmul.f32 %v2341, %v2375
        %v2384 = vmul.f32 %v2343, %v2376
        %v2385 = vmul.f32 %v2345, %v2377
        %2386 = vrot.lane.b32.xlu0 %v1232, 96
        %v2387 = vpop.permute.xlu0 %2386
        %2388 = vrot.lane.b32.xlu0 %v1238, 96
        %v2389 = vpop.permute.xlu0 %2388
        %2390 = vrot.lane.b32.xlu0 %v1244, 96
        %v2391 = vpop.permute.xlu0 %2390
        %2392 = vrot.lane.b32.xlu0 %v1250, 96
        %v2393 = vpop.permute.xlu0 %2392
        %2394 = vrot.lane.b32.xlu0 %v1256, 96
        %v2395 = vpop.permute.xlu0 %2394
        %2396 = vrot.lane.b32.xlu0 %v1262, 96
        %v2397 = vpop.permute.xlu0 %2396
        %2398 = vrot.lane.b32.xlu0 %v1268, 96
        %v2399 = vpop.permute.xlu0 %2398
        %2400 = vrot.lane.b32.xlu0 %v1274, 96
        %v2401 = vpop.permute.xlu0 %2400
        %v2411 = vsel %vm977, %v2378, 0
        %v2414 = vsel %vm977, %v2379, 0
        %v2417 = vsel %vm977, %v2380, 0
        %v2420 = vsel %vm977, %v2381, 0
        %v2423 = vsel %vm977, %v2382, 0
        %v2426 = vsel %vm977, %v2383, 0
        %v2429 = vsel %vm977, %v2384, 0
        %v2432 = vsel %vm977, %v2385, 0
        %2434 = vmatprep.subr.mxu0 0.0
        %2435 = vmatpush1.msra.mxu0 %v2387
        %2436 = vmatprep.subr.mxu0 0.0
        %2437 = vmatpush1.msra.mxu0 %v2389
        %2438 = vmatprep.subr.mxu0 0.0
        %2439 = vmatpush1.msra.mxu0 %v2391
        %2440 = vmatprep.subr.mxu0 0.0
        %2441 = vmatpush1.msra.mxu0 %v2393
        %2442 = vmatprep.subr.mxu0 0.0
        %2443 = vmatpush1.msra.mxu0 %v2395
        %2444 = vmatprep.subr.mxu0 0.0
        %2445 = vmatpush1.msra.mxu0 %v2397
        %2446 = vmatprep.subr.mxu0 0.0
        %2447 = vmatpush1.msra.mxu0 %v2399
        %2448 = vmatprep.subr.mxu0 0.0
        %2449 = vmatpush1.msra.mxu0 %v2401
        %2450 = vmatprep.subr.mxu0 0.0
        %2451 = vmatpush1.msra.mxu0 0.0
        %2452 = vmatprep.subr.mxu0 0.0
        %2453 = vmatpush1.msra.mxu0 0.0
        %2454 = vmatprep.subr.mxu0 0.0
        %2455 = vmatpush1.msra.mxu0 0.0
        %2456 = vmatprep.subr.mxu0 0.0
        %2457 = vmatpush1.msra.mxu0 0.0
        %2458 = vmatprep.subr.mxu0 0.0
        %2459 = vmatpush1.msra.mxu0 0.0
        %2460 = vmatprep.subr.mxu0 0.0
        %2461 = vmatpush1.msra.mxu0 0.0
        %2462 = vmatprep.subr.mxu0 0.0
        %2463 = vmatpush1.msra.mxu0 0.0
        %2464 = vmatprep.subr.mxu0 0.0
        %2465 = vmatpush1.msra.mxu0 0.0
        %2466 = vmatprep.subr.mxu0 0.0
        %2467 = vmatpush1.msra.mxu0 0.0
        %2468 = vmatprep.subr.mxu0 0.0
        %2469 = vmatpush1.msra.mxu0 0.0
        %2470 = vmatprep.subr.mxu0 0.0
        %2471 = vmatpush1.msra.mxu0 0.0
        %2472 = vmatprep.subr.mxu0 0.0
        %2473 = vmatpush1.msra.mxu0 0.0
        %2474 = vmatprep.subr.mxu0 0.0
        %2475 = vmatpush1.msra.mxu0 0.0
        %2476 = vmatprep.subr.mxu0 0.0
        %2477 = vmatpush1.msra.mxu0 0.0
        %2478 = vmatprep.subr.mxu0 0.0
        %2479 = vmatpush1.msra.mxu0 0.0
        %2480 = vmatprep.subr.mxu0 0.0
        %2481 = vmatpush1.msra.mxu0 0.0
        %2482 = vmatprep.subr.mxu0 0.0
        %2483 = vmatpush1.msra.mxu0 0.0
        %2484 = vmatprep.subr.mxu0 0.0
        %2485 = vmatpush1.msra.mxu0 0.0
        %2486 = vmatprep.subr.mxu0 0.0
        %2487 = vmatpush1.msra.mxu0 0.0
        %2488 = vmatprep.subr.mxu0 0.0
        %2489 = vmatpush1.msra.mxu0 0.0
        %2490 = vmatprep.subr.mxu0 0.0
        %2491 = vmatpush1.msra.mxu0 0.0
        %2492 = vmatprep.subr.mxu0 0.0
        %2493 = vmatpush1.msra.mxu0 0.0
        %2494 = vmatprep.subr.mxu0 0.0
        %2495 = vmatpush1.msra.mxu0 0.0
        %2496 = vmatprep.subr.mxu0 0.0
        %2497 = vmatpush1.msra.mxu0 0.0
        %2498 = vmatprep.mubr.f32.mxu0 0.0
        %2499 = vmatmul.mubr.f32.gmra.mrb[0].mxu0 %v2411
        %v2500 = vpop.f32.mrb[0].mxu0
        %v2501 = vadd.f32 0.0, %v2500
        %v2502 = vpop.f32.mrb[0].mxu0
        %2503 = vmatprep.mubr.f32.mxu0 0.0
        %2504 = vmatmul.mubr.f32.gmra.mrb[0].mxu0 %v2414
        %v2505 = vpop.f32.mrb[0].mxu0
        %v2506 = vadd.f32 0.0, %v2505
        %v2507 = vpop.f32.mrb[0].mxu0
        %2508 = vmatprep.mubr.f32.mxu0 0.0
        %2509 = vmatmul.mubr.f32.gmra.mrb[0].mxu0 %v2417
        %v2510 = vpop.f32.mrb[0].mxu0
        %v2511 = vadd.f32 0.0, %v2510
        %v2512 = vpop.f32.mrb[0].mxu0
        %2513 = vmatprep.mubr.f32.mxu0 0.0
        %2514 = vmatmul.mubr.f32.gmra.mrb[0].mxu0 %v2420
        %v2515 = vpop.f32.mrb[0].mxu0
        %v2516 = vadd.f32 0.0, %v2515
        %v2517 = vpop.f32.mrb[0].mxu0
        %2518 = vmatprep.mubr.f32.mxu0 0.0
        %2519 = vmatmul.mubr.f32.gmra.mrb[0].mxu0 %v2423
        %v2520 = vpop.f32.mrb[0].mxu0
        %v2521 = vadd.f32 0.0, %v2520
        %v2522 = vpop.f32.mrb[0].mxu0
        %2523 = vmatprep.mubr.f32.mxu0 0.0
        %2524 = vmatmul.mubr.f32.gmra.mrb[0].mxu0 %v2426
        %v2525 = vpop.f32.mrb[0].mxu0
        %v2526 = vadd.f32 0.0, %v2525
        %v2527 = vpop.f32.mrb[0].mxu0
        %2528 = vmatprep.mubr.f32.mxu0 0.0
        %2529 = vmatmul.mubr.f32.gmra.mrb[0].mxu0 %v2429
        %v2530 = vpop.f32.mrb[0].mxu0
        %v2531 = vadd.f32 0.0, %v2530
        %v2532 = vpop.f32.mrb[0].mxu0
        %2533 = vmatprep.mubr.f32.mxu0 0.0
        %2534 = vmatmul.mubr.f32.gmra.mrb[0].mxu0 %v2432
        %v2535 = vpop.f32.mrb[0].mxu0
        %v2536 = vadd.f32 0.0, %v2535
        %v2537 = vpop.f32.mrb[0].mxu0
        %2538 = vdwg.mxu0
        %2539 = vrot.lane.b32.xlu0 %v1230, 80
        %v2540 = vpop.permute.xlu0 %2539
        %2541 = vrot.lane.b32.xlu0 %v1236, 80
        %v2542 = vpop.permute.xlu0 %2541
        %2543 = vrot.lane.b32.xlu0 %v1242, 80
        %v2544 = vpop.permute.xlu0 %2543
        %2545 = vrot.lane.b32.xlu0 %v1248, 80
        %v2546 = vpop.permute.xlu0 %2545
        %2547 = vrot.lane.b32.xlu0 %v1254, 80
        %v2548 = vpop.permute.xlu0 %2547
        %2549 = vrot.lane.b32.xlu0 %v1260, 80
        %v2550 = vpop.permute.xlu0 %2549
        %2551 = vrot.lane.b32.xlu0 %v1266, 80
        %v2552 = vpop.permute.xlu0 %2551
        %2553 = vrot.lane.b32.xlu0 %v1272, 80
        %v2554 = vpop.permute.xlu0 %2553
        %2555 = vrot.lane.b32.xlu0 %v1230, 16
        %v2556 = vpop.permute.xlu0 %2555
        %2557 = vrot.lane.b32.xlu0 %v1236, 16
        %v2558 = vpop.permute.xlu0 %2557
        %2559 = vrot.lane.b32.xlu0 %v1242, 16
        %v2560 = vpop.permute.xlu0 %2559
        %2561 = vrot.lane.b32.xlu0 %v1248, 16
        %v2562 = vpop.permute.xlu0 %2561
        %2563 = vrot.lane.b32.xlu0 %v1254, 16
        %v2564 = vpop.permute.xlu0 %2563
        %2565 = vrot.lane.b32.xlu0 %v1260, 16
        %v2566 = vpop.permute.xlu0 %2565
        %2567 = vrot.lane.b32.xlu0 %v1266, 16
        %v2568 = vpop.permute.xlu0 %2567
        %2569 = vrot.lane.b32.xlu0 %v1272, 16
        %v2570 = vpop.permute.xlu0 %2569
        %v2571 = vsel %vm1308, %v2540, 0
        %v2573 = vsel %vm1308, %v2542, 0
        %v2575 = vsel %vm1308, %v2544, 0
        %v2577 = vsel %vm1308, %v2546, 0
        %v2579 = vsel %vm1308, %v2548, 0
        %v2581 = vsel %vm1308, %v2550, 0
        %v2583 = vsel %vm1308, %v2552, 0
        %v2585 = vsel %vm1308, %v2554, 0
        %v2587 = vsel %vm1308, %v2556, 0
        %v2589 = vsel %vm1308, %v2558, 0
        %v2591 = vsel %vm1308, %v2560, 0
        %v2593 = vsel %vm1308, %v2562, 0
        %v2595 = vsel %vm1308, %v2564, 0
        %v2597 = vsel %vm1308, %v2566, 0
        %v2599 = vsel %vm1308, %v2568, 0
        %v2601 = vsel %vm1308, %v2570, 0
        %2603 = vmatprep.subr.mxu0 0.0
        %2604 = vmatpush1.xpose.msra.mxu0 %v2587
        %2605 = vmatprep.subr.mxu0 0.0
        %2606 = vmatpush1.xpose.msra.mxu0 %v2589
        %2607 = vmatprep.subr.mxu0 0.0
        %2608 = vmatpush1.xpose.msra.mxu0 %v2591
        %2609 = vmatprep.subr.mxu0 0.0
        %2610 = vmatpush1.xpose.msra.mxu0 %v2593
        %2611 = vmatprep.subr.mxu0 0.0
        %2612 = vmatpush1.xpose.msra.mxu0 %v2595
        %2613 = vmatprep.subr.mxu0 0.0
        %2614 = vmatpush1.xpose.msra.mxu0 %v2597
        %2615 = vmatprep.subr.mxu0 0.0
        %2616 = vmatpush1.xpose.msra.mxu0 %v2599
        %2617 = vmatprep.subr.mxu0 0.0
        %2618 = vmatpush1.xpose.msra.mxu0 %v2601
        %2619 = vmatprep.subr.mxu0 0.0
        %2620 = vmatpush1.xpose.msra.mxu0 0.0
        %2621 = vmatprep.subr.mxu0 0.0
        %2622 = vmatpush1.xpose.msra.mxu0 0.0
        %2623 = vmatprep.subr.mxu0 0.0
        %2624 = vmatpush1.xpose.msra.mxu0 0.0
        %2625 = vmatprep.subr.mxu0 0.0
        %2626 = vmatpush1.xpose.msra.mxu0 0.0
        %2627 = vmatprep.subr.mxu0 0.0
        %2628 = vmatpush1.xpose.msra.mxu0 0.0
        %2629 = vmatprep.subr.mxu0 0.0
        %2630 = vmatpush1.xpose.msra.mxu0 0.0
        %2631 = vmatprep.subr.mxu0 0.0
        %2632 = vmatpush1.xpose.msra.mxu0 0.0
        %2633 = vmatprep.subr.mxu0 0.0
        %2634 = vmatpush1.xpose.msra.mxu0 0.0
        %2635 = vmatprep.subr.mxu0 0.0
        %2636 = vmatpush1.xpose.msra.mxu0 0.0
        %2637 = vmatprep.subr.mxu0 0.0
        %2638 = vmatpush1.xpose.msra.mxu0 0.0
        %2639 = vmatprep.subr.mxu0 0.0
        %2640 = vmatpush1.xpose.msra.mxu0 0.0
        %2641 = vmatprep.subr.mxu0 0.0
        %2642 = vmatpush1.xpose.msra.mxu0 0.0
        %2643 = vmatprep.subr.mxu0 0.0
        %2644 = vmatpush1.xpose.msra.mxu0 0.0
        %2645 = vmatprep.subr.mxu0 0.0
        %2646 = vmatpush1.xpose.msra.mxu0 0.0
        %2647 = vmatprep.subr.mxu0 0.0
        %2648 = vmatpush1.xpose.msra.mxu0 0.0
        %2649 = vmatprep.subr.mxu0 0.0
        %2650 = vmatpush1.xpose.msra.mxu0 0.0
        %2651 = vmatprep.subr.mxu0 0.0
        %2652 = vmatpush1.xpose.msra.mxu0 0.0
        %2653 = vmatprep.subr.mxu0 0.0
        %2654 = vmatpush1.xpose.msra.mxu0 0.0
        %2655 = vmatprep.subr.mxu0 0.0
        %2656 = vmatpush1.xpose.msra.mxu0 0.0
        %2657 = vmatprep.subr.mxu0 0.0
        %2658 = vmatpush1.xpose.msra.mxu0 0.0
        %2659 = vmatprep.subr.mxu0 0.0
        %2660 = vmatpush1.xpose.msra.mxu0 0.0
        %2661 = vmatprep.subr.mxu0 0.0
        %2662 = vmatpush1.xpose.msra.mxu0 0.0
        %2663 = vmatprep.subr.mxu0 0.0
        %2664 = vmatpush1.xpose.msra.mxu0 0.0
        %2665 = vmatprep.subr.mxu0 0.0
        %2666 = vmatpush1.xpose.msra.mxu0 0.0
        %2667 = vmatprep.mubr.f32.mxu0 0.0
        %2668 = vmatmul.mubr.f32.gmra.mrb[0].mxu0 %v2571
        %v2669 = vpop.f32.mrb[0].mxu0
        %v2670 = vadd.f32 0.0, %v2669
        %v2671 = vpop.f32.mrb[0].mxu0
        %2672 = vmatprep.mubr.f32.mxu0 0.0
        %2673 = vmatmul.mubr.f32.gmra.mrb[0].mxu0 %v2573
        %v2674 = vpop.f32.mrb[0].mxu0
        %v2675 = vadd.f32 0.0, %v2674
        %v2676 = vpop.f32.mrb[0].mxu0
        %2677 = vmatprep.mubr.f32.mxu0 0.0
        %2678 = vmatmul.mubr.f32.gmra.mrb[0].mxu0 %v2575
        %v2679 = vpop.f32.mrb[0].mxu0
        %v2680 = vadd.f32 0.0, %v2679
        %v2681 = vpop.f32.mrb[0].mxu0
        %2682 = vmatprep.mubr.f32.mxu0 0.0
        %2683 = vmatmul.mubr.f32.gmra.mrb[0].mxu0 %v2577
        %v2684 = vpop.f32.mrb[0].mxu0
        %v2685 = vadd.f32 0.0, %v2684
        %v2686 = vpop.f32.mrb[0].mxu0
        %2687 = vmatprep.mubr.f32.mxu0 0.0
        %2688 = vmatmul.mubr.f32.gmra.mrb[0].mxu0 %v2579
        %v2689 = vpop.f32.mrb[0].mxu0
        %v2690 = vadd.f32 0.0, %v2689
        %v2691 = vpop.f32.mrb[0].mxu0
        %2692 = vmatprep.mubr.f32.mxu0 0.0
        %2693 = vmatmul.mubr.f32.gmra.mrb[0].mxu0 %v2581
        %v2694 = vpop.f32.mrb[0].mxu0
        %v2695 = vadd.f32 0.0, %v2694
        %v2696 = vpop.f32.mrb[0].mxu0
        %2697 = vmatprep.mubr.f32.mxu0 0.0
        %2698 = vmatmul.mubr.f32.gmra.mrb[0].mxu0 %v2583
        %v2699 = vpop.f32.mrb[0].mxu0
        %v2700 = vadd.f32 0.0, %v2699
        %v2701 = vpop.f32.mrb[0].mxu0
        %2702 = vmatprep.mubr.f32.mxu0 0.0
        %2703 = vmatmul.mubr.f32.gmra.mrb[0].mxu0 %v2585
        %v2704 = vpop.f32.mrb[0].mxu0
        %v2705 = vadd.f32 0.0, %v2704
        %v2706 = vpop.f32.mrb[0].mxu0
        %2707 = vdwg.mxu0
        %v2708 = vmul.f32 %v2670, 0.25
        %v2709 = vmul.f32 %v2675, 0.25
        %v2710 = vmul.f32 %v2680, 0.25
        %v2711 = vmul.f32 %v2685, 0.25
        %v2712 = vmul.f32 %v2690, 0.25
        %v2713 = vmul.f32 %v2695, 0.25
        %v2714 = vmul.f32 %v2700, 0.25
        %v2715 = vmul.f32 %v2705, 0.25
        %v2716 = vadd.f32 %v2708, %v1276
        %v2717 = vadd.f32 %v2709, %v1277
        %v2718 = vadd.f32 %v2710, %v1278
        %v2719 = vadd.f32 %v2711, %v1279
        %v2720 = vadd.f32 %v2712, %v1280
        %v2721 = vadd.f32 %v2713, %v1281
        %v2722 = vadd.f32 %v2714, %v1282
        %v2723 = vadd.f32 %v2715, %v1283
        %v2724 = vsel %vm977, %v2716, -inf
        %2725 = vmax.xlane.f32.xlu0 %v2724
        %v2726 = vpop.xlane.xlu0 %2725
        %v2727 = vsel %vm977, %v2717, -inf
        %2728 = vmax.xlane.f32.xlu0 %v2727
        %v2729 = vpop.xlane.xlu0 %2728
        %v2730 = vsel %vm977, %v2718, -inf
        %2731 = vmax.xlane.f32.xlu0 %v2730
        %v2732 = vpop.xlane.xlu0 %2731
        %v2733 = vsel %vm977, %v2719, -inf
        %2734 = vmax.xlane.f32.xlu0 %v2733
        %v2735 = vpop.xlane.xlu0 %2734
        %v2736 = vsel %vm977, %v2720, -inf
        %2737 = vmax.xlane.f32.xlu0 %v2736
        %v2738 = vpop.xlane.xlu0 %2737
        %v2739 = vsel %vm977, %v2721, -inf
        %2740 = vmax.xlane.f32.xlu0 %v2739
        %v2741 = vpop.xlane.xlu0 %2740
        %v2742 = vsel %vm977, %v2722, -inf
        %2743 = vmax.xlane.f32.xlu0 %v2742
        %v2744 = vpop.xlane.xlu0 %2743
        %v2745 = vsel %vm977, %v2723, -inf
        %2746 = vmax.xlane.f32.xlu0 %v2745
        %v2747 = vpop.xlane.xlu0 %2746
        %v2748 = vsub.f32 %v2716, %v2726
        %v2749 = vsub.f32 %v2717, %v2729
        %v2750 = vsub.f32 %v2718, %v2732
        %v2751 = vsub.f32 %v2719, %v2735
        %v2752 = vsub.f32 %v2720, %v2738
        %v2753 = vsub.f32 %v2721, %v2741
        %v2754 = vsub.f32 %v2722, %v2744
        %v2755 = vsub.f32 %v2723, %v2747
        %v2756 = vmul.f32 %v2748, 1.442695
        %v2757 = vpow.pop %v2756
        %v2758 = vmul.f32 %v2749, 1.442695
        %v2759 = vpow.pop %v2758
        %v2760 = vmul.f32 %v2750, 1.442695
        %v2761 = vpow.pop %v2760
        %v2762 = vmul.f32 %v2751, 1.442695
        %v2763 = vpow.pop %v2762
        %v2764 = vmul.f32 %v2752, 1.442695
        %v2765 = vpow.pop %v2764
        %v2766 = vmul.f32 %v2753, 1.442695
        %v2767 = vpow.pop %v2766
        %v2768 = vmul.f32 %v2754, 1.442695
        %v2769 = vpow.pop %v2768
        %v2770 = vmul.f32 %v2755, 1.442695
        %v2771 = vpow.pop %v2770
        %v2772 = vsel %vm977, %v2757, 0.0
        %2773 = vadd.xlane.f32.xlu0 %v2772
        %v2774 = vpop.xlane.xlu0 %2773
        %v2775 = vsel %vm977, %v2759, 0.0
        %2776 = vadd.xlane.f32.xlu0 %v2775
        %v2777 = vpop.xlane.xlu0 %2776
        %v2778 = vsel %vm977, %v2761, 0.0
        %2779 = vadd.xlane.f32.xlu0 %v2778
        %v2780 = vpop.xlane.xlu0 %2779
        %v2781 = vsel %vm977, %v2763, 0.0
        %2782 = vadd.xlane.f32.xlu0 %v2781
        %v2783 = vpop.xlane.xlu0 %2782
        %v2784 = vsel %vm977, %v2765, 0.0
        %2785 = vadd.xlane.f32.xlu0 %v2784
        %v2786 = vpop.xlane.xlu0 %2785
        %v2787 = vsel %vm977, %v2767, 0.0
        %2788 = vadd.xlane.f32.xlu0 %v2787
        %v2789 = vpop.xlane.xlu0 %2788
        %v2790 = vsel %vm977, %v2769, 0.0
        %2791 = vadd.xlane.f32.xlu0 %v2790
        %v2792 = vpop.xlane.xlu0 %2791
        %v2793 = vsel %vm977, %v2771, 0.0
        %2794 = vadd.xlane.f32.xlu0 %v2793
        %v2795 = vpop.xlane.xlu0 %2794
        %v2796 = vrcp.pop %v2774
        %v2797 = vrcp.pop %v2777
        %v2798 = vrcp.pop %v2780
        %v2799 = vrcp.pop %v2783
        %v2800 = vrcp.pop %v2786
        %v2801 = vrcp.pop %v2789
        %v2802 = vrcp.pop %v2792
        %v2803 = vrcp.pop %v2795
        %v2804 = vmul.f32 %v2757, %v2796
        %v2805 = vmul.f32 %v2759, %v2797
        %v2806 = vmul.f32 %v2761, %v2798
        %v2807 = vmul.f32 %v2763, %v2799
        %v2808 = vmul.f32 %v2765, %v2800
        %v2809 = vmul.f32 %v2767, %v2801
        %v2810 = vmul.f32 %v2769, %v2802
        %v2811 = vmul.f32 %v2771, %v2803
        %2812 = vrot.lane.b32.xlu0 %v1232, 80
        %v2813 = vpop.permute.xlu0 %2812
        %2814 = vrot.lane.b32.xlu0 %v1238, 80
        %v2815 = vpop.permute.xlu0 %2814
        %2816 = vrot.lane.b32.xlu0 %v1244, 80
        %v2817 = vpop.permute.xlu0 %2816
        %2818 = vrot.lane.b32.xlu0 %v1250, 80
        %v2819 = vpop.permute.xlu0 %2818
        %2820 = vrot.lane.b32.xlu0 %v1256, 80
        %v2821 = vpop.permute.xlu0 %2820
        %2822 = vrot.lane.b32.xlu0 %v1262, 80
        %v2823 = vpop.permute.xlu0 %2822
        %2824 = vrot.lane.b32.xlu0 %v1268, 80
        %v2825 = vpop.permute.xlu0 %2824
        %2826 = vrot.lane.b32.xlu0 %v1274, 80
        %v2827 = vpop.permute.xlu0 %2826
        %v2837 = vsel %vm977, %v2804, 0
        %v2840 = vsel %vm977, %v2805, 0
        %v2843 = vsel %vm977, %v2806, 0
        %v2846 = vsel %vm977, %v2807, 0
        %v2849 = vsel %vm977, %v2808, 0
        %v2852 = vsel %vm977, %v2809, 0
        %v2855 = vsel %vm977, %v2810, 0
        %v2858 = vsel %vm977, %v2811, 0
        %2860 = vmatprep.subr.mxu0 0.0
        %2861 = vmatpush1.msra.mxu0 %v2813
        %2862 = vmatprep.subr.mxu0 0.0
        %2863 = vmatpush1.msra.mxu0 %v2815
        %2864 = vmatprep.subr.mxu0 0.0
        %2865 = vmatpush1.msra.mxu0 %v2817
        %2866 = vmatprep.subr.mxu0 0.0
        %2867 = vmatpush1.msra.mxu0 %v2819
        %2868 = vmatprep.subr.mxu0 0.0
        %2869 = vmatpush1.msra.mxu0 %v2821
        %2870 = vmatprep.subr.mxu0 0.0
        %2871 = vmatpush1.msra.mxu0 %v2823
        %2872 = vmatprep.subr.mxu0 0.0
        %2873 = vmatpush1.msra.mxu0 %v2825
        %2874 = vmatprep.subr.mxu0 0.0
        %2875 = vmatpush1.msra.mxu0 %v2827
        %2876 = vmatprep.subr.mxu0 0.0
        %2877 = vmatpush1.msra.mxu0 0.0
        %2878 = vmatprep.subr.mxu0 0.0
        %2879 = vmatpush1.msra.mxu0 0.0
        %2880 = vmatprep.subr.mxu0 0.0
        %2881 = vmatpush1.msra.mxu0 0.0
        %2882 = vmatprep.subr.mxu0 0.0
        %2883 = vmatpush1.msra.mxu0 0.0
        %2884 = vmatprep.subr.mxu0 0.0
        %2885 = vmatpush1.msra.mxu0 0.0
        %2886 = vmatprep.subr.mxu0 0.0
        %2887 = vmatpush1.msra.mxu0 0.0
        %2888 = vmatprep.subr.mxu0 0.0
        %2889 = vmatpush1.msra.mxu0 0.0
        %2890 = vmatprep.subr.mxu0 0.0
        %2891 = vmatpush1.msra.mxu0 0.0
        %2892 = vmatprep.subr.mxu0 0.0
        %2893 = vmatpush1.msra.mxu0 0.0
        %2894 = vmatprep.subr.mxu0 0.0
        %2895 = vmatpush1.msra.mxu0 0.0
        %2896 = vmatprep.subr.mxu0 0.0
        %2897 = vmatpush1.msra.mxu0 0.0
        %2898 = vmatprep.subr.mxu0 0.0
        %2899 = vmatpush1.msra.mxu0 0.0
        %2900 = vmatprep.subr.mxu0 0.0
        %2901 = vmatpush1.msra.mxu0 0.0
        %2902 = vmatprep.subr.mxu0 0.0
        %2903 = vmatpush1.msra.mxu0 0.0
        %2904 = vmatprep.subr.mxu0 0.0
        %2905 = vmatpush1.msra.mxu0 0.0
        %2906 = vmatprep.subr.mxu0 0.0
        %2907 = vmatpush1.msra.mxu0 0.0
        %2908 = vmatprep.subr.mxu0 0.0
        %2909 = vmatpush1.msra.mxu0 0.0
        %2910 = vmatprep.subr.mxu0 0.0
        %2911 = vmatpush1.msra.mxu0 0.0
        %2912 = vmatprep.subr.mxu0 0.0
        %2913 = vmatpush1.msra.mxu0 0.0
        %2914 = vmatprep.subr.mxu0 0.0
        %2915 = vmatpush1.msra.mxu0 0.0
        %2916 = vmatprep.subr.mxu0 0.0
        %2917 = vmatpush1.msra.mxu0 0.0
        %2918 = vmatprep.subr.mxu0 0.0
        %2919 = vmatpush1.msra.mxu0 0.0
        %2920 = vmatprep.subr.mxu0 0.0
        %2921 = vmatpush1.msra.mxu0 0.0
        %2922 = vmatprep.subr.mxu0 0.0
        %2923 = vmatpush1.msra.mxu0 0.0
        %2924 = vmatprep.mubr.f32.mxu0 0.0
        %2925 = vmatmul.mubr.f32.gmra.mrb[0].mxu0 %v2837
        %v2926 = vpop.f32.mrb[0].mxu0
        %v2927 = vadd.f32 0.0, %v2926
        %v2928 = vpop.f32.mrb[0].mxu0
        %2929 = vmatprep.mubr.f32.mxu0 0.0
        %2930 = vmatmul.mubr.f32.gmra.mrb[0].mxu0 %v2840
        %v2931 = vpop.f32.mrb[0].mxu0
        %v2932 = vadd.f32 0.0, %v2931
        %v2933 = vpop.f32.mrb[0].mxu0
        %2934 = vmatprep.mubr.f32.mxu0 0.0
        %2935 = vmatmul.mubr.f32.gmra.mrb[0].mxu0 %v2843
        %v2936 = vpop.f32.mrb[0].mxu0
        %v2937 = vadd.f32 0.0, %v2936
        %v2938 = vpop.f32.mrb[0].mxu0
        %2939 = vmatprep.mubr.f32.mxu0 0.0
        %2940 = vmatmul.mubr.f32.gmra.mrb[0].mxu0 %v2846
        %v2941 = vpop.f32.mrb[0].mxu0
        %v2942 = vadd.f32 0.0, %v2941
        %v2943 = vpop.f32.mrb[0].mxu0
        %2944 = vmatprep.mubr.f32.mxu0 0.0
        %2945 = vmatmul.mubr.f32.gmra.mrb[0].mxu0 %v2849
        %v2946 = vpop.f32.mrb[0].mxu0
        %v2947 = vadd.f32 0.0, %v2946
        %v2948 = vpop.f32.mrb[0].mxu0
        %2949 = vmatprep.mubr.f32.mxu0 0.0
        %2950 = vmatmul.mubr.f32.gmra.mrb[0].mxu0 %v2852
        %v2951 = vpop.f32.mrb[0].mxu0
        %v2952 = vadd.f32 0.0, %v2951
        %v2953 = vpop.f32.mrb[0].mxu0
        %2954 = vmatprep.mubr.f32.mxu0 0.0
        %2955 = vmatmul.mubr.f32.gmra.mrb[0].mxu0 %v2855
        %v2956 = vpop.f32.mrb[0].mxu0
        %v2957 = vadd.f32 0.0, %v2956
        %v2958 = vpop.f32.mrb[0].mxu0
        %2959 = vmatprep.mubr.f32.mxu0 0.0
        %2960 = vmatmul.mubr.f32.gmra.mrb[0].mxu0 %v2858
        %v2961 = vpop.f32.mrb[0].mxu0
        %v2962 = vadd.f32 0.0, %v2961
        %v2963 = vpop.f32.mrb[0].mxu0
        %2964 = vdwg.mxu0
        %2973 = vrot.lane.b32.xlu0 %v2075, 16
        %v2974 = vpop.permute.xlu0 %2973
        %2975 = vrot.lane.b32.xlu0 %v2080, 16
        %v2976 = vpop.permute.xlu0 %2975
        %2977 = vrot.lane.b32.xlu0 %v2085, 16
        %v2978 = vpop.permute.xlu0 %2977
        %2979 = vrot.lane.b32.xlu0 %v2090, 16
        %v2980 = vpop.permute.xlu0 %2979
        %2981 = vrot.lane.b32.xlu0 %v2095, 16
        %v2982 = vpop.permute.xlu0 %2981
        %2983 = vrot.lane.b32.xlu0 %v2100, 16
        %v2984 = vpop.permute.xlu0 %2983
        %2985 = vrot.lane.b32.xlu0 %v2105, 16
        %v2986 = vpop.permute.xlu0 %2985
        %2987 = vrot.lane.b32.xlu0 %v2110, 16
        %v2988 = vpop.permute.xlu0 %2987
        %3005 = vrot.lane.b32.xlu0 %v2501, 32
        %v3006 = vpop.permute.xlu0 %3005
        %3007 = vrot.lane.b32.xlu0 %v2506, 32
        %v3008 = vpop.permute.xlu0 %3007
        %3009 = vrot.lane.b32.xlu0 %v2511, 32
        %v3010 = vpop.permute.xlu0 %3009
        %3011 = vrot.lane.b32.xlu0 %v2516, 32
        %v3012 = vpop.permute.xlu0 %3011
        %3013 = vrot.lane.b32.xlu0 %v2521, 32
        %v3014 = vpop.permute.xlu0 %3013
        %3015 = vrot.lane.b32.xlu0 %v2526, 32
        %v3016 = vpop.permute.xlu0 %3015
        %3017 = vrot.lane.b32.xlu0 %v2531, 32
        %v3018 = vpop.permute.xlu0 %3017
        %3019 = vrot.lane.b32.xlu0 %v2536, 32
        %v3020 = vpop.permute.xlu0 %3019
        %3037 = vrot.lane.b32.xlu0 %v2927, 48
        %v3038 = vpop.permute.xlu0 %3037
        %3039 = vrot.lane.b32.xlu0 %v2932, 48
        %v3040 = vpop.permute.xlu0 %3039
        %3041 = vrot.lane.b32.xlu0 %v2937, 48
        %v3042 = vpop.permute.xlu0 %3041
        %3043 = vrot.lane.b32.xlu0 %v2942, 48
        %v3044 = vpop.permute.xlu0 %3043
        %3045 = vrot.lane.b32.xlu0 %v2947, 48
        %v3046 = vpop.permute.xlu0 %3045
        %3047 = vrot.lane.b32.xlu0 %v2952, 48
        %v3048 = vpop.permute.xlu0 %3047
        %3049 = vrot.lane.b32.xlu0 %v2957, 48
        %v3050 = vpop.permute.xlu0 %3049
        %3051 = vrot.lane.b32.xlu0 %v2962, 48
        %v3052 = vpop.permute.xlu0 %3051
        %v3061 = vsel %vm1308, %v1641, %v2974
        %v3062 = vsel %vm1308, %v1646, %v2976
        %v3063 = vsel %vm1308, %v1651, %v2978
        %v3064 = vsel %vm1308, %v1656, %v2980
        %v3065 = vsel %vm1308, %v1661, %v2982
        %v3066 = vsel %vm1308, %v1666, %v2984
        %v3067 = vsel %vm1308, %v1671, %v2986
        %v3068 = vsel %vm1308, %v1676, %v2988
        %vm3069 = vcmask 261120
        %v3070 = vsel %vm3069, %v3061, %v3006
        %v3071 = vsel %vm3069, %v3062, %v3008
        %v3072 = vsel %vm3069, %v3063, %v3010
        %v3073 = vsel %vm3069, %v3064, %v3012
        %v3074 = vsel %vm3069, %v3065, %v3014
        %v3075 = vsel %vm3069, %v3066, %v3016
        %v3076 = vsel %vm3069, %v3067, %v3018
        %v3077 = vsel %vm3069, %v3068, %v3020
        %vm3078 = vcmask 392192
        %v3079 = vsel %vm3078, %v3070, %v3038
        %v3080 = vsel %vm3078, %v3071, %v3040
        %v3081 = vsel %vm3078, %v3072, %v3042
        %v3082 = vsel %vm3078, %v3073, %v3044
        %v3083 = vsel %vm3078, %v3074, %v3046
        %v3084 = vsel %vm3078, %v3075, %v3048
        %v3085 = vsel %vm3078, %v3076, %v3050
        %v3086 = vsel %vm3078, %v3077, %v3052
        %v3087 = vld [vmem:[%s750] sm:$0xff]
        %v3088 = vld [vmem:[%s750 + $0x8] sm:$0xff]
        %v3089 = vld [vmem:[%s750 + $0x10] sm:$0xff]
        %v3090 = vld [vmem:[%s750 + $0x18] sm:$0xff]
        %v3091 = vld [vmem:[%s750 + $0x20] sm:$0xff]
        %v3092 = vld [vmem:[%s750 + $0x28] sm:$0xff]
        %v3093 = vld [vmem:[%s750 + $0x30] sm:$0xff]
        %v3094 = vld [vmem:[%s750 + $0x38] sm:$0xff]
        %v3095 = vld [vmem:[%s753] sm:$0x1]
        %v3097 = vlaneseq
        %v3098 = vshrl.u32 %v3097, 7
        %v3099 = vsub.s32 0, %v3098
        %v3100 = vrot.slane %v3095, %v3099
        %v3103 = vsel %vm977, %v3079, 0
        %v3106 = vsel %vm977, %v3080, 0
        %v3109 = vsel %vm977, %v3081, 0
        %v3112 = vsel %vm977, %v3082, 0
        %v3115 = vsel %vm977, %v3083, 0
        %v3118 = vsel %vm977, %v3084, 0
        %v3121 = vsel %vm977, %v3085, 0
        %v3124 = vsel %vm977, %v3086, 0
        %3126 = vmatprep.subr.mxu0 0.0
        %3127 = vmatpush1.msra.mxu0 %v3087
        %3128 = vmatprep.subr.mxu0 0.0
        %3129 = vmatpush1.msra.mxu0 %v3088
        %3130 = vmatprep.subr.mxu0 0.0
        %3131 = vmatpush1.msra.mxu0 %v3089
        %3132 = vmatprep.subr.mxu0 0.0
        %3133 = vmatpush1.msra.mxu0 %v3090
        %3134 = vmatprep.subr.mxu0 0.0
        %3135 = vmatpush1.msra.mxu0 %v3091
        %3136 = vmatprep.subr.mxu0 0.0
        %3137 = vmatpush1.msra.mxu0 %v3092
        %3138 = vmatprep.subr.mxu0 0.0
        %3139 = vmatpush1.msra.mxu0 %v3093
        %3140 = vmatprep.subr.mxu0 0.0
        %3141 = vmatpush1.msra.mxu0 %v3094
        %3142 = vmatprep.subr.mxu0 0.0
        %3143 = vmatpush1.msra.mxu0 0.0
        %3144 = vmatprep.subr.mxu0 0.0
        %3145 = vmatpush1.msra.mxu0 0.0
        %3146 = vmatprep.subr.mxu0 0.0
        %3147 = vmatpush1.msra.mxu0 0.0
        %3148 = vmatprep.subr.mxu0 0.0
        %3149 = vmatpush1.msra.mxu0 0.0
        %3150 = vmatprep.subr.mxu0 0.0
        %3151 = vmatpush1.msra.mxu0 0.0
        %3152 = vmatprep.subr.mxu0 0.0
        %3153 = vmatpush1.msra.mxu0 0.0
        %3154 = vmatprep.subr.mxu0 0.0
        %3155 = vmatpush1.msra.mxu0 0.0
        %3156 = vmatprep.subr.mxu0 0.0
        %3157 = vmatpush1.msra.mxu0 0.0
        %3158 = vmatprep.subr.mxu0 0.0
        %3159 = vmatpush1.msra.mxu0 0.0
        %3160 = vmatprep.subr.mxu0 0.0
        %3161 = vmatpush1.msra.mxu0 0.0
        %3162 = vmatprep.subr.mxu0 0.0
        %3163 = vmatpush1.msra.mxu0 0.0
        %3164 = vmatprep.subr.mxu0 0.0
        %3165 = vmatpush1.msra.mxu0 0.0
        %3166 = vmatprep.subr.mxu0 0.0
        %3167 = vmatpush1.msra.mxu0 0.0
        %3168 = vmatprep.subr.mxu0 0.0
        %3169 = vmatpush1.msra.mxu0 0.0
        %3170 = vmatprep.subr.mxu0 0.0
        %3171 = vmatpush1.msra.mxu0 0.0
        %3172 = vmatprep.subr.mxu0 0.0
        %3173 = vmatpush1.msra.mxu0 0.0
        %3174 = vmatprep.subr.mxu0 0.0
        %3175 = vmatpush1.msra.mxu0 0.0
        %3176 = vmatprep.subr.mxu0 0.0
        %3177 = vmatpush1.msra.mxu0 0.0
        %3178 = vmatprep.subr.mxu0 0.0
        %3179 = vmatpush1.msra.mxu0 0.0
        %3180 = vmatprep.subr.mxu0 0.0
        %3181 = vmatpush1.msra.mxu0 0.0
        %3182 = vmatprep.subr.mxu0 0.0
        %3183 = vmatpush1.msra.mxu0 0.0
        %3184 = vmatprep.subr.mxu0 0.0
        %3185 = vmatpush1.msra.mxu0 0.0
        %3186 = vmatprep.subr.mxu0 0.0
        %3187 = vmatpush1.msra.mxu0 0.0
        %3188 = vmatprep.subr.mxu0 0.0
        %3189 = vmatpush1.msra.mxu0 0.0
        %3190 = vmatprep.mubr.f32.mxu0 0.0
        %3191 = vmatmul.mubr.f32.gmra.mrb[0].mxu0 %v3103
        %v3192 = vpop.f32.mrb[0].mxu0
        %v3193 = vadd.f32 %v3100, %v3192
        %v3194 = vpop.f32.mrb[0].mxu0
        %3195 = vmatprep.mubr.f32.mxu0 0.0
        %3196 = vmatmul.mubr.f32.gmra.mrb[0].mxu0 %v3106
        %v3197 = vpop.f32.mrb[0].mxu0
        %v3198 = vadd.f32 %v3100, %v3197
        %v3199 = vpop.f32.mrb[0].mxu0
        %3200 = vmatprep.mubr.f32.mxu0 0.0
        %3201 = vmatmul.mubr.f32.gmra.mrb[0].mxu0 %v3109
        %v3202 = vpop.f32.mrb[0].mxu0
        %v3203 = vadd.f32 %v3100, %v3202
        %v3204 = vpop.f32.mrb[0].mxu0
        %3205 = vmatprep.mubr.f32.mxu0 0.0
        %3206 = vmatmul.mubr.f32.gmra.mrb[0].mxu0 %v3112
        %v3207 = vpop.f32.mrb[0].mxu0
        %v3208 = vadd.f32 %v3100, %v3207
        %v3209 = vpop.f32.mrb[0].mxu0
        %3210 = vmatprep.mubr.f32.mxu0 0.0
        %3211 = vmatmul.mubr.f32.gmra.mrb[0].mxu0 %v3115
        %v3212 = vpop.f32.mrb[0].mxu0
        %v3213 = vadd.f32 %v3100, %v3212
        %v3214 = vpop.f32.mrb[0].mxu0
        %3215 = vmatprep.mubr.f32.mxu0 0.0
        %3216 = vmatmul.mubr.f32.gmra.mrb[0].mxu0 %v3118
        %v3217 = vpop.f32.mrb[0].mxu0
        %v3218 = vadd.f32 %v3100, %v3217
        %v3219 = vpop.f32.mrb[0].mxu0
        %3220 = vmatprep.mubr.f32.mxu0 0.0
        %3221 = vmatmul.mubr.f32.gmra.mrb[0].mxu0 %v3121
        %v3222 = vpop.f32.mrb[0].mxu0
        %v3223 = vadd.f32 %v3100, %v3222
        %v3224 = vpop.f32.mrb[0].mxu0
        %3225 = vmatprep.mubr.f32.mxu0 0.0
        %3226 = vmatmul.mubr.f32.gmra.mrb[0].mxu0 %v3124
        %v3227 = vpop.f32.mrb[0].mxu0
        %v3228 = vadd.f32 %v3100, %v3227
        %v3229 = vpop.f32.mrb[0].mxu0
        %3230 = vdwg.mxu0
        %v3231 = vadd.f32 %v3193, %v967
        %v3232 = vadd.f32 %v3198, %v968
        %v3233 = vadd.f32 %v3203, %v969
        %v3234 = vadd.f32 %v3208, %v970
        %v3235 = vadd.f32 %v3213, %v971
        %v3236 = vadd.f32 %v3218, %v972
        %v3237 = vadd.f32 %v3223, %v973
        %v3238 = vadd.f32 %v3228, %v974
        %v3239 = vld [vmem:[%s756] sm:$0x1]
        %v3240 = vld [vmem:[%s759] sm:$0x1]
        %v3241 = vsel %vm977, %v3231, 0.0
        %3242 = vadd.xlane.f32.xlu0 %v3241
        %v3243 = vpop.xlane.xlu0 %3242
        %v3244 = vsel %vm977, %v3232, 0.0
        %3245 = vadd.xlane.f32.xlu0 %v3244
        %v3246 = vpop.xlane.xlu0 %3245
        %v3247 = vsel %vm977, %v3233, 0.0
        %3248 = vadd.xlane.f32.xlu0 %v3247
        %v3249 = vpop.xlane.xlu0 %3248
        %v3250 = vsel %vm977, %v3234, 0.0
        %3251 = vadd.xlane.f32.xlu0 %v3250
        %v3252 = vpop.xlane.xlu0 %3251
        %v3253 = vsel %vm977, %v3235, 0.0
        %3254 = vadd.xlane.f32.xlu0 %v3253
        %v3255 = vpop.xlane.xlu0 %3254
        %v3256 = vsel %vm977, %v3236, 0.0
        %3257 = vadd.xlane.f32.xlu0 %v3256
        %v3258 = vpop.xlane.xlu0 %3257
        %v3259 = vsel %vm977, %v3237, 0.0
        %3260 = vadd.xlane.f32.xlu0 %v3259
        %v3261 = vpop.xlane.xlu0 %3260
        %v3262 = vsel %vm977, %v3238, 0.0
        %3263 = vadd.xlane.f32.xlu0 %v3262
        %v3264 = vpop.xlane.xlu0 %3263
        %v3265 = vmul.f32 %v3243, %v1002
        %v3266 = vmul.f32 %v3246, %v1002
        %v3267 = vmul.f32 %v3249, %v1002
        %v3268 = vmul.f32 %v3252, %v1002
        %v3269 = vmul.f32 %v3255, %v1002
        %v3270 = vmul.f32 %v3258, %v1002
        %v3271 = vmul.f32 %v3261, %v1002
        %v3272 = vmul.f32 %v3264, %v1002
        %v3273 = vsub.f32 %v3231, %v3265
        %v3274 = vsub.f32 %v3232, %v3266
        %v3275 = vsub.f32 %v3233, %v3267
        %v3276 = vsub.f32 %v3234, %v3268
        %v3277 = vsub.f32 %v3235, %v3269
        %v3278 = vsub.f32 %v3236, %v3270
        %v3279 = vsub.f32 %v3237, %v3271
        %v3280 = vsub.f32 %v3238, %v3272
        %v3281 = vmul.f32 %v3273, %v3273
        %v3282 = vmul.f32 %v3274, %v3274
        %v3283 = vmul.f32 %v3275, %v3275
        %v3284 = vmul.f32 %v3276, %v3276
        %v3285 = vmul.f32 %v3277, %v3277
        %v3286 = vmul.f32 %v3278, %v3278
        %v3287 = vmul.f32 %v3279, %v3279
        %v3288 = vmul.f32 %v3280, %v3280
        %v3289 = vsel %vm977, %v3281, 0.0
        %3290 = vadd.xlane.f32.xlu0 %v3289
        %v3291 = vpop.xlane.xlu0 %3290
        %v3292 = vsel %vm977, %v3282, 0.0
        %3293 = vadd.xlane.f32.xlu0 %v3292
        %v3294 = vpop.xlane.xlu0 %3293
        %v3295 = vsel %vm977, %v3283, 0.0
        %3296 = vadd.xlane.f32.xlu0 %v3295
        %v3297 = vpop.xlane.xlu0 %3296
        %v3298 = vsel %vm977, %v3284, 0.0
        %3299 = vadd.xlane.f32.xlu0 %v3298
        %v3300 = vpop.xlane.xlu0 %3299
        %v3301 = vsel %vm977, %v3285, 0.0
        %3302 = vadd.xlane.f32.xlu0 %v3301
        %v3303 = vpop.xlane.xlu0 %3302
        %v3304 = vsel %vm977, %v3286, 0.0
        %3305 = vadd.xlane.f32.xlu0 %v3304
        %v3306 = vpop.xlane.xlu0 %3305
        %v3307 = vsel %vm977, %v3287, 0.0
        %3308 = vadd.xlane.f32.xlu0 %v3307
        %v3309 = vpop.xlane.xlu0 %3308
        %v3310 = vsel %vm977, %v3288, 0.0
        %3311 = vadd.xlane.f32.xlu0 %v3310
        %v3312 = vpop.xlane.xlu0 %3311
        %v3313 = vmul.f32 %v3291, %v1002
        %v3314 = vmul.f32 %v3294, %v1002
        %v3315 = vmul.f32 %v3297, %v1002
        %v3316 = vmul.f32 %v3300, %v1002
        %v3317 = vmul.f32 %v3303, %v1002
        %v3318 = vmul.f32 %v3306, %v1002
        %v3319 = vmul.f32 %v3309, %v1002
        %v3320 = vmul.f32 %v3312, %v1002
        %v3321 = vadd.f32 %v3313, 1e-06
        %v3322 = vadd.f32 %v3314, 1e-06
        %v3323 = vadd.f32 %v3315, 1e-06
        %v3324 = vadd.f32 %v3316, 1e-06
        %v3325 = vadd.f32 %v3317, 1e-06
        %v3326 = vadd.f32 %v3318, 1e-06
        %v3327 = vadd.f32 %v3319, 1e-06
        %v3328 = vadd.f32 %v3320, 1e-06
        %v3329 = vrsqrt.pop %v3321
        %v3330 = vrsqrt.pop %v3322
        %v3331 = vrsqrt.pop %v3323
        %v3332 = vrsqrt.pop %v3324
        %v3333 = vrsqrt.pop %v3325
        %v3334 = vrsqrt.pop %v3326
        %v3335 = vrsqrt.pop %v3327
        %v3336 = vrsqrt.pop %v3328
        %v3337 = vmul.f32 %v3273, %v3329
        %v3338 = vmul.f32 %v3274, %v3330
        %v3339 = vmul.f32 %v3275, %v3331
        %v3340 = vmul.f32 %v3276, %v3332
        %v3341 = vmul.f32 %v3277, %v3333
        %v3342 = vmul.f32 %v3278, %v3334
        %v3343 = vmul.f32 %v3279, %v3335
        %v3344 = vmul.f32 %v3280, %v3336
        %v3346 = vlaneseq
        %v3347 = vshrl.u32 %v3346, 7
        %v3348 = vsub.s32 0, %v3347
        %v3349 = vrot.slane %v3239, %v3348
        %v3351 = vmul.f32 %v3337, %v3349
        %v3352 = vmul.f32 %v3338, %v3349
        %v3353 = vmul.f32 %v3339, %v3349
        %v3354 = vmul.f32 %v3340, %v3349
        %v3355 = vmul.f32 %v3341, %v3349
        %v3356 = vmul.f32 %v3342, %v3349
        %v3357 = vmul.f32 %v3343, %v3349
        %v3358 = vmul.f32 %v3344, %v3349
        %v3360 = vlaneseq
        %v3361 = vshrl.u32 %v3360, 7
        %v3362 = vsub.s32 0, %v3361
        %v3363 = vrot.slane %v3240, %v3362
        %v3365 = vadd.f32 %v3351, %v3363
        %v3366 = vadd.f32 %v3352, %v3363
        %v3367 = vadd.f32 %v3353, %v3363
        %v3368 = vadd.f32 %v3354, %v3363
        %v3369 = vadd.f32 %v3355, %v3363
        %v3370 = vadd.f32 %v3356, %v3363
        %v3371 = vadd.f32 %v3357, %v3363
        %v3372 = vadd.f32 %v3358, %v3363
        %v3373 = vld [vmem:[%s764] sm:$0xff]
        %v3374 = vld [vmem:[%s764 + $0x8] sm:$0xff]
        %v3375 = vld [vmem:[%s764 + $0x10] sm:$0xff]
        %v3376 = vld [vmem:[%s764 + $0x18] sm:$0xff]
        %v3377 = vld [vmem:[%s764 + $0x20] sm:$0xff]
        %v3378 = vld [vmem:[%s764 + $0x28] sm:$0xff]
        %v3379 = vld [vmem:[%s764 + $0x30] sm:$0xff]
        %v3380 = vld [vmem:[%s764 + $0x38] sm:$0xff]
        %v3381 = vld [vmem:[%s764 + $0x40] sm:$0xff]
        %v3382 = vld [vmem:[%s764 + $0x48] sm:$0xff]
        %v3383 = vld [vmem:[%s764 + $0x50] sm:$0xff]
        %v3384 = vld [vmem:[%s764 + $0x58] sm:$0xff]
        %v3385 = vld [vmem:[%s764 + $0x60] sm:$0xff]
        %v3386 = vld [vmem:[%s764 + $0x68] sm:$0xff]
        %v3387 = vld [vmem:[%s764 + $0x70] sm:$0xff]
        %v3388 = vld [vmem:[%s764 + $0x78] sm:$0xff]
        %v3389 = vld [vmem:[%s768] sm:$0x3]
        %v3391 = vlaneseq
        %v3392 = vshrl.u32 %v3391, 7
        %v3393 = vsub.s32 0, %v3392
        %v3394 = vrot.slane %v3389, %v3393
        %v3395 = vlaneseq
        %v3396 = vshrl.u32 %v3395, 7
        %v3397 = vsub.s32 1, %v3396
        %v3398 = vrot.slane %v3389, %v3397
        %v3402 = vsel %vm977, %v3365, 0
        %v3405 = vsel %vm977, %v3366, 0
        %v3408 = vsel %vm977, %v3367, 0
        %v3411 = vsel %vm977, %v3368, 0
        %v3414 = vsel %vm977, %v3369, 0
        %v3417 = vsel %vm977, %v3370, 0
        %v3420 = vsel %vm977, %v3371, 0
        %v3423 = vsel %vm977, %v3372, 0
        %3425 = vmatprep.subr.mxu0 %v3374
        %3426 = vmatpush1.msra.mxu0 %v3373
        %3427 = vmatprep.subr.mxu0 %v3376
        %3428 = vmatpush1.msra.mxu0 %v3375
        %3429 = vmatprep.subr.mxu0 %v3378
        %3430 = vmatpush1.msra.mxu0 %v3377
        %3431 = vmatprep.subr.mxu0 %v3380
        %3432 = vmatpush1.msra.mxu0 %v3379
        %3433 = vmatprep.subr.mxu0 %v3382
        %3434 = vmatpush1.msra.mxu0 %v3381
        %3435 = vmatprep.subr.mxu0 %v3384
        %3436 = vmatpush1.msra.mxu0 %v3383
        %3437 = vmatprep.subr.mxu0 %v3386
        %3438 = vmatpush1.msra.mxu0 %v3385
        %3439 = vmatprep.subr.mxu0 %v3388
        %3440 = vmatpush1.msra.mxu0 %v3387
        %3441 = vmatprep.subr.mxu0 0.0
        %3442 = vmatpush1.msra.mxu0 0.0
        %3443 = vmatprep.subr.mxu0 0.0
        %3444 = vmatpush1.msra.mxu0 0.0
        %3445 = vmatprep.subr.mxu0 0.0
        %3446 = vmatpush1.msra.mxu0 0.0
        %3447 = vmatprep.subr.mxu0 0.0
        %3448 = vmatpush1.msra.mxu0 0.0
        %3449 = vmatprep.subr.mxu0 0.0
        %3450 = vmatpush1.msra.mxu0 0.0
        %3451 = vmatprep.subr.mxu0 0.0
        %3452 = vmatpush1.msra.mxu0 0.0
        %3453 = vmatprep.subr.mxu0 0.0
        %3454 = vmatpush1.msra.mxu0 0.0
        %3455 = vmatprep.subr.mxu0 0.0
        %3456 = vmatpush1.msra.mxu0 0.0
        %3457 = vmatprep.subr.mxu0 0.0
        %3458 = vmatpush1.msra.mxu0 0.0
        %3459 = vmatprep.subr.mxu0 0.0
        %3460 = vmatpush1.msra.mxu0 0.0
        %3461 = vmatprep.subr.mxu0 0.0
        %3462 = vmatpush1.msra.mxu0 0.0
        %3463 = vmatprep.subr.mxu0 0.0
        %3464 = vmatpush1.msra.mxu0 0.0
        %3465 = vmatprep.subr.mxu0 0.0
        %3466 = vmatpush1.msra.mxu0 0.0
        %3467 = vmatprep.subr.mxu0 0.0
        %3468 = vmatpush1.msra.mxu0 0.0
        %3469 = vmatprep.subr.mxu0 0.0
        %3470 = vmatpush1.msra.mxu0 0.0
        %3471 = vmatprep.subr.mxu0 0.0
        %3472 = vmatpush1.msra.mxu0 0.0
        %3473 = vmatprep.subr.mxu0 0.0
        %3474 = vmatpush1.msra.mxu0 0.0
        %3475 = vmatprep.subr.mxu0 0.0
        %3476 = vmatpush1.msra.mxu0 0.0
        %3477 = vmatprep.subr.mxu0 0.0
        %3478 = vmatpush1.msra.mxu0 0.0
        %3479 = vmatprep.subr.mxu0 0.0
        %3480 = vmatpush1.msra.mxu0 0.0
        %3481 = vmatprep.subr.mxu0 0.0
        %3482 = vmatpush1.msra.mxu0 0.0
        %3483 = vmatprep.subr.mxu0 0.0
        %3484 = vmatpush1.msra.mxu0 0.0
        %3485 = vmatprep.subr.mxu0 0.0
        %3486 = vmatpush1.msra.mxu0 0.0
        %3487 = vmatprep.subr.mxu0 0.0
        %3488 = vmatpush1.msra.mxu0 0.0
        %3489 = vmatprep.mubr.f32.mxu0 0.0
        %3490 = vmatmul.mubr.f32.gmra.mrb[0].mxu0 %v3402
        %v3491 = vpop.f32.mrb[0].mxu0
        %v3492 = vadd.f32 %v3394, %v3491
        %v3493 = vpop.f32.mrb[0].mxu0
        %v3494 = vadd.f32 %v3398, %v3493
        %3495 = vmatprep.mubr.f32.mxu0 0.0
        %3496 = vmatmul.mubr.f32.gmra.mrb[0].mxu0 %v3405
        %v3497 = vpop.f32.mrb[0].mxu0
        %v3498 = vadd.f32 %v3394, %v3497
        %v3499 = vpop.f32.mrb[0].mxu0
        %v3500 = vadd.f32 %v3398, %v3499
        %3501 = vmatprep.mubr.f32.mxu0 0.0
        %3502 = vmatmul.mubr.f32.gmra.mrb[0].mxu0 %v3408
        %v3503 = vpop.f32.mrb[0].mxu0
        %v3504 = vadd.f32 %v3394, %v3503
        %v3505 = vpop.f32.mrb[0].mxu0
        %v3506 = vadd.f32 %v3398, %v3505
        %3507 = vmatprep.mubr.f32.mxu0 0.0
        %3508 = vmatmul.mubr.f32.gmra.mrb[0].mxu0 %v3411
        %v3509 = vpop.f32.mrb[0].mxu0
        %v3510 = vadd.f32 %v3394, %v3509
        %v3511 = vpop.f32.mrb[0].mxu0
        %v3512 = vadd.f32 %v3398, %v3511
        %3513 = vmatprep.mubr.f32.mxu0 0.0
        %3514 = vmatmul.mubr.f32.gmra.mrb[0].mxu0 %v3414
        %v3515 = vpop.f32.mrb[0].mxu0
        %v3516 = vadd.f32 %v3394, %v3515
        %v3517 = vpop.f32.mrb[0].mxu0
        %v3518 = vadd.f32 %v3398, %v3517
        %3519 = vmatprep.mubr.f32.mxu0 0.0
        %3520 = vmatmul.mubr.f32.gmra.mrb[0].mxu0 %v3417
        %v3521 = vpop.f32.mrb[0].mxu0
        %v3522 = vadd.f32 %v3394, %v3521
        %v3523 = vpop.f32.mrb[0].mxu0
        %v3524 = vadd.f32 %v3398, %v3523
        %3525 = vmatprep.mubr.f32.mxu0 0.0
        %3526 = vmatmul.mubr.f32.gmra.mrb[0].mxu0 %v3420
        %v3527 = vpop.f32.mrb[0].mxu0
        %v3528 = vadd.f32 %v3394, %v3527
        %v3529 = vpop.f32.mrb[0].mxu0
        %v3530 = vadd.f32 %v3398, %v3529
        %3531 = vmatprep.mubr.f32.mxu0 0.0
        %3532 = vmatmul.mubr.f32.gmra.mrb[0].mxu0 %v3423
        %v3533 = vpop.f32.mrb[0].mxu0
        %v3534 = vadd.f32 %v3394, %v3533
        %v3535 = vpop.f32.mrb[0].mxu0
        %v3536 = vadd.f32 %v3398, %v3535
        %3537 = vdwg.mxu0
        %v3538 = vmul.f32 %v3492, 0.5
        %v3539 = vmul.f32 %v3494, 0.5
        %v3540 = vmul.f32 %v3498, 0.5
        %v3541 = vmul.f32 %v3500, 0.5
        %v3542 = vmul.f32 %v3504, 0.5
        %v3543 = vmul.f32 %v3506, 0.5
        %v3544 = vmul.f32 %v3510, 0.5
        %v3545 = vmul.f32 %v3512, 0.5
        %v3546 = vmul.f32 %v3516, 0.5
        %v3547 = vmul.f32 %v3518, 0.5
        %v3548 = vmul.f32 %v3522, 0.5
        %v3549 = vmul.f32 %v3524, 0.5
        %v3550 = vmul.f32 %v3528, 0.5
        %v3551 = vmul.f32 %v3530, 0.5
        %v3552 = vmul.f32 %v3534, 0.5
        %v3553 = vmul.f32 %v3536, 0.5
        %v3554 = vmul.f32 %v3492, 0.70710677
        %v3555 = vmul.f32 %v3494, 0.70710677
        %v3556 = vmul.f32 %v3498, 0.70710677
        %v3557 = vmul.f32 %v3500, 0.70710677
        %v3558 = vmul.f32 %v3504, 0.70710677
        %v3559 = vmul.f32 %v3506, 0.70710677
        %v3560 = vmul.f32 %v3510, 0.70710677
        %v3561 = vmul.f32 %v3512, 0.70710677
        %v3562 = vmul.f32 %v3516, 0.70710677
        %v3563 = vmul.f32 %v3518, 0.70710677
        %v3564 = vmul.f32 %v3522, 0.70710677
        %v3565 = vmul.f32 %v3524, 0.70710677
        %v3566 = vmul.f32 %v3528, 0.70710677
        %v3567 = vmul.f32 %v3530, 0.70710677
        %v3568 = vmul.f32 %v3534, 0.70710677
        %v3569 = vmul.f32 %v3536, 0.70710677
        %vm3570 = vcmp.ge.f32.partialorder %v3554, 0.0
        %vm3571 = vcmp.ge.f32.partialorder %v3555, 0.0
        %vm3572 = vcmp.ge.f32.partialorder %v3556, 0.0
        %vm3573 = vcmp.ge.f32.partialorder %v3557, 0.0
        %vm3574 = vcmp.ge.f32.partialorder %v3558, 0.0
        %vm3575 = vcmp.ge.f32.partialorder %v3559, 0.0
        %vm3576 = vcmp.ge.f32.partialorder %v3560, 0.0
        %vm3577 = vcmp.ge.f32.partialorder %v3561, 0.0
        %vm3578 = vcmp.ge.f32.partialorder %v3562, 0.0
        %vm3579 = vcmp.ge.f32.partialorder %v3563, 0.0
        %vm3580 = vcmp.ge.f32.partialorder %v3564, 0.0
        %vm3581 = vcmp.ge.f32.partialorder %v3565, 0.0
        %vm3582 = vcmp.ge.f32.partialorder %v3566, 0.0
        %vm3583 = vcmp.ge.f32.partialorder %v3567, 0.0
        %vm3584 = vcmp.ge.f32.partialorder %v3568, 0.0
        %vm3585 = vcmp.ge.f32.partialorder %v3569, 0.0
        %v3586 = vsel %vm3570, 1.0, -1.0
        %v3587 = vsel %vm3571, 1.0, -1.0
        %v3588 = vsel %vm3572, 1.0, -1.0
        %v3589 = vsel %vm3573, 1.0, -1.0
        %v3590 = vsel %vm3574, 1.0, -1.0
        %v3591 = vsel %vm3575, 1.0, -1.0
        %v3592 = vsel %vm3576, 1.0, -1.0
        %v3593 = vsel %vm3577, 1.0, -1.0
        %v3594 = vsel %vm3578, 1.0, -1.0
        %v3595 = vsel %vm3579, 1.0, -1.0
        %v3596 = vsel %vm3580, 1.0, -1.0
        %v3597 = vsel %vm3581, 1.0, -1.0
        %v3598 = vsel %vm3582, 1.0, -1.0
        %v3599 = vsel %vm3583, 1.0, -1.0
        %v3600 = vsel %vm3584, 1.0, -1.0
        %v3601 = vsel %vm3585, 1.0, -1.0
        %v3602 = vand.u32 2147483647, %v3554
        %v3603 = vand.u32 2147483647, %v3555
        %v3604 = vand.u32 2147483647, %v3556
        %v3605 = vand.u32 2147483647, %v3557
        %v3606 = vand.u32 2147483647, %v3558
        %v3607 = vand.u32 2147483647, %v3559
        %v3608 = vand.u32 2147483647, %v3560
        %v3609 = vand.u32 2147483647, %v3561
        %v3610 = vand.u32 2147483647, %v3562
        %v3611 = vand.u32 2147483647, %v3563
        %v3612 = vand.u32 2147483647, %v3564
        %v3613 = vand.u32 2147483647, %v3565
        %v3614 = vand.u32 2147483647, %v3566
        %v3615 = vand.u32 2147483647, %v3567
        %v3616 = vand.u32 2147483647, %v3568
        %v3617 = vand.u32 2147483647, %v3569
        %v3618 = vmul.f32 %v3602, 0.3275911
        %v3619 = vmul.f32 %v3603, 0.3275911
        %v3620 = vmul.f32 %v3604, 0.3275911
        %v3621 = vmul.f32 %v3605, 0.3275911
        %v3622 = vmul.f32 %v3606, 0.3275911
        %v3623 = vmul.f32 %v3607, 0.3275911
        %v3624 = vmul.f32 %v3608, 0.3275911
        %v3625 = vmul.f32 %v3609, 0.3275911
        %v3626 = vmul.f32 %v3610, 0.3275911
        %v3627 = vmul.f32 %v3611, 0.3275911
        %v3628 = vmul.f32 %v3612, 0.3275911
        %v3629 = vmul.f32 %v3613, 0.3275911
        %v3630 = vmul.f32 %v3614, 0.3275911
        %v3631 = vmul.f32 %v3615, 0.3275911
        %v3632 = vmul.f32 %v3616, 0.3275911
        %v3633 = vmul.f32 %v3617, 0.3275911
        %v3634 = vadd.f32 %v3618, 1.0
        %v3635 = vadd.f32 %v3619, 1.0
        %v3636 = vadd.f32 %v3620, 1.0
        %v3637 = vadd.f32 %v3621, 1.0
        %v3638 = vadd.f32 %v3622, 1.0
        %v3639 = vadd.f32 %v3623, 1.0
        %v3640 = vadd.f32 %v3624, 1.0
        %v3641 = vadd.f32 %v3625, 1.0
        %v3642 = vadd.f32 %v3626, 1.0
        %v3643 = vadd.f32 %v3627, 1.0
        %v3644 = vadd.f32 %v3628, 1.0
        %v3645 = vadd.f32 %v3629, 1.0
        %v3646 = vadd.f32 %v3630, 1.0
        %v3647 = vadd.f32 %v3631, 1.0
        %v3648 = vadd.f32 %v3632, 1.0
        %v3649 = vadd.f32 %v3633, 1.0
        %v3650 = vrcp.pop %v3634
        %v3651 = vmul.f32 1.0, %v3650
        %v3652 = vrcp.pop %v3635
        %v3653 = vmul.f32 1.0, %v3652
        %v3654 = vrcp.pop %v3636
        %v3655 = vmul.f32 1.0, %v3654
        %v3656 = vrcp.pop %v3637
        %v3657 = vmul.f32 1.0, %v3656
        %v3658 = vrcp.pop %v3638
        %v3659 = vmul.f32 1.0, %v3658
        %v3660 = vrcp.pop %v3639
        %v3661 = vmul.f32 1.0, %v3660
        %v3662 = vrcp.pop %v3640
        %v3663 = vmul.f32 1.0, %v3662
        %v3664 = vrcp.pop %v3641
        %v3665 = vmul.f32 1.0, %v3664
        %v3666 = vrcp.pop %v3642
        %v3667 = vmul.f32 1.0, %v3666
        %v3668 = vrcp.pop %v3643
        %v3669 = vmul.f32 1.0, %v3668
        %v3670 = vrcp.pop %v3644
        %v3671 = vmul.f32 1.0, %v3670
        %v3672 = vrcp.pop %v3645
        %v3673 = vmul.f32 1.0, %v3672
        %v3674 = vrcp.pop %v3646
        %v3675 = vmul.f32 1.0, %v3674
        %v3676 = vrcp.pop %v3647
        %v3677 = vmul.f32 1.0, %v3676
        %v3678 = vrcp.pop %v3648
        %v3679 = vmul.f32 1.0, %v3678
        %v3680 = vrcp.pop %v3649
        %v3681 = vmul.f32 1.0, %v3680
        %v3682 = vmul.f32 %v3651, 1.0614054
        %v3683 = vmul.f32 %v3653, 1.0614054
        %v3684 = vmul.f32 %v3655, 1.0614054
        %v3685 = vmul.f32 %v3657, 1.0614054
        %v3686 = vmul.f32 %v3659, 1.0614054
        %v3687 = vmul.f32 %v3661, 1.0614054
        %v3688 = vmul.f32 %v3663, 1.0614054
        %v3689 = vmul.f32 %v3665, 1.0614054
        %v3690 = vmul.f32 %v3667, 1.0614054
        %v3691 = vmul.f32 %v3669, 1.0614054
        %v3692 = vmul.f32 %v3671, 1.0614054
        %v3693 = vmul.f32 %v3673, 1.0614054
        %v3694 = vmul.f32 %v3675, 1.0614054
        %v3695 = vmul.f32 %v3677, 1.0614054
        %v3696 = vmul.f32 %v3679, 1.0614054
        %v3697 = vmul.f32 %v3681, 1.0614054
        %v3698 = vadd.f32 %v3682, -1.4531521
        %v3699 = vadd.f32 %v3683, -1.4531521
        %v3700 = vadd.f32 %v3684, -1.4531521
        %v3701 = vadd.f32 %v3685, -1.4531521
        %v3702 = vadd.f32 %v3686, -1.4531521
        %v3703 = vadd.f32 %v3687, -1.4531521
        %v3704 = vadd.f32 %v3688, -1.4531521
        %v3705 = vadd.f32 %v3689, -1.4531521
        %v3706 = vadd.f32 %v3690, -1.4531521
        %v3707 = vadd.f32 %v3691, -1.4531521
        %v3708 = vadd.f32 %v3692, -1.4531521
        %v3709 = vadd.f32 %v3693, -1.4531521
        %v3710 = vadd.f32 %v3694, -1.4531521
        %v3711 = vadd.f32 %v3695, -1.4531521
        %v3712 = vadd.f32 %v3696, -1.4531521
        %v3713 = vadd.f32 %v3697, -1.4531521
        %v3714 = vmul.f32 %v3698, %v3651
        %v3715 = vmul.f32 %v3699, %v3653
        %v3716 = vmul.f32 %v3700, %v3655
        %v3717 = vmul.f32 %v3701, %v3657
        %v3718 = vmul.f32 %v3702, %v3659
        %v3719 = vmul.f32 %v3703, %v3661
        %v3720 = vmul.f32 %v3704, %v3663
        %v3721 = vmul.f32 %v3705, %v3665
        %v3722 = vmul.f32 %v3706, %v3667
        %v3723 = vmul.f32 %v3707, %v3669
        %v3724 = vmul.f32 %v3708, %v3671
        %v3725 = vmul.f32 %v3709, %v3673
        %v3726 = vmul.f32 %v3710, %v3675
        %v3727 = vmul.f32 %v3711, %v3677
        %v3728 = vmul.f32 %v3712, %v3679
        %v3729 = vmul.f32 %v3713, %v3681
        %v3730 = vadd.f32 %v3714, 1.4214138
        %v3731 = vadd.f32 %v3715, 1.4214138
        %v3732 = vadd.f32 %v3716, 1.4214138
        %v3733 = vadd.f32 %v3717, 1.4214138
        %v3734 = vadd.f32 %v3718, 1.4214138
        %v3735 = vadd.f32 %v3719, 1.4214138
        %v3736 = vadd.f32 %v3720, 1.4214138
        %v3737 = vadd.f32 %v3721, 1.4214138
        %v3738 = vadd.f32 %v3722, 1.4214138
        %v3739 = vadd.f32 %v3723, 1.4214138
        %v3740 = vadd.f32 %v3724, 1.4214138
        %v3741 = vadd.f32 %v3725, 1.4214138
        %v3742 = vadd.f32 %v3726, 1.4214138
        %v3743 = vadd.f32 %v3727, 1.4214138
        %v3744 = vadd.f32 %v3728, 1.4214138
        %v3745 = vadd.f32 %v3729, 1.4214138
        %v3746 = vmul.f32 %v3730, %v3651
        %v3747 = vmul.f32 %v3731, %v3653
        %v3748 = vmul.f32 %v3732, %v3655
        %v3749 = vmul.f32 %v3733, %v3657
        %v3750 = vmul.f32 %v3734, %v3659
        %v3751 = vmul.f32 %v3735, %v3661
        %v3752 = vmul.f32 %v3736, %v3663
        %v3753 = vmul.f32 %v3737, %v3665
        %v3754 = vmul.f32 %v3738, %v3667
        %v3755 = vmul.f32 %v3739, %v3669
        %v3756 = vmul.f32 %v3740, %v3671
        %v3757 = vmul.f32 %v3741, %v3673
        %v3758 = vmul.f32 %v3742, %v3675
        %v3759 = vmul.f32 %v3743, %v3677
        %v3760 = vmul.f32 %v3744, %v3679
        %v3761 = vmul.f32 %v3745, %v3681
        %v3762 = vadd.f32 %v3746, -0.28449672
        %v3763 = vadd.f32 %v3747, -0.28449672
        %v3764 = vadd.f32 %v3748, -0.28449672
        %v3765 = vadd.f32 %v3749, -0.28449672
        %v3766 = vadd.f32 %v3750, -0.28449672
        %v3767 = vadd.f32 %v3751, -0.28449672
        %v3768 = vadd.f32 %v3752, -0.28449672
        %v3769 = vadd.f32 %v3753, -0.28449672
        %v3770 = vadd.f32 %v3754, -0.28449672
        %v3771 = vadd.f32 %v3755, -0.28449672
        %v3772 = vadd.f32 %v3756, -0.28449672
        %v3773 = vadd.f32 %v3757, -0.28449672
        %v3774 = vadd.f32 %v3758, -0.28449672
        %v3775 = vadd.f32 %v3759, -0.28449672
        %v3776 = vadd.f32 %v3760, -0.28449672
        %v3777 = vadd.f32 %v3761, -0.28449672
        %v3778 = vmul.f32 %v3762, %v3651
        %v3779 = vmul.f32 %v3763, %v3653
        %v3780 = vmul.f32 %v3764, %v3655
        %v3781 = vmul.f32 %v3765, %v3657
        %v3782 = vmul.f32 %v3766, %v3659
        %v3783 = vmul.f32 %v3767, %v3661
        %v3784 = vmul.f32 %v3768, %v3663
        %v3785 = vmul.f32 %v3769, %v3665
        %v3786 = vmul.f32 %v3770, %v3667
        %v3787 = vmul.f32 %v3771, %v3669
        %v3788 = vmul.f32 %v3772, %v3671
        %v3789 = vmul.f32 %v3773, %v3673
        %v3790 = vmul.f32 %v3774, %v3675
        %v3791 = vmul.f32 %v3775, %v3677
        %v3792 = vmul.f32 %v3776, %v3679
        %v3793 = vmul.f32 %v3777, %v3681
        %v3794 = vadd.f32 %v3778, 0.2548296
        %v3795 = vadd.f32 %v3779, 0.2548296
        %v3796 = vadd.f32 %v3780, 0.2548296
        %v3797 = vadd.f32 %v3781, 0.2548296
        %v3798 = vadd.f32 %v3782, 0.2548296
        %v3799 = vadd.f32 %v3783, 0.2548296
        %v3800 = vadd.f32 %v3784, 0.2548296
        %v3801 = vadd.f32 %v3785, 0.2548296
        %v3802 = vadd.f32 %v3786, 0.2548296
        %v3803 = vadd.f32 %v3787, 0.2548296
        %v3804 = vadd.f32 %v3788, 0.2548296
        %v3805 = vadd.f32 %v3789, 0.2548296
        %v3806 = vadd.f32 %v3790, 0.2548296
        %v3807 = vadd.f32 %v3791, 0.2548296
        %v3808 = vadd.f32 %v3792, 0.2548296
        %v3809 = vadd.f32 %v3793, 0.2548296
        %v3810 = vmul.f32 %v3794, %v3651
        %v3811 = vmul.f32 %v3795, %v3653
        %v3812 = vmul.f32 %v3796, %v3655
        %v3813 = vmul.f32 %v3797, %v3657
        %v3814 = vmul.f32 %v3798, %v3659
        %v3815 = vmul.f32 %v3799, %v3661
        %v3816 = vmul.f32 %v3800, %v3663
        %v3817 = vmul.f32 %v3801, %v3665
        %v3818 = vmul.f32 %v3802, %v3667
        %v3819 = vmul.f32 %v3803, %v3669
        %v3820 = vmul.f32 %v3804, %v3671
        %v3821 = vmul.f32 %v3805, %v3673
        %v3822 = vmul.f32 %v3806, %v3675
        %v3823 = vmul.f32 %v3807, %v3677
        %v3824 = vmul.f32 %v3808, %v3679
        %v3825 = vmul.f32 %v3809, %v3681
        %v3826 = vsub.f32 0.0, %v3602
        %v3827 = vsub.f32 0.0, %v3603
        %v3828 = vsub.f32 0.0, %v3604
        %v3829 = vsub.f32 0.0, %v3605
        %v3830 = vsub.f32 0.0, %v3606
        %v3831 = vsub.f32 0.0, %v3607
        %v3832 = vsub.f32 0.0, %v3608
        %v3833 = vsub.f32 0.0, %v3609
        %v3834 = vsub.f32 0.0, %v3610
        %v3835 = vsub.f32 0.0, %v3611
        %v3836 = vsub.f32 0.0, %v3612
        %v3837 = vsub.f32 0.0, %v3613
        %v3838 = vsub.f32 0.0, %v3614
        %v3839 = vsub.f32 0.0, %v3615
        %v3840 = vsub.f32 0.0, %v3616
        %v3841 = vsub.f32 0.0, %v3617
        %v3842 = vmul.f32 %v3826, %v3602
        %v3843 = vmul.f32 %v3827, %v3603
        %v3844 = vmul.f32 %v3828, %v3604
        %v3845 = vmul.f32 %v3829, %v3605
        %v3846 = vmul.f32 %v3830, %v3606
        %v3847 = vmul.f32 %v3831, %v3607
        %v3848 = vmul.f32 %v3832, %v3608
        %v3849 = vmul.f32 %v3833, %v3609
        %v3850 = vmul.f32 %v3834, %v3610
        %v3851 = vmul.f32 %v3835, %v3611
        %v3852 = vmul.f32 %v3836, %v3612
        %v3853 = vmul.f32 %v3837, %v3613
        %v3854 = vmul.f32 %v3838, %v3614
        %v3855 = vmul.f32 %v3839, %v3615
        %v3856 = vmul.f32 %v3840, %v3616
        %v3857 = vmul.f32 %v3841, %v3617
        %v3858 = vmul.f32 %v3842, 1.442695
        %v3859 = vpow.pop %v3858
        %v3860 = vmul.f32 %v3843, 1.442695
        %v3861 = vpow.pop %v3860
        %v3862 = vmul.f32 %v3844, 1.442695
        %v3863 = vpow.pop %v3862
        %v3864 = vmul.f32 %v3845, 1.442695
        %v3865 = vpow.pop %v3864
        %v3866 = vmul.f32 %v3846, 1.442695
        %v3867 = vpow.pop %v3866
        %v3868 = vmul.f32 %v3847, 1.442695
        %v3869 = vpow.pop %v3868
        %v3870 = vmul.f32 %v3848, 1.442695
        %v3871 = vpow.pop %v3870
        %v3872 = vmul.f32 %v3849, 1.442695
        %v3873 = vpow.pop %v3872
        %v3874 = vmul.f32 %v3850, 1.442695
        %v3875 = vpow.pop %v3874
        %v3876 = vmul.f32 %v3851, 1.442695
        %v3877 = vpow.pop %v3876
        %v3878 = vmul.f32 %v3852, 1.442695
        %v3879 = vpow.pop %v3878
        %v3880 = vmul.f32 %v3853, 1.442695
        %v3881 = vpow.pop %v3880
        %v3882 = vmul.f32 %v3854, 1.442695
        %v3883 = vpow.pop %v3882
        %v3884 = vmul.f32 %v3855, 1.442695
        %v3885 = vpow.pop %v3884
        %v3886 = vmul.f32 %v3856, 1.442695
        %v3887 = vpow.pop %v3886
        %v3888 = vmul.f32 %v3857, 1.442695
        %v3889 = vpow.pop %v3888
        %v3890 = vmul.f32 %v3810, %v3859
        %v3891 = vmul.f32 %v3811, %v3861
        %v3892 = vmul.f32 %v3812, %v3863
        %v3893 = vmul.f32 %v3813, %v3865
        %v3894 = vmul.f32 %v3814, %v3867
        %v3895 = vmul.f32 %v3815, %v3869
        %v3896 = vmul.f32 %v3816, %v3871
        %v3897 = vmul.f32 %v3817, %v3873
        %v3898 = vmul.f32 %v3818, %v3875
        %v3899 = vmul.f32 %v3819, %v3877
        %v3900 = vmul.f32 %v3820, %v3879
        %v3901 = vmul.f32 %v3821, %v3881
        %v3902 = vmul.f32 %v3822, %v3883
        %v3903 = vmul.f32 %v3823, %v3885
        %v3904 = vmul.f32 %v3824, %v3887
        %v3905 = vmul.f32 %v3825, %v3889
        %v3906 = vsub.f32 1.0, %v3890
        %v3907 = vsub.f32 1.0, %v3891
        %v3908 = vsub.f32 1.0, %v3892
        %v3909 = vsub.f32 1.0, %v3893
        %v3910 = vsub.f32 1.0, %v3894
        %v3911 = vsub.f32 1.0, %v3895
        %v3912 = vsub.f32 1.0, %v3896
        %v3913 = vsub.f32 1.0, %v3897
        %v3914 = vsub.f32 1.0, %v3898
        %v3915 = vsub.f32 1.0, %v3899
        %v3916 = vsub.f32 1.0, %v3900
        %v3917 = vsub.f32 1.0, %v3901
        %v3918 = vsub.f32 1.0, %v3902
        %v3919 = vsub.f32 1.0, %v3903
        %v3920 = vsub.f32 1.0, %v3904
        %v3921 = vsub.f32 1.0, %v3905
        %v3922 = vmul.f32 %v3586, %v3906
        %v3923 = vmul.f32 %v3587, %v3907
        %v3924 = vmul.f32 %v3588, %v3908
        %v3925 = vmul.f32 %v3589, %v3909
        %v3926 = vmul.f32 %v3590, %v3910
        %v3927 = vmul.f32 %v3591, %v3911
        %v3928 = vmul.f32 %v3592, %v3912
        %v3929 = vmul.f32 %v3593, %v3913
        %v3930 = vmul.f32 %v3594, %v3914
        %v3931 = vmul.f32 %v3595, %v3915
        %v3932 = vmul.f32 %v3596, %v3916
        %v3933 = vmul.f32 %v3597, %v3917
        %v3934 = vmul.f32 %v3598, %v3918
        %v3935 = vmul.f32 %v3599, %v3919
        %v3936 = vmul.f32 %v3600, %v3920
        %v3937 = vmul.f32 %v3601, %v3921
        %v3938 = vadd.f32 %v3922, 1.0
        %v3939 = vadd.f32 %v3923, 1.0
        %v3940 = vadd.f32 %v3924, 1.0
        %v3941 = vadd.f32 %v3925, 1.0
        %v3942 = vadd.f32 %v3926, 1.0
        %v3943 = vadd.f32 %v3927, 1.0
        %v3944 = vadd.f32 %v3928, 1.0
        %v3945 = vadd.f32 %v3929, 1.0
        %v3946 = vadd.f32 %v3930, 1.0
        %v3947 = vadd.f32 %v3931, 1.0
        %v3948 = vadd.f32 %v3932, 1.0
        %v3949 = vadd.f32 %v3933, 1.0
        %v3950 = vadd.f32 %v3934, 1.0
        %v3951 = vadd.f32 %v3935, 1.0
        %v3952 = vadd.f32 %v3936, 1.0
        %v3953 = vadd.f32 %v3937, 1.0
        %v3954 = vmul.f32 %v3538, %v3938
        %v3955 = vmul.f32 %v3539, %v3939
        %v3956 = vmul.f32 %v3540, %v3940
        %v3957 = vmul.f32 %v3541, %v3941
        %v3958 = vmul.f32 %v3542, %v3942
        %v3959 = vmul.f32 %v3543, %v3943
        %v3960 = vmul.f32 %v3544, %v3944
        %v3961 = vmul.f32 %v3545, %v3945
        %v3962 = vmul.f32 %v3546, %v3946
        %v3963 = vmul.f32 %v3547, %v3947
        %v3964 = vmul.f32 %v3548, %v3948
        %v3965 = vmul.f32 %v3549, %v3949
        %v3966 = vmul.f32 %v3550, %v3950
        %v3967 = vmul.f32 %v3551, %v3951
        %v3968 = vmul.f32 %v3552, %v3952
        %v3969 = vmul.f32 %v3553, %v3953
        %v3970 = vld [vmem:[%s773] sm:$0xff]
        %v3971 = vld [vmem:[%s773 + $0x8] sm:$0xff]
        %v3972 = vld [vmem:[%s773 + $0x10] sm:$0xff]
        %v3973 = vld [vmem:[%s773 + $0x18] sm:$0xff]
        %v3974 = vld [vmem:[%s773 + $0x20] sm:$0xff]
        %v3975 = vld [vmem:[%s773 + $0x28] sm:$0xff]
        %v3976 = vld [vmem:[%s773 + $0x30] sm:$0xff]
        %v3977 = vld [vmem:[%s773 + $0x38] sm:$0xff]
        %v3978 = vld [vmem:[%s773 + $0x40] sm:$0xff]
        %v3979 = vld [vmem:[%s773 + $0x48] sm:$0xff]
        %v3980 = vld [vmem:[%s773 + $0x50] sm:$0xff]
        %v3981 = vld [vmem:[%s773 + $0x58] sm:$0xff]
        %v3982 = vld [vmem:[%s773 + $0x60] sm:$0xff]
        %v3983 = vld [vmem:[%s773 + $0x68] sm:$0xff]
        %v3984 = vld [vmem:[%s773 + $0x70] sm:$0xff]
        %v3985 = vld [vmem:[%s773 + $0x78] sm:$0xff]
        %v3986 = vld [vmem:[%s773 + $0x80] sm:$0xff]
        %v3987 = vld [vmem:[%s773 + $0x88] sm:$0xff]
        %v3988 = vld [vmem:[%s773 + $0x90] sm:$0xff]
        %v3989 = vld [vmem:[%s773 + $0x98] sm:$0xff]
        %v3990 = vld [vmem:[%s773 + $0xa0] sm:$0xff]
        %v3991 = vld [vmem:[%s773 + $0xa8] sm:$0xff]
        %v3992 = vld [vmem:[%s773 + $0xb0] sm:$0xff]
        %v3993 = vld [vmem:[%s773 + $0xb8] sm:$0xff]
        %v3994 = vld [vmem:[%s773 + $0xc0] sm:$0xff]
        %v3995 = vld [vmem:[%s773 + $0xc8] sm:$0xff]
        %v3996 = vld [vmem:[%s773 + $0xd0] sm:$0xff]
        %v3997 = vld [vmem:[%s773 + $0xd8] sm:$0xff]
        %v3998 = vld [vmem:[%s773 + $0xe0] sm:$0xff]
        %v3999 = vld [vmem:[%s773 + $0xe8] sm:$0xff]
        %v4000 = vld [vmem:[%s773 + $0xf0] sm:$0xff]
        %v4001 = vld [vmem:[%s773 + $0xf8] sm:$0xff]
        %v4002 = vld [vmem:[%s776] sm:$0x1]
        %v4004 = vlaneseq
        %v4005 = vshrl.u32 %v4004, 7
        %v4006 = vsub.s32 0, %v4005
        %v4007 = vrot.slane %v4002, %v4006
        %4009 = vmatprep.subr.mxu0 0.0
        %4010 = vmatpush1.msra.mxu0 %v3970
        %4011 = vmatprep.subr.mxu0 0.0
        %4012 = vmatpush1.msra.mxu0 %v3971
        %4013 = vmatprep.subr.mxu0 0.0
        %4014 = vmatpush1.msra.mxu0 %v3972
        %4015 = vmatprep.subr.mxu0 0.0
        %4016 = vmatpush1.msra.mxu0 %v3973
        %4017 = vmatprep.subr.mxu0 0.0
        %4018 = vmatpush1.msra.mxu0 %v3974
        %4019 = vmatprep.subr.mxu0 0.0
        %4020 = vmatpush1.msra.mxu0 %v3975
        %4021 = vmatprep.subr.mxu0 0.0
        %4022 = vmatpush1.msra.mxu0 %v3976
        %4023 = vmatprep.subr.mxu0 0.0
        %4024 = vmatpush1.msra.mxu0 %v3977
        %4025 = vmatprep.subr.mxu0 0.0
        %4026 = vmatpush1.msra.mxu0 %v3978
        %4027 = vmatprep.subr.mxu0 0.0
        %4028 = vmatpush1.msra.mxu0 %v3979
        %4029 = vmatprep.subr.mxu0 0.0
        %4030 = vmatpush1.msra.mxu0 %v3980
        %4031 = vmatprep.subr.mxu0 0.0
        %4032 = vmatpush1.msra.mxu0 %v3981
        %4033 = vmatprep.subr.mxu0 0.0
        %4034 = vmatpush1.msra.mxu0 %v3982
        %4035 = vmatprep.subr.mxu0 0.0
        %4036 = vmatpush1.msra.mxu0 %v3983
        %4037 = vmatprep.subr.mxu0 0.0
        %4038 = vmatpush1.msra.mxu0 %v3984
        %4039 = vmatprep.subr.mxu0 0.0
        %4040 = vmatpush1.msra.mxu0 %v3985
        %4041 = vmatprep.subr.mxu0 0.0
        %4042 = vmatpush1.msra.mxu0 %v3986
        %4043 = vmatprep.subr.mxu0 0.0
        %4044 = vmatpush1.msra.mxu0 %v3987
        %4045 = vmatprep.subr.mxu0 0.0
        %4046 = vmatpush1.msra.mxu0 %v3988
        %4047 = vmatprep.subr.mxu0 0.0
        %4048 = vmatpush1.msra.mxu0 %v3989
        %4049 = vmatprep.subr.mxu0 0.0
        %4050 = vmatpush1.msra.mxu0 %v3990
        %4051 = vmatprep.subr.mxu0 0.0
        %4052 = vmatpush1.msra.mxu0 %v3991
        %4053 = vmatprep.subr.mxu0 0.0
        %4054 = vmatpush1.msra.mxu0 %v3992
        %4055 = vmatprep.subr.mxu0 0.0
        %4056 = vmatpush1.msra.mxu0 %v3993
        %4057 = vmatprep.subr.mxu0 0.0
        %4058 = vmatpush1.msra.mxu0 %v3994
        %4059 = vmatprep.subr.mxu0 0.0
        %4060 = vmatpush1.msra.mxu0 %v3995
        %4061 = vmatprep.subr.mxu0 0.0
        %4062 = vmatpush1.msra.mxu0 %v3996
        %4063 = vmatprep.subr.mxu0 0.0
        %4064 = vmatpush1.msra.mxu0 %v3997
        %4065 = vmatprep.subr.mxu0 0.0
        %4066 = vmatpush1.msra.mxu0 %v3998
        %4067 = vmatprep.subr.mxu0 0.0
        %4068 = vmatpush1.msra.mxu0 %v3999
        %4069 = vmatprep.subr.mxu0 0.0
        %4070 = vmatpush1.msra.mxu0 %v4000
        %4071 = vmatprep.subr.mxu0 0.0
        %4072 = vmatpush1.msra.mxu0 %v4001
        %4073 = vmatprep.mubr.f32.mxu0 %v3955
        %4074 = vmatmul.mubr.f32.gmra.mrb[0].mxu0 %v3954
        %v4075 = vpop.f32.mrb[0].mxu0
        %v4076 = vadd.f32 %v4007, %v4075
        %v4077 = vpop.f32.mrb[0].mxu0
        %4078 = vmatprep.mubr.f32.mxu0 %v3957
        %4079 = vmatmul.mubr.f32.gmra.mrb[0].mxu0 %v3956
        %v4080 = vpop.f32.mrb[0].mxu0
        %v4081 = vadd.f32 %v4007, %v4080
        %v4082 = vpop.f32.mrb[0].mxu0
        %4083 = vmatprep.mubr.f32.mxu0 %v3959
        %4084 = vmatmul.mubr.f32.gmra.mrb[0].mxu0 %v3958
        %v4085 = vpop.f32.mrb[0].mxu0
        %v4086 = vadd.f32 %v4007, %v4085
        %v4087 = vpop.f32.mrb[0].mxu0
        %4088 = vmatprep.mubr.f32.mxu0 %v3961
        %4089 = vmatmul.mubr.f32.gmra.mrb[0].mxu0 %v3960
        %v4090 = vpop.f32.mrb[0].mxu0
        %v4091 = vadd.f32 %v4007, %v4090
        %v4092 = vpop.f32.mrb[0].mxu0
        %4093 = vmatprep.mubr.f32.mxu0 %v3963
        %4094 = vmatmul.mubr.f32.gmra.mrb[0].mxu0 %v3962
        %v4095 = vpop.f32.mrb[0].mxu0
        %v4096 = vadd.f32 %v4007, %v4095
        %v4097 = vpop.f32.mrb[0].mxu0
        %4098 = vmatprep.mubr.f32.mxu0 %v3965
        %4099 = vmatmul.mubr.f32.gmra.mrb[0].mxu0 %v3964
        %v4100 = vpop.f32.mrb[0].mxu0
        %v4101 = vadd.f32 %v4007, %v4100
        %v4102 = vpop.f32.mrb[0].mxu0
        %4103 = vmatprep.mubr.f32.mxu0 %v3967
        %4104 = vmatmul.mubr.f32.gmra.mrb[0].mxu0 %v3966
        %v4105 = vpop.f32.mrb[0].mxu0
        %v4106 = vadd.f32 %v4007, %v4105
        %v4107 = vpop.f32.mrb[0].mxu0
        %4108 = vmatprep.mubr.f32.mxu0 %v3969
        %4109 = vmatmul.mubr.f32.gmra.mrb[0].mxu0 %v3968
        %v4110 = vpop.f32.mrb[0].mxu0
        %v4111 = vadd.f32 %v4007, %v4110
        %v4112 = vpop.f32.mrb[0].mxu0
        %4113 = vdwg.mxu0
        %v4114 = vadd.f32 %v4076, %v3231
        %v4115 = vadd.f32 %v4081, %v3232
        %v4116 = vadd.f32 %v4086, %v3233
        %v4117 = vadd.f32 %v4091, %v3234
        %v4118 = vadd.f32 %v4096, %v3235
        %v4119 = vadd.f32 %v4101, %v3236
        %v4120 = vadd.f32 %v4106, %v3237
        %v4121 = vadd.f32 %v4111, %v3238
        %4122 = vst.msk [vmem:[#allocation2] sm:$0xff] %vm977, %v4114
        %4123 = vst.msk [vmem:[#allocation2 + $0x8] sm:$0xff] %vm977, %v4115
        %4124 = vst.msk [vmem:[#allocation2 + $0x10] sm:$0xff] %vm977, %v4116
        %4125 = vst.msk [vmem:[#allocation2 + $0x18] sm:$0xff] %vm977, %v4117
        %4126 = vst.msk [vmem:[#allocation2 + $0x20] sm:$0xff] %vm977, %v4118
        %4127 = vst.msk [vmem:[#allocation2 + $0x28] sm:$0xff] %vm977, %v4119
        %4128 = vst.msk [vmem:[#allocation2 + $0x30] sm:$0xff] %vm977, %v4120
        %4129 = vst.msk [vmem:[#allocation2 + $0x38] sm:$0xff] %vm977, %v4121
        %p4130 = scmp.eq.s32.totalorder %s35, 1
        // Predicated region
        $region97: #{vit_forward.1} parent=91 // pred_check
          %p4131 = pneg %p4130
        $region98: #{vit_forward.1} parent=91 // pred_check_branch
          %4133 = sbr.rel (%p4131) target = $region100
        $region99: #{vit_forward.1} parent=91 // pred_region
          %v4135 = vrot.slane %v4118, 7
          %vm4137 = vcmask 1040384
          %v4138 = vsel %vm4137, %v4114, %v4135
          %v4139 = vld [vmem:[%s16] sm:$0x1]
          %v4140 = vld [vmem:[%s17] sm:$0x1]
          %vm4141 = vcmask 517120
          %v4142 = vsel %vm4141, %v4138, 0.0
          %4143 = vadd.xlane.f32.xlu0 %v4142
          %v4144 = vpop.xlane.xlu0 %4143
          %v4145 = vmul.f32 %v4144, %v1002
          %v4146 = vsub.f32 %v4138, %v4145
          %v4147 = vmul.f32 %v4146, %v4146
          %v4148 = vsel %vm4141, %v4147, 0.0
          %4149 = vadd.xlane.f32.xlu0 %v4148
          %v4150 = vpop.xlane.xlu0 %4149
          %v4151 = vmul.f32 %v4150, %v1002
          %v4152 = vadd.f32 %v4151, 1e-06
          %v4153 = vrsqrt.pop %v4152
          %v4154 = vmul.f32 %v4146, %v4153
          %v4156 = vlaneseq
          %v4157 = vshrl.u32 %v4156, 7
          %v4158 = vsub.s32 0, %v4157
          %v4159 = vrot.slane %v4139, %v4158
          %v4161 = vmul.f32 %v4154, %v4159
          %v4163 = vlaneseq
          %v4164 = vshrl.u32 %v4163, 7
          %v4165 = vsub.s32 0, %v4164
          %v4166 = vrot.slane %v4140, %v4165
          %v4168 = vadd.f32 %v4161, %v4166
          %4169 = vst.msk [vmem:[#allocation3] sm:$0x3] %vm4141, %v4168
        $region100: #{vit_forward.1} parent=91 // pred_fallthru
          _
        // Predicated region
        $region101: #{vit_forward.1} parent=91 // pred_check
          %p4170 = pneg %p503
        $region102: #{vit_forward.1} parent=91 // pred_check_branch
          %4172 = sbr.rel (%p4170) target = $region104
        $region103: #{vit_forward.1} parent=91 // pred_region
          %s4174 = ssub.s32 32, 32
          %4175 = vsyncadd [#allocation4], %s4174
          %s4176 = smul.addr %s34, 32
          %s4177 = scalar_lea.hbm %s18, %s4176
          %s4179 = sshll.u32 [#allocation3], 4
          %s4180 = int_to_ptr.vmem [resolvable:$true] %s4179
          %4182 = dma.vmem_to_hbm [thread:$0]  %s4180, 32, %s4177, [#allocation4]
        $region104: #{vit_forward.1} parent=91 // pred_fallthru
          _
        // Predicated region
        $region105: #{vit_forward.1} parent=91 // pred_check
          %p4183 = pneg %p503
        $region106: #{vit_forward.1} parent=91 // pred_check_branch
          %4185 = sbr.rel (%p4183) target = $region108
        $region107: #{vit_forward.1} parent=91 // pred_region
          %4186 = dma.done [#allocation4], 32
        $region108: #{vit_forward.1} parent=91 // pred_fallthru
          _
      $region92: #{vit_forward.1} parent=5 // pred_fallthru
        _
      %p4187 = scmp.le.s32.totalorder 2, %s25
      // Predicated region
      $region109: #{vit_forward.1} parent=5 // pred_check
        %p4188 = pneg %p4187
      $region110: #{vit_forward.1} parent=5 // pred_check_branch
        %4190 = sbr.rel (%p4188) target = $region112
      $region111: #{vit_forward.1} parent=5 // pred_region
        %s4191 = ssub.s32 %s25, 2
      $region112: #{vit_forward.1} parent=5 // pred_fallthru
        _
    $region6: #{vit_forward.1} parent=1 // loop_footer
      %s29 = sadd.s32 1, %s25
    $region7: #{vit_forward.1} parent=1 // loop_footer_branch
      %24 = sbr.rel target = $region3
    $region8: #{vit_forward.1} parent=1 // loop_exit
      _
    %4192 = vsyncpa [#allocation4], 1
    %s4193 = scalar_lea.sflag [#allocation4], 1
    %4194 = vsyncpa %s4193, 1

</llo_original>
